<compile_context>
chip_gen: v5e
topology: v5e:2x2
jax: 0.10.0
libtpu: 0.0.40
codegen_flags: <defaults>
</compile_context>

<pallas_src>
import functools
import math
from dataclasses import dataclass

import jax
import jax.numpy as jnp
from jax.experimental import pallas as pl
from jax.experimental.pallas import tpu as pltpu

EPS = 1e-6


@dataclass
class Config:
    # Small, TPU-friendly analogue of the reference Config (d_model=512, n_head=8, ...)
    d_model: int = 128
    n_head: int = 4
    d_hid: int = 128 * 8 // 3          # same formula as the reference: d_model * 8 // 3
    n_enc: int = 2
    n_dec: int = 2
    qk_size: int = 32
    v_size: int = 32
    drop: float = 0.1                  # dropout == identity at inference


# ------------------------------ fused block-stack kernel ------------------------------

def _rms(x, w):
    """RMSNorm in f32: x (M, C), w (1, C)."""
    ms = jnp.mean(x * x, axis=-1, keepdims=True)
    return x * jax.lax.rsqrt(ms + EPS) * w


def _fused_block_stack_kernel(
    x_ref, na_ref, wqkv_ref, wo_ref, nl_ref, wsg_ref, wout_ref, *rest,
    B, T, H, dq, dv, dh_pad, post_norm,
):
    """One grid step == one transformer Block (self-attn + SwiGLU MLP, both residual).

    The output block is resident across the layer axis and doubles as the f32 carry,
    so activations never leave VMEM between layers.
    """
    if post_norm:
        pn_ref, o_ref = rest
    else:
        (o_ref,) = rest

    layer = pl.program_id(0)

    # Layer 0: seed the resident output block with the input activations.
    @pl.when(layer == 0)
    def _():
        o_ref[...] = x_ref[...]

    x = o_ref[...].astype(jnp.float32)                  # (M, C), M = B*T

    # -------- self-attention: single fused QKV projection, full width --------
    nx = _rms(x, na_ref[...].astype(jnp.float32))
    # One (M, C) x (C, 2*H*dq + H*dv) bf16 matmul; the 1/sqrt(dq) scale is already
    # folded into the Q columns at weight-prep time.
    qkv = jnp.dot(nx.astype(jnp.bfloat16), wqkv_ref[...],
                  preferred_element_type=jnp.float32)    # (M, 384)
    nq = H * dq
    q_all = qkv[:, :nq]                                  # (M, H*dq)
    k_all = qkv[:, nq:2 * nq]                            # (M, H*dq)
    v_all = qkv[:, 2 * nq:]                              # (M, H*dv)

    # Tiny per-head score / PV matmuls stay f32 (negligible cost; best precision).
    o_rows = []
    for b in range(B):
        r0 = b * T
        o_heads = []
        for h in range(H):
            qh = q_all[r0:r0 + T, h * dq:(h + 1) * dq]   # (T, dq)
            kh = k_all[r0:r0 + T, h * dq:(h + 1) * dq]   # (T, dq)
            vh = v_all[r0:r0 + T, h * dv:(h + 1) * dv]   # (T, dv)
            # q @ k^T without materializing a transpose: contract the last dims.
            s = jax.lax.dot_general(
                qh, kh, (((1,), (1,)), ((), ())),
                preferred_element_type=jnp.float32)      # (T, T)
            s = s - jnp.max(s, axis=-1, keepdims=True)
            p = jnp.exp(s)
            p = p * pl.reciprocal(jnp.sum(p, axis=-1, keepdims=True), approx=True)
            o_heads.append(jnp.dot(p, vh, preferred_element_type=jnp.float32))
        o_rows.append(jnp.concatenate(o_heads, axis=-1))  # (T, H*dv) lane concat
    o_all = jnp.concatenate(o_rows, axis=0)               # (M, H*dv) sublane concat
    # Single fused out_proj over all batches/heads (lane-dense 128-wide output).
    attn = jnp.dot(o_all.astype(jnp.bfloat16), wo_ref[...],
                   preferred_element_type=jnp.float32)    # (M, C)
    x = x + attn                                          # residual; dropout == identity

    # -------- MLP (SwiGLU); swish|gate fused, hidden width lane-padded --------
    nm = _rms(x, nl_ref[...].astype(jnp.float32))
    ag = jnp.dot(nm.astype(jnp.bfloat16), wsg_ref[...],
                 preferred_element_type=jnp.float32)      # (M, 2*dh_pad)
    a = ag[:, :dh_pad]
    g = ag[:, dh_pad:]
    h_mid = a * jax.nn.sigmoid(a) * g                     # silu(a) * g; padded cols stay 0
    x = x + jnp.dot(h_mid.astype(jnp.bfloat16), wout_ref[...],
                    preferred_element_type=jnp.float32)

    o_ref[...] = x.astype(o_ref.dtype)

    if post_norm:                                         # encoder stack: fused post_norm_enc
        @pl.when(layer == pl.num_programs(0) - 1)
        def _():
            y = o_ref[...].astype(jnp.float32)
            o_ref[...] = _rms(y, pn_ref[...].astype(jnp.float32)).astype(o_ref.dtype)


def run_block_stack(x, stack, *, cfg, post_norm_w=None):
    """Run a stack of L identical-shape Blocks on x (B, T, C) in ONE pallas_call."""
    B, T, C = x.shape
    M = B * T
    H, dq, dv = cfg.n_head, cfg.qk_size, cfg.v_size
    L = stack["na"].shape[0]
    nqkv = stack["wqkv"].shape[-1]                        # 2*H*dq + H*dv
    dh2 = stack["wsg"].shape[-1]                          # 2 * dh_pad
    dh_pad = dh2 // 2
    assert C % 128 == 0 and M % 8 == 0 and dh_pad % 128 == 0 and nqkv % 128 == 0
    post_norm = post_norm_w is not None

    kernel = functools.partial(
        _fused_block_stack_kernel,
        B=B, T=T, H=H, dq=dq, dv=dv, dh_pad=dh_pad, post_norm=post_norm)

    in_specs = [
        pl.BlockSpec((M, C), lambda l: (0, 0)),                              # x (resident)
        pl.BlockSpec((pl.Squeezed(), 1, C), lambda l: (l, 0, 0)),            # norm_a1
        pl.BlockSpec((pl.Squeezed(), C, nqkv), lambda l: (l, 0, 0)),         # fused Wq|Wk|Wv (bf16)
        pl.BlockSpec((pl.Squeezed(), H * dv, C), lambda l: (l, 0, 0)),       # out_proj (bf16)
        pl.BlockSpec((pl.Squeezed(), 1, C), lambda l: (l, 0, 0)),            # norm_lin
        pl.BlockSpec((pl.Squeezed(), C, dh2), lambda l: (l, 0, 0)),          # fused Wswish|Wgate (bf16)
        pl.BlockSpec((pl.Squeezed(), dh_pad, C), lambda l: (l, 0, 0)),       # lin_out (bf16, pad rows)
    ]
    args = [x.reshape(M, C), stack["na"], stack["wqkv"], stack["wo"],
            stack["nl"], stack["wsg"], stack["wout"]]
    if post_norm:
        in_specs.append(pl.BlockSpec((1, C), lambda l: (0, 0)))
        args.append(post_norm_w)

    out = pl.pallas_call(
        kernel,
        out_shape=jax.ShapeDtypeStruct((M, C), x.dtype),
        grid=(L,),
        in_specs=in_specs,
        out_specs=pl.BlockSpec((M, C), lambda l: (0, 0)),                    # resident carry
        compiler_params=pltpu.CompilerParams(
            dimension_semantics=("arbitrary",)),          # layers are sequential
    )(*args)
    return out.reshape(B, T, C)


# ------------------------------ weight preparation ------------------------------

def prepare_block_stack(blocks, cfg):
    """Stack per-block weights along a leading layer axis, fuse Q|K|V and swish|gate,
    fold the 1/sqrt(dq) score scale into the Q weight, zero-pad d_hid to a lane
    multiple (exact: silu(0)*0 == 0 and the padded lin_out rows are zero), and store
    all matmul weights as bf16 (f32 MXU accumulation in the kernel)."""
    H, dq, dv, C = cfg.n_head, cfg.qk_size, cfg.v_size, cfg.d_model
    dh = cfg.d_hid
    dh_pad = ((dh + 127) // 128) * 128
    pad = dh_pad - dh
    scale = 1.0 / math.sqrt(dq)

    na = jnp.stack([b["norm_a1"] for b in blocks])                         # (L, 1, C) f32
    q = jnp.stack([b["attn1"]["q_proj"] for b in blocks]) * scale          # scale folded
    kv = jnp.stack([b["attn1"]["kv_proj"] for b in blocks])                # [K | V] columns
    wqkv = jnp.concatenate([q, kv], axis=-1).astype(jnp.bfloat16)          # (L, C, 2*H*dq+H*dv)
    wo = jnp.stack([b["attn1"]["out_proj"] for b in blocks]).astype(jnp.bfloat16)  # (L, H*dv, C)
    nl = jnp.stack([b["mlp"]["norm_lin"] for b in blocks])                 # (L, 1, C) f32
    ws = jnp.pad(jnp.stack([b["mlp"]["lin_swish"] for b in blocks]),
                 ((0, 0), (0, 0), (0, pad)))                               # (L, C, dh_pad)
    wg = jnp.pad(jnp.stack([b["mlp"]["lin_gate"] for b in blocks]),
                 ((0, 0), (0, 0), (0, pad)))                               # (L, C, dh_pad)
    wsg = jnp.concatenate([ws, wg], axis=-1).astype(jnp.bfloat16)          # (L, C, 2*dh_pad)
    wout = jnp.pad(jnp.stack([b["mlp"]["lin_out"] for b in blocks]),
                   ((0, 0), (0, pad), (0, 0))).astype(jnp.bfloat16)        # (L, dh_pad, C)
    return dict(na=na, wqkv=wqkv, wo=wo, nl=nl, wsg=wsg, wout=wout)


# ------------------------------ module forward ------------------------------

def transformer_forward(enc_stack, dec_stack, post_norm_w, e, d, *, cfg):
    e = run_block_stack(e, enc_stack, cfg=cfg, post_norm_w=post_norm_w)
    # The reference Block.forward(x) never calls do_cross()/attn2, so the decoder
    # blocks ignore the encoder output — same behavior as the reference forward path.
    d = run_block_stack(d, dec_stack, cfg=cfg, post_norm_w=None)
    return d, e


# ------------------------------ deterministic params ------------------------------

def _linear(key, fan_in, fan_out, std=0.05):
    return std * jax.random.normal(key, (fan_in, fan_out), jnp.float32)


def _norm_w(key, c):
    return 1.0 + 0.02 * jax.random.normal(key, (1, c), jnp.float32)


def init_attention(key, cfg):
    k1, k2, k3 = jax.random.split(key, 3)
    H, dq, dv, C = cfg.n_head, cfg.qk_size, cfg.v_size, cfg.d_model
    return dict(
        q_proj=_linear(k1, C, H * dq),
        kv_proj=_linear(k2, C, H * (dq + dv)),
        out_proj=_linear(k3, H * dv, C),
    )


def init_mlp(key, cfg):
    k1, k2, k3, k4 = jax.random.split(key, 4)
    return dict(
        norm_lin=_norm_w(k1, cfg.d_model),
        lin_swish=_linear(k2, cfg.d_model, cfg.d_hid),
        lin_gate=_linear(k3, cfg.d_model, cfg.d_hid),
        lin_out=_linear(k4, cfg.d_hid, cfg.d_model),
    )


def init_block(key, cfg):
    k1, k2, k3 = jax.random.split(key, 3)
    return dict(
        norm_a1=_norm_w(k1, cfg.d_model),
        attn1=init_attention(k2, cfg),
        mlp=init_mlp(k3, cfg),
    )


def init_transformer(key, cfg):
    keys = jax.random.split(key, cfg.n_enc + cfg.n_dec + 1)
    return dict(
        encoder=[init_block(keys[i], cfg) for i in range(cfg.n_enc)],
        decoder=[init_block(keys[cfg.n_enc + i], cfg) for i in range(cfg.n_dec)],
        post_norm_enc=_norm_w(keys[-1], cfg.d_model),
    )


# ------------------------------ pure-JAX reference ------------------------------

def _ref_rmsnorm(x, w):
    ms = jnp.mean(x.astype(jnp.float32) ** 2, axis=-1, keepdims=True)
    return x * jax.lax.rsqrt(ms + EPS) * w


def _ref_attention(p, x, attn_in, cfg):
    B, T, C = x.shape
    BA, TA, _ = attn_in.shape
    H, dq, dv = cfg.n_head, cfg.qk_size, cfg.v_size
    q = x.reshape(B * T, C) @ p["q_proj"]
    kv = attn_in.reshape(BA * TA, C) @ p["kv_proj"]
    k, v = kv[:, : H * dq], kv[:, H * dq:]
    q = q.reshape(B, T, H, dq).transpose(0, 2, 1, 3)
    k = k.reshape(BA, TA, H, dq).transpose(0, 2, 1, 3)
    v = v.reshape(BA, TA, H, dv).transpose(0, 2, 1, 3)
    s = jnp.einsum("bhtd,bhsd->bhts", q, k) / math.sqrt(dq)
    a = jax.nn.softmax(s, axis=-1)
    o = jnp.einsum("bhts,bhsd->bhtd", a, v)
    o = o.transpose(0, 2, 1, 3).reshape(B * T, H * dv)
    return (o @ p["out_proj"]).reshape(B, T, C)


def _ref_block(p, x, cfg):
    nx = _ref_rmsnorm(x, p["norm_a1"])
    x = x + _ref_attention(p["attn1"], nx, nx, cfg)
    nm = _ref_rmsnorm(x, p["mlp"]["norm_lin"])
    h = jax.nn.silu(nm @ p["mlp"]["lin_swish"]) * (nm @ p["mlp"]["lin_gate"])
    x = x + h @ p["mlp"]["lin_out"]
    return x


def _ref_transformer(params, e, d, cfg):
    for p in params["encoder"]:
        e = _ref_block(p, e, cfg)
    e = _ref_rmsnorm(e, params["post_norm_enc"])
    for p in params["decoder"]:
        d = _ref_block(p, d, cfg)
    return d, e


def _round_bf16(w):
    return w.astype(jnp.bfloat16).astype(jnp.float32)


def _quantize_linears_for_ref(params):
    """Reference with linear weights rounded through bf16 (matches the kernel's
    stored-weight precision; norm weights stay f32 like in the kernel)."""
    def qblock(b):
        return dict(
            norm_a1=b["norm_a1"],
            attn1={k: _round_bf16(v) for k, v in b["attn1"].items()},
            mlp=dict(norm_lin=b["mlp"]["norm_lin"],
                     lin_swish=_round_bf16(b["mlp"]["lin_swish"]),
                     lin_gate=_round_bf16(b["mlp"]["lin_gate"]),
                     lin_out=_round_bf16(b["mlp"]["lin_out"])))
    return dict(encoder=[qblock(b) for b in params["encoder"]],
                decoder=[qblock(b) for b in params["decoder"]],
                post_norm_enc=params["post_norm_enc"])


# ------------------------------ main ------------------------------

if __name__ == "__main__":
    cfg = Config()
    key = jax.random.PRNGKey(0)
    kp, ke, kd = jax.random.split(key, 3)
    params = init_transformer(kp, cfg)

    B, T_enc, T_dec = 2, 16, 8
    e = jax.random.normal(ke, (B, T_enc, cfg.d_model), jnp.float32)
    d = jax.random.normal(kd, (B, T_dec, cfg.d_model), jnp.float32)

    enc_stack = prepare_block_stack(params["encoder"], cfg)
    dec_stack = prepare_block_stack(params["decoder"], cfg)

    fwd = jax.jit(functools.partial(transformer_forward, cfg=cfg))
    d_out, e_out = fwd(enc_stack, dec_stack, params["post_norm_enc"], e, d)
    d_out, e_out = jax.block_until_ready((d_out, e_out))

    assert d_out.shape == (B, T_dec, cfg.d_model)
    assert e_out.shape == (B, T_enc, cfg.d_model)
    assert bool(jnp.isfinite(d_out).all()) and bool(jnp.isfinite(e_out).all())

    # sanity check against a pure-JAX reference using bf16-rounded linear weights
    # (same stored precision as the kernel; remaining delta is activation rounding)
    d_ref, e_ref = _ref_transformer(_quantize_linears_for_ref(params), e, d, cfg)
    max_diff = max(
        float(jnp.max(jnp.abs(d_out - d_ref))),
        float(jnp.max(jnp.abs(e_out - e_ref))),
    )
    assert jnp.allclose(d_out, d_ref, atol=2e-2, rtol=2e-2), max_diff
    assert jnp.allclose(e_out, e_ref, atol=2e-2, rtol=2e-2), max_diff

    print("KERNEL_OK")
</pallas_src>

<mosaic_0001>
module attributes {stable_mosaic.version = 11 : i64} {
  func.func @_fused_block_stack_kernel(%arg0: i32, %arg1: memref<32x128xf32, #tpu.memory_space<vmem>>, %arg2: memref<1x1x128xf32, #tpu.memory_space<vmem>>, %arg3: memref<1x128x384xbf16, #tpu.memory_space<vmem>>, %arg4: memref<1x128x128xbf16, #tpu.memory_space<vmem>>, %arg5: memref<1x1x128xf32, #tpu.memory_space<vmem>>, %arg6: memref<1x128x768xbf16, #tpu.memory_space<vmem>>, %arg7: memref<1x384x128xbf16, #tpu.memory_space<vmem>>, %arg8: memref<1x128xf32, #tpu.memory_space<vmem>>, %arg9: memref<32x128xf32, #tpu.memory_space<vmem>>) attributes {dimension_semantics = [#tpu.dimension_semantics<arbitrary>], iteration_bounds = array<i64: 2>, scalar_prefetch = 0 : i64, scratch_operands = 0 : i64, tpu.core_type = #tpu.core_type<tc>, window_params = [{pipeline_mode = #tpu.pipeline_mode<synchronous>, transform_indices = @transform_0, window_bounds = array<i64: 32, 128>}, {transform_indices = @transform_1, window_bounds = array<i64: 1, 1, 128>}, {transform_indices = @transform_2, window_bounds = array<i64: 1, 128, 384>}, {transform_indices = @transform_3, window_bounds = array<i64: 1, 128, 128>}, {transform_indices = @transform_4, window_bounds = array<i64: 1, 1, 128>}, {transform_indices = @transform_5, window_bounds = array<i64: 1, 128, 768>}, {transform_indices = @transform_6, window_bounds = array<i64: 1, 384, 128>}, {pipeline_mode = #tpu.pipeline_mode<synchronous>, transform_indices = @transform_7, window_bounds = array<i64: 1, 128>}, {pipeline_mode = #tpu.pipeline_mode<synchronous>, transform_indices = @transform_8, window_bounds = array<i64: 32, 128>}]} {
    %c0_i32 = arith.constant 0 : i32
    %0 = arith.cmpi eq, %arg0, %c0_i32 : i32
    %1 = arith.extui %0 : i1 to i32
    %c0_i32_0 = arith.constant 0 : i32
    %2 = arith.cmpi ne, %1, %c0_i32_0 : i32
    scf.if %2 {
      %c0_65 = arith.constant 0 : index
      %c0_66 = arith.constant 0 : index
      %189 = vector.load %arg1[%c0_65, %c0_66] : memref<32x128xf32, #tpu.memory_space<vmem>>, vector<32x128xf32>
      %c0_67 = arith.constant 0 : index
      %c0_68 = arith.constant 0 : index
      %190 = vector.load %arg9[%c0_67, %c0_68] : memref<32x128xf32, #tpu.memory_space<vmem>>, vector<32x128xf32>
      tpu.vector_store %arg9[%c0_67, %c0_68], %189 {strides = array<i32>} : memref<32x128xf32, #tpu.memory_space<vmem>>, vector<32x128xf32>,
    } else {
    }
    %c0 = arith.constant 0 : index
    %c0_1 = arith.constant 0 : index
    %3 = vector.load %arg9[%c0, %c0_1] : memref<32x128xf32, #tpu.memory_space<vmem>>, vector<32x128xf32>
    %c0_2 = arith.constant 0 : index
    %c0_3 = arith.constant 0 : index
    %c0_4 = arith.constant 0 : index
    %4 = vector.load %arg2[%c0_2, %c0_3, %c0_4] : memref<1x1x128xf32, #tpu.memory_space<vmem>>, vector<1x1x128xf32>
    %5 = vector.shape_cast %4 : vector<1x1x128xf32> to vector<1x128xf32>
    %6 = arith.mulf %3, %3 : vector<32x128xf32>
    %cst = arith.constant dense<0.000000e+00> : vector<32xf32>
    %7 = vector.multi_reduction <add>, %6, %cst [1] : vector<32x128xf32> to vector<32xf32>
    %8 = vector.shape_cast %7 : vector<32xf32> to vector<32x1xf32>
    %cst_5 = arith.constant 1.280000e+02 : f32
    %9 = vector.broadcast %cst_5 : f32 to vector<32x1xf32>
    %10 = arith.divf %8, %9 : vector<32x1xf32>
    %cst_6 = arith.constant 9.99999997E-7 : f32
    %11 = vector.broadcast %cst_6 : f32 to vector<32x1xf32>
    %12 = arith.addf %10, %11 : vector<32x1xf32>
    %13 = math.rsqrt %12 : vector<32x1xf32>
    %14 = vector.broadcast %13 : vector<32x1xf32> to vector<32x128xf32>
    %15 = arith.mulf %3, %14 : vector<32x128xf32>
    %16 = vector.broadcast %5 : vector<1x128xf32> to vector<32x128xf32>
    %17 = arith.mulf %15, %16 : vector<32x128xf32>
    %18 = arith.truncf %17 : vector<32x128xf32> to vector<32x128xbf16>
    %c0_7 = arith.constant 0 : index
    %c0_8 = arith.constant 0 : index
    %c0_9 = arith.constant 0 : index
    %19 = vector.load %arg3[%c0_7, %c0_8, %c0_9] : memref<1x128x384xbf16, #tpu.memory_space<vmem>>, vector<1x128x384xbf16>
    %20 = vector.shape_cast %19 : vector<1x128x384xbf16> to vector<128x384xbf16>
    %cst_10 = arith.constant dense<0.000000e+00> : vector<32x384xf32>
    %21 = tpu.matmul %18, %20, %cst_10 {dimension_numbers = #tpu.dot_dimension_numbers<[1], [0], [0], [1], [0, 0, 1, 1], [], []>} : vector<32x128xbf16>, vector<128x384xbf16>, vector<32x384xf32> -> vector<32x384xf32>
    %22 = vector.extract_strided_slice %21 {offsets = [0, 0], sizes = [32, 128], strides = [1, 1]} : vector<32x384xf32> to vector<32x128xf32>
    %23 = vector.extract_strided_slice %21 {offsets = [0, 128], sizes = [32, 128], strides = [1, 1]} : vector<32x384xf32> to vector<32x128xf32>
    %24 = vector.extract_strided_slice %21 {offsets = [0, 256], sizes = [32, 128], strides = [1, 1]} : vector<32x384xf32> to vector<32x128xf32>
    %25 = vector.extract_strided_slice %22 {offsets = [0, 0], sizes = [16, 32], strides = [1, 1]} : vector<32x128xf32> to vector<16x32xf32>
    %26 = vector.extract_strided_slice %23 {offsets = [0, 0], sizes = [16, 32], strides = [1, 1]} : vector<32x128xf32> to vector<16x32xf32>
    %27 = vector.extract_strided_slice %24 {offsets = [0, 0], sizes = [16, 32], strides = [1, 1]} : vector<32x128xf32> to vector<16x32xf32>
    %cst_11 = arith.constant dense<0.000000e+00> : vector<16x16xf32>
    %28 = tpu.matmul %25, %26, %cst_11 {dimension_numbers = #tpu.dot_dimension_numbers<[1], [1], [0], [0], [0, 0, 1, 0], [], []>} : vector<16x32xf32>, vector<16x32xf32>, vector<16x16xf32> -> vector<16x16xf32>
    %cst_12 = arith.constant dense<0xFF800000> : vector<16xf32>
    %29 = vector.multi_reduction <maximumf>, %28, %cst_12 [1] : vector<16x16xf32> to vector<16xf32>
    %30 = vector.shape_cast %29 : vector<16xf32> to vector<16x1xf32>
    %31 = vector.broadcast %30 : vector<16x1xf32> to vector<16x16xf32>
    %32 = arith.subf %28, %31 : vector<16x16xf32>
    %33 = math.exp %32 : vector<16x16xf32>
    %cst_13 = arith.constant dense<0.000000e+00> : vector<16xf32>
    %34 = vector.multi_reduction <add>, %33, %cst_13 [1] : vector<16x16xf32> to vector<16xf32>
    %35 = vector.shape_cast %34 : vector<16xf32> to vector<16x1xf32>
    %36 = tpu.reciprocal %35 {approx = true} : vector<16x1xf32> -> vector<16x1xf32>
    %37 = vector.broadcast %36 : vector<16x1xf32> to vector<16x16xf32>
    %38 = arith.mulf %33, %37 : vector<16x16xf32>
    %cst_14 = arith.constant dense<0.000000e+00> : vector<16x32xf32>
    %39 = tpu.matmul %38, %27, %cst_14 {dimension_numbers = #tpu.dot_dimension_numbers<[1], [0], [0], [1], [0, 0, 1, 1], [], []>} : vector<16x16xf32>, vector<16x32xf32>, vector<16x32xf32> -> vector<16x32xf32>
    %40 = vector.extract_strided_slice %22 {offsets = [0, 32], sizes = [16, 32], strides = [1, 1]} : vector<32x128xf32> to vector<16x32xf32>
    %41 = vector.extract_strided_slice %23 {offsets = [0, 32], sizes = [16, 32], strides = [1, 1]} : vector<32x128xf32> to vector<16x32xf32>
    %42 = vector.extract_strided_slice %24 {offsets = [0, 32], sizes = [16, 32], strides = [1, 1]} : vector<32x128xf32> to vector<16x32xf32>
    %cst_15 = arith.constant dense<0.000000e+00> : vector<16x16xf32>
    %43 = tpu.matmul %40, %41, %cst_15 {dimension_numbers = #tpu.dot_dimension_numbers<[1], [1], [0], [0], [0, 0, 1, 0], [], []>} : vector<16x32xf32>, vector<16x32xf32>, vector<16x16xf32> -> vector<16x16xf32>
    %cst_16 = arith.constant dense<0xFF800000> : vector<16xf32>
    %44 = vector.multi_reduction <maximumf>, %43, %cst_16 [1] : vector<16x16xf32> to vector<16xf32>
    %45 = vector.shape_cast %44 : vector<16xf32> to vector<16x1xf32>
    %46 = vector.broadcast %45 : vector<16x1xf32> to vector<16x16xf32>
    %47 = arith.subf %43, %46 : vector<16x16xf32>
    %48 = math.exp %47 : vector<16x16xf32>
    %cst_17 = arith.constant dense<0.000000e+00> : vector<16xf32>
    %49 = vector.multi_reduction <add>, %48, %cst_17 [1] : vector<16x16xf32> to vector<16xf32>
    %50 = vector.shape_cast %49 : vector<16xf32> to vector<16x1xf32>
    %51 = tpu.reciprocal %50 {approx = true} : vector<16x1xf32> -> vector<16x1xf32>
    %52 = vector.broadcast %51 : vector<16x1xf32> to vector<16x16xf32>
    %53 = arith.mulf %48, %52 : vector<16x16xf32>
    %cst_18 = arith.constant dense<0.000000e+00> : vector<16x32xf32>
    %54 = tpu.matmul %53, %42, %cst_18 {dimension_numbers = #tpu.dot_dimension_numbers<[1], [0], [0], [1], [0, 0, 1, 1], [], []>} : vector<16x16xf32>, vector<16x32xf32>, vector<16x32xf32> -> vector<16x32xf32>
    %55 = vector.extract_strided_slice %22 {offsets = [0, 64], sizes = [16, 32], strides = [1, 1]} : vector<32x128xf32> to vector<16x32xf32>
    %56 = vector.extract_strided_slice %23 {offsets = [0, 64], sizes = [16, 32], strides = [1, 1]} : vector<32x128xf32> to vector<16x32xf32>
    %57 = vector.extract_strided_slice %24 {offsets = [0, 64], sizes = [16, 32], strides = [1, 1]} : vector<32x128xf32> to vector<16x32xf32>
    %cst_19 = arith.constant dense<0.000000e+00> : vector<16x16xf32>
    %58 = tpu.matmul %55, %56, %cst_19 {dimension_numbers = #tpu.dot_dimension_numbers<[1], [1], [0], [0], [0, 0, 1, 0], [], []>} : vector<16x32xf32>, vector<16x32xf32>, vector<16x16xf32> -> vector<16x16xf32>
    %cst_20 = arith.constant dense<0xFF800000> : vector<16xf32>
    %59 = vector.multi_reduction <maximumf>, %58, %cst_20 [1] : vector<16x16xf32> to vector<16xf32>
    %60 = vector.shape_cast %59 : vector<16xf32> to vector<16x1xf32>
    %61 = vector.broadcast %60 : vector<16x1xf32> to vector<16x16xf32>
    %62 = arith.subf %58, %61 : vector<16x16xf32>
    %63 = math.exp %62 : vector<16x16xf32>
    %cst_21 = arith.constant dense<0.000000e+00> : vector<16xf32>
    %64 = vector.multi_reduction <add>, %63, %cst_21 [1] : vector<16x16xf32> to vector<16xf32>
    %65 = vector.shape_cast %64 : vector<16xf32> to vector<16x1xf32>
    %66 = tpu.reciprocal %65 {approx = true} : vector<16x1xf32> -> vector<16x1xf32>
    %67 = vector.broadcast %66 : vector<16x1xf32> to vector<16x16xf32>
    %68 = arith.mulf %63, %67 : vector<16x16xf32>
    %cst_22 = arith.constant dense<0.000000e+00> : vector<16x32xf32>
    %69 = tpu.matmul %68, %57, %cst_22 {dimension_numbers = #tpu.dot_dimension_numbers<[1], [0], [0], [1], [0, 0, 1, 1], [], []>} : vector<16x16xf32>, vector<16x32xf32>, vector<16x32xf32> -> vector<16x32xf32>
    %70 = vector.extract_strided_slice %22 {offsets = [0, 96], sizes = [16, 32], strides = [1, 1]} : vector<32x128xf32> to vector<16x32xf32>
    %71 = vector.extract_strided_slice %23 {offsets = [0, 96], sizes = [16, 32], strides = [1, 1]} : vector<32x128xf32> to vector<16x32xf32>
    %72 = vector.extract_strided_slice %24 {offsets = [0, 96], sizes = [16, 32], strides = [1, 1]} : vector<32x128xf32> to vector<16x32xf32>
    %cst_23 = arith.constant dense<0.000000e+00> : vector<16x16xf32>
    %73 = tpu.matmul %70, %71, %cst_23 {dimension_numbers = #tpu.dot_dimension_numbers<[1], [1], [0], [0], [0, 0, 1, 0], [], []>} : vector<16x32xf32>, vector<16x32xf32>, vector<16x16xf32> -> vector<16x16xf32>
    %cst_24 = arith.constant dense<0xFF800000> : vector<16xf32>
    %74 = vector.multi_reduction <maximumf>, %73, %cst_24 [1] : vector<16x16xf32> to vector<16xf32>
    %75 = vector.shape_cast %74 : vector<16xf32> to vector<16x1xf32>
    %76 = vector.broadcast %75 : vector<16x1xf32> to vector<16x16xf32>
    %77 = arith.subf %73, %76 : vector<16x16xf32>
    %78 = math.exp %77 : vector<16x16xf32>
    %cst_25 = arith.constant dense<0.000000e+00> : vector<16xf32>
    %79 = vector.multi_reduction <add>, %78, %cst_25 [1] : vector<16x16xf32> to vector<16xf32>
    %80 = vector.shape_cast %79 : vector<16xf32> to vector<16x1xf32>
    %81 = tpu.reciprocal %80 {approx = true} : vector<16x1xf32> -> vector<16x1xf32>
    %82 = vector.broadcast %81 : vector<16x1xf32> to vector<16x16xf32>
    %83 = arith.mulf %78, %82 : vector<16x16xf32>
    %cst_26 = arith.constant dense<0.000000e+00> : vector<16x32xf32>
    %84 = tpu.matmul %83, %72, %cst_26 {dimension_numbers = #tpu.dot_dimension_numbers<[1], [0], [0], [1], [0, 0, 1, 1], [], []>} : vector<16x16xf32>, vector<16x32xf32>, vector<16x32xf32> -> vector<16x32xf32>
    %85 = tpu.concatenate %39, %54, %69, %84 in 1 : vector<16x32xf32>, vector<16x32xf32>, vector<16x32xf32>, vector<16x32xf32> -> vector<16x128xf32>
    %86 = vector.extract_strided_slice %22 {offsets = [16, 0], sizes = [16, 32], strides = [1, 1]} : vector<32x128xf32> to vector<16x32xf32>
    %87 = vector.extract_strided_slice %23 {offsets = [16, 0], sizes = [16, 32], strides = [1, 1]} : vector<32x128xf32> to vector<16x32xf32>
    %88 = vector.extract_strided_slice %24 {offsets = [16, 0], sizes = [16, 32], strides = [1, 1]} : vector<32x128xf32> to vector<16x32xf32>
    %cst_27 = arith.constant dense<0.000000e+00> : vector<16x16xf32>
    %89 = tpu.matmul %86, %87, %cst_27 {dimension_numbers = #tpu.dot_dimension_numbers<[1], [1], [0], [0], [0, 0, 1, 0], [], []>} : vector<16x32xf32>, vector<16x32xf32>, vector<16x16xf32> -> vector<16x16xf32>
    %cst_28 = arith.constant dense<0xFF800000> : vector<16xf32>
    %90 = vector.multi_reduction <maximumf>, %89, %cst_28 [1] : vector<16x16xf32> to vector<16xf32>
    %91 = vector.shape_cast %90 : vector<16xf32> to vector<16x1xf32>
    %92 = vector.broadcast %91 : vector<16x1xf32> to vector<16x16xf32>
    %93 = arith.subf %89, %92 : vector<16x16xf32>
    %94 = math.exp %93 : vector<16x16xf32>
    %cst_29 = arith.constant dense<0.000000e+00> : vector<16xf32>
    %95 = vector.multi_reduction <add>, %94, %cst_29 [1] : vector<16x16xf32> to vector<16xf32>
    %96 = vector.shape_cast %95 : vector<16xf32> to vector<16x1xf32>
    %97 = tpu.reciprocal %96 {approx = true} : vector<16x1xf32> -> vector<16x1xf32>
    %98 = vector.broadcast %97 : vector<16x1xf32> to vector<16x16xf32>
    %99 = arith.mulf %94, %98 : vector<16x16xf32>
    %cst_30 = arith.constant dense<0.000000e+00> : vector<16x32xf32>
    %100 = tpu.matmul %99, %88, %cst_30 {dimension_numbers = #tpu.dot_dimension_numbers<[1], [0], [0], [1], [0, 0, 1, 1], [], []>} : vector<16x16xf32>, vector<16x32xf32>, vector<16x32xf32> -> vector<16x32xf32>
    %101 = vector.extract_strided_slice %22 {offsets = [16, 32], sizes = [16, 32], strides = [1, 1]} : vector<32x128xf32> to vector<16x32xf32>
    %102 = vector.extract_strided_slice %23 {offsets = [16, 32], sizes = [16, 32], strides = [1, 1]} : vector<32x128xf32> to vector<16x32xf32>
    %103 = vector.extract_strided_slice %24 {offsets = [16, 32], sizes = [16, 32], strides = [1, 1]} : vector<32x128xf32> to vector<16x32xf32>
    %cst_31 = arith.constant dense<0.000000e+00> : vector<16x16xf32>
    %104 = tpu.matmul %101, %102, %cst_31 {dimension_numbers = #tpu.dot_dimension_numbers<[1], [1], [0], [0], [0, 0, 1, 0], [], []>} : vector<16x32xf32>, vector<16x32xf32>, vector<16x16xf32> -> vector<16x16xf32>
    %cst_32 = arith.constant dense<0xFF800000> : vector<16xf32>
    %105 = vector.multi_reduction <maximumf>, %104, %cst_32 [1] : vector<16x16xf32> to vector<16xf32>
    %106 = vector.shape_cast %105 : vector<16xf32> to vector<16x1xf32>
    %107 = vector.broadcast %106 : vector<16x1xf32> to vector<16x16xf32>
    %108 = arith.subf %104, %107 : vector<16x16xf32>
    %109 = math.exp %108 : vector<16x16xf32>
    %cst_33 = arith.constant dense<0.000000e+00> : vector<16xf32>
    %110 = vector.multi_reduction <add>, %109, %cst_33 [1] : vector<16x16xf32> to vector<16xf32>
    %111 = vector.shape_cast %110 : vector<16xf32> to vector<16x1xf32>
    %112 = tpu.reciprocal %111 {approx = true} : vector<16x1xf32> -> vector<16x1xf32>
    %113 = vector.broadcast %112 : vector<16x1xf32> to vector<16x16xf32>
    %114 = arith.mulf %109, %113 : vector<16x16xf32>
    %cst_34 = arith.constant dense<0.000000e+00> : vector<16x32xf32>
    %115 = tpu.matmul %114, %103, %cst_34 {dimension_numbers = #tpu.dot_dimension_numbers<[1], [0], [0], [1], [0, 0, 1, 1], [], []>} : vector<16x16xf32>, vector<16x32xf32>, vector<16x32xf32> -> vector<16x32xf32>
    %116 = vector.extract_strided_slice %22 {offsets = [16, 64], sizes = [16, 32], strides = [1, 1]} : vector<32x128xf32> to vector<16x32xf32>
    %117 = vector.extract_strided_slice %23 {offsets = [16, 64], sizes = [16, 32], strides = [1, 1]} : vector<32x128xf32> to vector<16x32xf32>
    %118 = vector.extract_strided_slice %24 {offsets = [16, 64], sizes = [16, 32], strides = [1, 1]} : vector<32x128xf32> to vector<16x32xf32>
    %cst_35 = arith.constant dense<0.000000e+00> : vector<16x16xf32>
    %119 = tpu.matmul %116, %117, %cst_35 {dimension_numbers = #tpu.dot_dimension_numbers<[1], [1], [0], [0], [0, 0, 1, 0], [], []>} : vector<16x32xf32>, vector<16x32xf32>, vector<16x16xf32> -> vector<16x16xf32>
    %cst_36 = arith.constant dense<0xFF800000> : vector<16xf32>
    %120 = vector.multi_reduction <maximumf>, %119, %cst_36 [1] : vector<16x16xf32> to vector<16xf32>
    %121 = vector.shape_cast %120 : vector<16xf32> to vector<16x1xf32>
    %122 = vector.broadcast %121 : vector<16x1xf32> to vector<16x16xf32>
    %123 = arith.subf %119, %122 : vector<16x16xf32>
    %124 = math.exp %123 : vector<16x16xf32>
    %cst_37 = arith.constant dense<0.000000e+00> : vector<16xf32>
    %125 = vector.multi_reduction <add>, %124, %cst_37 [1] : vector<16x16xf32> to vector<16xf32>
    %126 = vector.shape_cast %125 : vector<16xf32> to vector<16x1xf32>
    %127 = tpu.reciprocal %126 {approx = true} : vector<16x1xf32> -> vector<16x1xf32>
    %128 = vector.broadcast %127 : vector<16x1xf32> to vector<16x16xf32>
    %129 = arith.mulf %124, %128 : vector<16x16xf32>
    %cst_38 = arith.constant dense<0.000000e+00> : vector<16x32xf32>
    %130 = tpu.matmul %129, %118, %cst_38 {dimension_numbers = #tpu.dot_dimension_numbers<[1], [0], [0], [1], [0, 0, 1, 1], [], []>} : vector<16x16xf32>, vector<16x32xf32>, vector<16x32xf32> -> vector<16x32xf32>
    %131 = vector.extract_strided_slice %22 {offsets = [16, 96], sizes = [16, 32], strides = [1, 1]} : vector<32x128xf32> to vector<16x32xf32>
    %132 = vector.extract_strided_slice %23 {offsets = [16, 96], sizes = [16, 32], strides = [1, 1]} : vector<32x128xf32> to vector<16x32xf32>
    %133 = vector.extract_strided_slice %24 {offsets = [16, 96], sizes = [16, 32], strides = [1, 1]} : vector<32x128xf32> to vector<16x32xf32>
    %cst_39 = arith.constant dense<0.000000e+00> : vector<16x16xf32>
    %134 = tpu.matmul %131, %132, %cst_39 {dimension_numbers = #tpu.dot_dimension_numbers<[1], [1], [0], [0], [0, 0, 1, 0], [], []>} : vector<16x32xf32>, vector<16x32xf32>, vector<16x16xf32> -> vector<16x16xf32>
    %cst_40 = arith.constant dense<0xFF800000> : vector<16xf32>
    %135 = vector.multi_reduction <maximumf>, %134, %cst_40 [1] : vector<16x16xf32> to vector<16xf32>
    %136 = vector.shape_cast %135 : vector<16xf32> to vector<16x1xf32>
    %137 = vector.broadcast %136 : vector<16x1xf32> to vector<16x16xf32>
    %138 = arith.subf %134, %137 : vector<16x16xf32>
    %139 = math.exp %138 : vector<16x16xf32>
    %cst_41 = arith.constant dense<0.000000e+00> : vector<16xf32>
    %140 = vector.multi_reduction <add>, %139, %cst_41 [1] : vector<16x16xf32> to vector<16xf32>
    %141 = vector.shape_cast %140 : vector<16xf32> to vector<16x1xf32>
    %142 = tpu.reciprocal %141 {approx = true} : vector<16x1xf32> -> vector<16x1xf32>
    %143 = vector.broadcast %142 : vector<16x1xf32> to vector<16x16xf32>
    %144 = arith.mulf %139, %143 : vector<16x16xf32>
    %cst_42 = arith.constant dense<0.000000e+00> : vector<16x32xf32>
    %145 = tpu.matmul %144, %133, %cst_42 {dimension_numbers = #tpu.dot_dimension_numbers<[1], [0], [0], [1], [0, 0, 1, 1], [], []>} : vector<16x16xf32>, vector<16x32xf32>, vector<16x32xf32> -> vector<16x32xf32>
    %146 = tpu.concatenate %100, %115, %130, %145 in 1 : vector<16x32xf32>, vector<16x32xf32>, vector<16x32xf32>, vector<16x32xf32> -> vector<16x128xf32>
    %147 = tpu.concatenate %85, %146 in 0 : vector<16x128xf32>, vector<16x128xf32> -> vector<32x128xf32>
    %148 = arith.truncf %147 : vector<32x128xf32> to vector<32x128xbf16>
    %c0_43 = arith.constant 0 : index
    %c0_44 = arith.constant 0 : index
    %c0_45 = arith.constant 0 : index
    %149 = vector.load %arg4[%c0_43, %c0_44, %c0_45] : memref<1x128x128xbf16, #tpu.memory_space<vmem>>, vector<1x128x128xbf16>
    %150 = vector.shape_cast %149 : vector<1x128x128xbf16> to vector<128x128xbf16>
    %cst_46 = arith.constant dense<0.000000e+00> : vector<32x128xf32>
    %151 = tpu.matmul %148, %150, %cst_46 {dimension_numbers = #tpu.dot_dimension_numbers<[1], [0], [0], [1], [0, 0, 1, 1], [], []>} : vector<32x128xbf16>, vector<128x128xbf16>, vector<32x128xf32> -> vector<32x128xf32>
    %152 = arith.addf %3, %151 : vector<32x128xf32>
    %c0_47 = arith.constant 0 : index
    %c0_48 = arith.constant 0 : index
    %c0_49 = arith.constant 0 : index
    %153 = vector.load %arg5[%c0_47, %c0_48, %c0_49] : memref<1x1x128xf32, #tpu.memory_space<vmem>>, vector<1x1x128xf32>
    %154 = vector.shape_cast %153 : vector<1x1x128xf32> to vector<1x128xf32>
    %155 = arith.mulf %152, %152 : vector<32x128xf32>
    %cst_50 = arith.constant dense<0.000000e+00> : vector<32xf32>
    %156 = vector.multi_reduction <add>, %155, %cst_50 [1] : vector<32x128xf32> to vector<32xf32>
    %157 = vector.shape_cast %156 : vector<32xf32> to vector<32x1xf32>
    %cst_51 = arith.constant 1.280000e+02 : f32
    %158 = vector.broadcast %cst_51 : f32 to vector<32x1xf32>
    %159 = arith.divf %157, %158 : vector<32x1xf32>
    %cst_52 = arith.constant 9.99999997E-7 : f32
    %160 = vector.broadcast %cst_52 : f32 to vector<32x1xf32>
    %161 = arith.addf %159, %160 : vector<32x1xf32>
    %162 = math.rsqrt %161 : vector<32x1xf32>
    %163 = vector.broadcast %162 : vector<32x1xf32> to vector<32x128xf32>
    %164 = arith.mulf %152, %163 : vector<32x128xf32>
    %165 = vector.broadcast %154 : vector<1x128xf32> to vector<32x128xf32>
    %166 = arith.mulf %164, %165 : vector<32x128xf32>
    %167 = arith.truncf %166 : vector<32x128xf32> to vector<32x128xbf16>
    %c0_53 = arith.constant 0 : index
    %c0_54 = arith.constant 0 : index
    %c0_55 = arith.constant 0 : index
    %168 = vector.load %arg6[%c0_53, %c0_54, %c0_55] : memref<1x128x768xbf16, #tpu.memory_space<vmem>>, vector<1x128x768xbf16>
    %169 = vector.shape_cast %168 : vector<1x128x768xbf16> to vector<128x768xbf16>
    %cst_56 = arith.constant dense<0.000000e+00> : vector<32x768xf32>
    %170 = tpu.matmul %167, %169, %cst_56 {dimension_numbers = #tpu.dot_dimension_numbers<[1], [0], [0], [1], [0, 0, 1, 1], [], []>} : vector<32x128xbf16>, vector<128x768xbf16>, vector<32x768xf32> -> vector<32x768xf32>
    %171 = vector.extract_strided_slice %170 {offsets = [0, 0], sizes = [32, 384], strides = [1, 1]} : vector<32x768xf32> to vector<32x384xf32>
    %172 = vector.extract_strided_slice %170 {offsets = [0, 384], sizes = [32, 384], strides = [1, 1]} : vector<32x768xf32> to vector<32x384xf32>
    %173 = arith.negf %171 : vector<32x384xf32>
    %174 = math.exp %173 : vector<32x384xf32>
    %cst_57 = arith.constant 1.000000e+00 : f32
    %175 = vector.broadcast %cst_57 : f32 to vector<32x384xf32>
    %176 = arith.addf %175, %174 : vector<32x384xf32>
    %177 = arith.divf %175, %176 : vector<32x384xf32>
    %178 = arith.mulf %171, %177 : vector<32x384xf32>
    %179 = arith.mulf %178, %172 : vector<32x384xf32>
    %180 = arith.truncf %179 : vector<32x384xf32> to vector<32x384xbf16>
    %c0_58 = arith.constant 0 : index
    %c0_59 = arith.constant 0 : index
    %c0_60 = arith.constant 0 : index
    %181 = vector.load %arg7[%c0_58, %c0_59, %c0_60] : memref<1x384x128xbf16, #tpu.memory_space<vmem>>, vector<1x384x128xbf16>
    %182 = vector.shape_cast %181 : vector<1x384x128xbf16> to vector<384x128xbf16>
    %cst_61 = arith.constant dense<0.000000e+00> : vector<32x128xf32>
    %183 = tpu.matmul %180, %182, %cst_61 {dimension_numbers = #tpu.dot_dimension_numbers<[1], [0], [0], [1], [0, 0, 1, 1], [], []>} : vector<32x384xbf16>, vector<384x128xbf16>, vector<32x128xf32> -> vector<32x128xf32>
    %184 = arith.addf %152, %183 : vector<32x128xf32>
    %c0_62 = arith.constant 0 : index
    %c0_63 = arith.constant 0 : index
    %185 = vector.load %arg9[%c0_62, %c0_63] : memref<32x128xf32, #tpu.memory_space<vmem>>, vector<32x128xf32>
    tpu.vector_store %arg9[%c0_62, %c0_63], %184 {strides = array<i32>} : memref<32x128xf32, #tpu.memory_space<vmem>>, vector<32x128xf32>,
    %c1_i32 = arith.constant 1 : i32
    %186 = arith.cmpi eq, %arg0, %c1_i32 : i32
    %187 = arith.extui %186 : i1 to i32
    %c0_i32_64 = arith.constant 0 : i32
    %188 = arith.cmpi ne, %187, %c0_i32_64 : i32
    scf.if %188 {
      %c0_65 = arith.constant 0 : index
      %c0_66 = arith.constant 0 : index
      %189 = vector.load %arg9[%c0_65, %c0_66] : memref<32x128xf32, #tpu.memory_space<vmem>>, vector<32x128xf32>
      %c0_67 = arith.constant 0 : index
      %c0_68 = arith.constant 0 : index
      %190 = vector.load %arg8[%c0_67, %c0_68] : memref<1x128xf32, #tpu.memory_space<vmem>>, vector<1x128xf32>
      %191 = arith.mulf %189, %189 : vector<32x128xf32>
      %cst_69 = arith.constant dense<0.000000e+00> : vector<32xf32>
      %192 = vector.multi_reduction <add>, %191, %cst_69 [1] : vector<32x128xf32> to vector<32xf32>
      %193 = vector.shape_cast %192 : vector<32xf32> to vector<32x1xf32>
      %cst_70 = arith.constant 1.280000e+02 : f32
      %194 = vector.broadcast %cst_70 : f32 to vector<32x1xf32>
      %195 = arith.divf %193, %194 : vector<32x1xf32>
      %cst_71 = arith.constant 9.99999997E-7 : f32
      %196 = vector.broadcast %cst_71 : f32 to vector<32x1xf32>
      %197 = arith.addf %195, %196 : vector<32x1xf32>
      %198 = math.rsqrt %197 : vector<32x1xf32>
      %199 = vector.broadcast %198 : vector<32x1xf32> to vector<32x128xf32>
      %200 = arith.mulf %189, %199 : vector<32x128xf32>
      %201 = vector.broadcast %190 : vector<1x128xf32> to vector<32x128xf32>
      %202 = arith.mulf %200, %201 : vector<32x128xf32>
      %c0_72 = arith.constant 0 : index
      %c0_73 = arith.constant 0 : index
      %203 = vector.load %arg9[%c0_72, %c0_73] : memref<32x128xf32, #tpu.memory_space<vmem>>, vector<32x128xf32>
      tpu.vector_store %arg9[%c0_72, %c0_73], %202 {strides = array<i32>} : memref<32x128xf32, #tpu.memory_space<vmem>>, vector<32x128xf32>,
    } else {
    }
    return
  }
  func.func @transform_0(%arg0: i32) -> (i32, i32) {
    %c0_i32 = arith.constant 0 : i32
    %c0_i32_0 = arith.constant 0 : i32
    %c0_i32_1 = arith.constant 0 : i32
    return %c0_i32, %c0_i32_0 : i32, i32
  }
  func.func @transform_1(%arg0: i32) -> (i32, i32, i32) {
    %c0_i32 = arith.constant 0 : i32
    %c0_i32_0 = arith.constant 0 : i32
    %c0_i32_1 = arith.constant 0 : i32
    return %arg0, %c0_i32, %c0_i32_0 : i32, i32, i32
  }
  func.func @transform_2(%arg0: i32) -> (i32, i32, i32) {
    %c0_i32 = arith.constant 0 : i32
    %c0_i32_0 = arith.constant 0 : i32
    %c0_i32_1 = arith.constant 0 : i32
    return %arg0, %c0_i32, %c0_i32_0 : i32, i32, i32
  }
  func.func @transform_3(%arg0: i32) -> (i32, i32, i32) {
    %c0_i32 = arith.constant 0 : i32
    %c0_i32_0 = arith.constant 0 : i32
    %c0_i32_1 = arith.constant 0 : i32
    return %arg0, %c0_i32, %c0_i32_0 : i32, i32, i32
  }
  func.func @transform_4(%arg0: i32) -> (i32, i32, i32) {
    %c0_i32 = arith.constant 0 : i32
    %c0_i32_0 = arith.constant 0 : i32
    %c0_i32_1 = arith.constant 0 : i32
    return %arg0, %c0_i32, %c0_i32_0 : i32, i32, i32
  }
  func.func @transform_5(%arg0: i32) -> (i32, i32, i32) {
    %c0_i32 = arith.constant 0 : i32
    %c0_i32_0 = arith.constant 0 : i32
    %c0_i32_1 = arith.constant 0 : i32
    return %arg0, %c0_i32, %c0_i32_0 : i32, i32, i32
  }
  func.func @transform_6(%arg0: i32) -> (i32, i32, i32) {
    %c0_i32 = arith.constant 0 : i32
    %c0_i32_0 = arith.constant 0 : i32
    %c0_i32_1 = arith.constant 0 : i32
    return %arg0, %c0_i32, %c0_i32_0 : i32, i32, i32
  }
  func.func @transform_7(%arg0: i32) -> (i32, i32) {
    %c0_i32 = arith.constant 0 : i32
    %c0_i32_0 = arith.constant 0 : i32
    %c0_i32_1 = arith.constant 0 : i32
    return %c0_i32, %c0_i32_0 : i32, i32
  }
  func.func @transform_8(%arg0: i32) -> (i32, i32) {
    %c0_i32 = arith.constant 0 : i32
    %c0_i32_0 = arith.constant 0 : i32
    %c0_i32_1 = arith.constant 0 : i32
    return %c0_i32, %c0_i32_0 : i32, i32
  }
}

module attributes {stable_mosaic.version = 11 : i64} {
  func.func @_fused_block_stack_kernel(%arg0: i32, %arg1: memref<16x128xf32, #tpu.memory_space<vmem>>, %arg2: memref<1x1x128xf32, #tpu.memory_space<vmem>>, %arg3: memref<1x128x384xbf16, #tpu.memory_space<vmem>>, %arg4: memref<1x128x128xbf16, #tpu.memory_space<vmem>>, %arg5: memref<1x1x128xf32, #tpu.memory_space<vmem>>, %arg6: memref<1x128x768xbf16, #tpu.memory_space<vmem>>, %arg7: memref<1x384x128xbf16, #tpu.memory_space<vmem>>, %arg8: memref<16x128xf32, #tpu.memory_space<vmem>>) attributes {dimension_semantics = [#tpu.dimension_semantics<arbitrary>], iteration_bounds = array<i64: 2>, scalar_prefetch = 0 : i64, scratch_operands = 0 : i64, tpu.core_type = #tpu.core_type<tc>, window_params = [{pipeline_mode = #tpu.pipeline_mode<synchronous>, transform_indices = @transform_0, window_bounds = array<i64: 16, 128>}, {transform_indices = @transform_1, window_bounds = array<i64: 1, 1, 128>}, {transform_indices = @transform_2, window_bounds = array<i64: 1, 128, 384>}, {transform_indices = @transform_3, window_bounds = array<i64: 1, 128, 128>}, {transform_indices = @transform_4, window_bounds = array<i64: 1, 1, 128>}, {transform_indices = @transform_5, window_bounds = array<i64: 1, 128, 768>}, {transform_indices = @transform_6, window_bounds = array<i64: 1, 384, 128>}, {pipeline_mode = #tpu.pipeline_mode<synchronous>, transform_indices = @transform_7, window_bounds = array<i64: 16, 128>}]} {
    %c0_i32 = arith.constant 0 : i32
    %0 = arith.cmpi eq, %arg0, %c0_i32 : i32
    %1 = arith.extui %0 : i1 to i32
    %c0_i32_0 = arith.constant 0 : i32
    %2 = arith.cmpi ne, %1, %c0_i32_0 : i32
    scf.if %2 {
      %c0_64 = arith.constant 0 : index
      %c0_65 = arith.constant 0 : index
      %186 = vector.load %arg1[%c0_64, %c0_65] : memref<16x128xf32, #tpu.memory_space<vmem>>, vector<16x128xf32>
      %c0_66 = arith.constant 0 : index
      %c0_67 = arith.constant 0 : index
      %187 = vector.load %arg8[%c0_66, %c0_67] : memref<16x128xf32, #tpu.memory_space<vmem>>, vector<16x128xf32>
      tpu.vector_store %arg8[%c0_66, %c0_67], %186 {strides = array<i32>} : memref<16x128xf32, #tpu.memory_space<vmem>>, vector<16x128xf32>,
    } else {
    }
    %c0 = arith.constant 0 : index
    %c0_1 = arith.constant 0 : index
    %3 = vector.load %arg8[%c0, %c0_1] : memref<16x128xf32, #tpu.memory_space<vmem>>, vector<16x128xf32>
    %c0_2 = arith.constant 0 : index
    %c0_3 = arith.constant 0 : index
    %c0_4 = arith.constant 0 : index
    %4 = vector.load %arg2[%c0_2, %c0_3, %c0_4] : memref<1x1x128xf32, #tpu.memory_space<vmem>>, vector<1x1x128xf32>
    %5 = vector.shape_cast %4 : vector<1x1x128xf32> to vector<1x128xf32>
    %6 = arith.mulf %3, %3 : vector<16x128xf32>
    %cst = arith.constant dense<0.000000e+00> : vector<16xf32>
    %7 = vector.multi_reduction <add>, %6, %cst [1] : vector<16x128xf32> to vector<16xf32>
    %8 = vector.shape_cast %7 : vector<16xf32> to vector<16x1xf32>
    %cst_5 = arith.constant 1.280000e+02 : f32
    %9 = vector.broadcast %cst_5 : f32 to vector<16x1xf32>
    %10 = arith.divf %8, %9 : vector<16x1xf32>
    %cst_6 = arith.constant 9.99999997E-7 : f32
    %11 = vector.broadcast %cst_6 : f32 to vector<16x1xf32>
    %12 = arith.addf %10, %11 : vector<16x1xf32>
    %13 = math.rsqrt %12 : vector<16x1xf32>
    %14 = vector.broadcast %13 : vector<16x1xf32> to vector<16x128xf32>
    %15 = arith.mulf %3, %14 : vector<16x128xf32>
    %16 = vector.broadcast %5 : vector<1x128xf32> to vector<16x128xf32>
    %17 = arith.mulf %15, %16 : vector<16x128xf32>
    %18 = arith.truncf %17 : vector<16x128xf32> to vector<16x128xbf16>
    %c0_7 = arith.constant 0 : index
    %c0_8 = arith.constant 0 : index
    %c0_9 = arith.constant 0 : index
    %19 = vector.load %arg3[%c0_7, %c0_8, %c0_9] : memref<1x128x384xbf16, #tpu.memory_space<vmem>>, vector<1x128x384xbf16>
    %20 = vector.shape_cast %19 : vector<1x128x384xbf16> to vector<128x384xbf16>
    %cst_10 = arith.constant dense<0.000000e+00> : vector<16x384xf32>
    %21 = tpu.matmul %18, %20, %cst_10 {dimension_numbers = #tpu.dot_dimension_numbers<[1], [0], [0], [1], [0, 0, 1, 1], [], []>} : vector<16x128xbf16>, vector<128x384xbf16>, vector<16x384xf32> -> vector<16x384xf32>
    %22 = vector.extract_strided_slice %21 {offsets = [0, 0], sizes = [16, 128], strides = [1, 1]} : vector<16x384xf32> to vector<16x128xf32>
    %23 = vector.extract_strided_slice %21 {offsets = [0, 128], sizes = [16, 128], strides = [1, 1]} : vector<16x384xf32> to vector<16x128xf32>
    %24 = vector.extract_strided_slice %21 {offsets = [0, 256], sizes = [16, 128], strides = [1, 1]} : vector<16x384xf32> to vector<16x128xf32>
    %25 = vector.extract_strided_slice %22 {offsets = [0, 0], sizes = [8, 32], strides = [1, 1]} : vector<16x128xf32> to vector<8x32xf32>
    %26 = vector.extract_strided_slice %23 {offsets = [0, 0], sizes = [8, 32], strides = [1, 1]} : vector<16x128xf32> to vector<8x32xf32>
    %27 = vector.extract_strided_slice %24 {offsets = [0, 0], sizes = [8, 32], strides = [1, 1]} : vector<16x128xf32> to vector<8x32xf32>
    %cst_11 = arith.constant dense<0.000000e+00> : vector<8x8xf32>
    %28 = tpu.matmul %25, %26, %cst_11 {dimension_numbers = #tpu.dot_dimension_numbers<[1], [1], [0], [0], [0, 0, 1, 0], [], []>} : vector<8x32xf32>, vector<8x32xf32>, vector<8x8xf32> -> vector<8x8xf32>
    %cst_12 = arith.constant dense<0xFF800000> : vector<8xf32>
    %29 = vector.multi_reduction <maximumf>, %28, %cst_12 [1] : vector<8x8xf32> to vector<8xf32>
    %30 = vector.shape_cast %29 : vector<8xf32> to vector<8x1xf32>
    %31 = vector.broadcast %30 : vector<8x1xf32> to vector<8x8xf32>
    %32 = arith.subf %28, %31 : vector<8x8xf32>
    %33 = math.exp %32 : vector<8x8xf32>
    %cst_13 = arith.constant dense<0.000000e+00> : vector<8xf32>
    %34 = vector.multi_reduction <add>, %33, %cst_13 [1] : vector<8x8xf32> to vector<8xf32>
    %35 = vector.shape_cast %34 : vector<8xf32> to vector<8x1xf32>
    %36 = tpu.reciprocal %35 {approx = true} : vector<8x1xf32> -> vector<8x1xf32>
    %37 = vector.broadcast %36 : vector<8x1xf32> to vector<8x8xf32>
    %38 = arith.mulf %33, %37 : vector<8x8xf32>
    %cst_14 = arith.constant dense<0.000000e+00> : vector<8x32xf32>
    %39 = tpu.matmul %38, %27, %cst_14 {dimension_numbers = #tpu.dot_dimension_numbers<[1], [0], [0], [1], [0, 0, 1, 1], [], []>} : vector<8x8xf32>, vector<8x32xf32>, vector<8x32xf32> -> vector<8x32xf32>
    %40 = vector.extract_strided_slice %22 {offsets = [0, 32], sizes = [8, 32], strides = [1, 1]} : vector<16x128xf32> to vector<8x32xf32>
    %41 = vector.extract_strided_slice %23 {offsets = [0, 32], sizes = [8, 32], strides = [1, 1]} : vector<16x128xf32> to vector<8x32xf32>
    %42 = vector.extract_strided_slice %24 {offsets = [0, 32], sizes = [8, 32], strides = [1, 1]} : vector<16x128xf32> to vector<8x32xf32>
    %cst_15 = arith.constant dense<0.000000e+00> : vector<8x8xf32>
    %43 = tpu.matmul %40, %41, %cst_15 {dimension_numbers = #tpu.dot_dimension_numbers<[1], [1], [0], [0], [0, 0, 1, 0], [], []>} : vector<8x32xf32>, vector<8x32xf32>, vector<8x8xf32> -> vector<8x8xf32>
    %cst_16 = arith.constant dense<0xFF800000> : vector<8xf32>
    %44 = vector.multi_reduction <maximumf>, %43, %cst_16 [1] : vector<8x8xf32> to vector<8xf32>
    %45 = vector.shape_cast %44 : vector<8xf32> to vector<8x1xf32>
    %46 = vector.broadcast %45 : vector<8x1xf32> to vector<8x8xf32>
    %47 = arith.subf %43, %46 : vector<8x8xf32>
    %48 = math.exp %47 : vector<8x8xf32>
    %cst_17 = arith.constant dense<0.000000e+00> : vector<8xf32>
    %49 = vector.multi_reduction <add>, %48, %cst_17 [1] : vector<8x8xf32> to vector<8xf32>
    %50 = vector.shape_cast %49 : vector<8xf32> to vector<8x1xf32>
    %51 = tpu.reciprocal %50 {approx = true} : vector<8x1xf32> -> vector<8x1xf32>
    %52 = vector.broadcast %51 : vector<8x1xf32> to vector<8x8xf32>
    %53 = arith.mulf %48, %52 : vector<8x8xf32>
    %cst_18 = arith.constant dense<0.000000e+00> : vector<8x32xf32>
    %54 = tpu.matmul %53, %42, %cst_18 {dimension_numbers = #tpu.dot_dimension_numbers<[1], [0], [0], [1], [0, 0, 1, 1], [], []>} : vector<8x8xf32>, vector<8x32xf32>, vector<8x32xf32> -> vector<8x32xf32>
    %55 = vector.extract_strided_slice %22 {offsets = [0, 64], sizes = [8, 32], strides = [1, 1]} : vector<16x128xf32> to vector<8x32xf32>
    %56 = vector.extract_strided_slice %23 {offsets = [0, 64], sizes = [8, 32], strides = [1, 1]} : vector<16x128xf32> to vector<8x32xf32>
    %57 = vector.extract_strided_slice %24 {offsets = [0, 64], sizes = [8, 32], strides = [1, 1]} : vector<16x128xf32> to vector<8x32xf32>
    %cst_19 = arith.constant dense<0.000000e+00> : vector<8x8xf32>
    %58 = tpu.matmul %55, %56, %cst_19 {dimension_numbers = #tpu.dot_dimension_numbers<[1], [1], [0], [0], [0, 0, 1, 0], [], []>} : vector<8x32xf32>, vector<8x32xf32>, vector<8x8xf32> -> vector<8x8xf32>
    %cst_20 = arith.constant dense<0xFF800000> : vector<8xf32>
    %59 = vector.multi_reduction <maximumf>, %58, %cst_20 [1] : vector<8x8xf32> to vector<8xf32>
    %60 = vector.shape_cast %59 : vector<8xf32> to vector<8x1xf32>
    %61 = vector.broadcast %60 : vector<8x1xf32> to vector<8x8xf32>
    %62 = arith.subf %58, %61 : vector<8x8xf32>
    %63 = math.exp %62 : vector<8x8xf32>
    %cst_21 = arith.constant dense<0.000000e+00> : vector<8xf32>
    %64 = vector.multi_reduction <add>, %63, %cst_21 [1] : vector<8x8xf32> to vector<8xf32>
    %65 = vector.shape_cast %64 : vector<8xf32> to vector<8x1xf32>
    %66 = tpu.reciprocal %65 {approx = true} : vector<8x1xf32> -> vector<8x1xf32>
    %67 = vector.broadcast %66 : vector<8x1xf32> to vector<8x8xf32>
    %68 = arith.mulf %63, %67 : vector<8x8xf32>
    %cst_22 = arith.constant dense<0.000000e+00> : vector<8x32xf32>
    %69 = tpu.matmul %68, %57, %cst_22 {dimension_numbers = #tpu.dot_dimension_numbers<[1], [0], [0], [1], [0, 0, 1, 1], [], []>} : vector<8x8xf32>, vector<8x32xf32>, vector<8x32xf32> -> vector<8x32xf32>
    %70 = vector.extract_strided_slice %22 {offsets = [0, 96], sizes = [8, 32], strides = [1, 1]} : vector<16x128xf32> to vector<8x32xf32>
    %71 = vector.extract_strided_slice %23 {offsets = [0, 96], sizes = [8, 32], strides = [1, 1]} : vector<16x128xf32> to vector<8x32xf32>
    %72 = vector.extract_strided_slice %24 {offsets = [0, 96], sizes = [8, 32], strides = [1, 1]} : vector<16x128xf32> to vector<8x32xf32>
    %cst_23 = arith.constant dense<0.000000e+00> : vector<8x8xf32>
    %73 = tpu.matmul %70, %71, %cst_23 {dimension_numbers = #tpu.dot_dimension_numbers<[1], [1], [0], [0], [0, 0, 1, 0], [], []>} : vector<8x32xf32>, vector<8x32xf32>, vector<8x8xf32> -> vector<8x8xf32>
    %cst_24 = arith.constant dense<0xFF800000> : vector<8xf32>
    %74 = vector.multi_reduction <maximumf>, %73, %cst_24 [1] : vector<8x8xf32> to vector<8xf32>
    %75 = vector.shape_cast %74 : vector<8xf32> to vector<8x1xf32>
    %76 = vector.broadcast %75 : vector<8x1xf32> to vector<8x8xf32>
    %77 = arith.subf %73, %76 : vector<8x8xf32>
    %78 = math.exp %77 : vector<8x8xf32>
    %cst_25 = arith.constant dense<0.000000e+00> : vector<8xf32>
    %79 = vector.multi_reduction <add>, %78, %cst_25 [1] : vector<8x8xf32> to vector<8xf32>
    %80 = vector.shape_cast %79 : vector<8xf32> to vector<8x1xf32>
    %81 = tpu.reciprocal %80 {approx = true} : vector<8x1xf32> -> vector<8x1xf32>
    %82 = vector.broadcast %81 : vector<8x1xf32> to vector<8x8xf32>
    %83 = arith.mulf %78, %82 : vector<8x8xf32>
    %cst_26 = arith.constant dense<0.000000e+00> : vector<8x32xf32>
    %84 = tpu.matmul %83, %72, %cst_26 {dimension_numbers = #tpu.dot_dimension_numbers<[1], [0], [0], [1], [0, 0, 1, 1], [], []>} : vector<8x8xf32>, vector<8x32xf32>, vector<8x32xf32> -> vector<8x32xf32>
    %85 = tpu.concatenate %39, %54, %69, %84 in 1 : vector<8x32xf32>, vector<8x32xf32>, vector<8x32xf32>, vector<8x32xf32> -> vector<8x128xf32>
    %86 = vector.extract_strided_slice %22 {offsets = [8, 0], sizes = [8, 32], strides = [1, 1]} : vector<16x128xf32> to vector<8x32xf32>
    %87 = vector.extract_strided_slice %23 {offsets = [8, 0], sizes = [8, 32], strides = [1, 1]} : vector<16x128xf32> to vector<8x32xf32>
    %88 = vector.extract_strided_slice %24 {offsets = [8, 0], sizes = [8, 32], strides = [1, 1]} : vector<16x128xf32> to vector<8x32xf32>
    %cst_27 = arith.constant dense<0.000000e+00> : vector<8x8xf32>
    %89 = tpu.matmul %86, %87, %cst_27 {dimension_numbers = #tpu.dot_dimension_numbers<[1], [1], [0], [0], [0, 0, 1, 0], [], []>} : vector<8x32xf32>, vector<8x32xf32>, vector<8x8xf32> -> vector<8x8xf32>
    %cst_28 = arith.constant dense<0xFF800000> : vector<8xf32>
    %90 = vector.multi_reduction <maximumf>, %89, %cst_28 [1] : vector<8x8xf32> to vector<8xf32>
    %91 = vector.shape_cast %90 : vector<8xf32> to vector<8x1xf32>
    %92 = vector.broadcast %91 : vector<8x1xf32> to vector<8x8xf32>
    %93 = arith.subf %89, %92 : vector<8x8xf32>
    %94 = math.exp %93 : vector<8x8xf32>
    %cst_29 = arith.constant dense<0.000000e+00> : vector<8xf32>
    %95 = vector.multi_reduction <add>, %94, %cst_29 [1] : vector<8x8xf32> to vector<8xf32>
    %96 = vector.shape_cast %95 : vector<8xf32> to vector<8x1xf32>
    %97 = tpu.reciprocal %96 {approx = true} : vector<8x1xf32> -> vector<8x1xf32>
    %98 = vector.broadcast %97 : vector<8x1xf32> to vector<8x8xf32>
    %99 = arith.mulf %94, %98 : vector<8x8xf32>
    %cst_30 = arith.constant dense<0.000000e+00> : vector<8x32xf32>
    %100 = tpu.matmul %99, %88, %cst_30 {dimension_numbers = #tpu.dot_dimension_numbers<[1], [0], [0], [1], [0, 0, 1, 1], [], []>} : vector<8x8xf32>, vector<8x32xf32>, vector<8x32xf32> -> vector<8x32xf32>
    %101 = vector.extract_strided_slice %22 {offsets = [8, 32], sizes = [8, 32], strides = [1, 1]} : vector<16x128xf32> to vector<8x32xf32>
    %102 = vector.extract_strided_slice %23 {offsets = [8, 32], sizes = [8, 32], strides = [1, 1]} : vector<16x128xf32> to vector<8x32xf32>
    %103 = vector.extract_strided_slice %24 {offsets = [8, 32], sizes = [8, 32], strides = [1, 1]} : vector<16x128xf32> to vector<8x32xf32>
    %cst_31 = arith.constant dense<0.000000e+00> : vector<8x8xf32>
    %104 = tpu.matmul %101, %102, %cst_31 {dimension_numbers = #tpu.dot_dimension_numbers<[1], [1], [0], [0], [0, 0, 1, 0], [], []>} : vector<8x32xf32>, vector<8x32xf32>, vector<8x8xf32> -> vector<8x8xf32>
    %cst_32 = arith.constant dense<0xFF800000> : vector<8xf32>
    %105 = vector.multi_reduction <maximumf>, %104, %cst_32 [1] : vector<8x8xf32> to vector<8xf32>
    %106 = vector.shape_cast %105 : vector<8xf32> to vector<8x1xf32>
    %107 = vector.broadcast %106 : vector<8x1xf32> to vector<8x8xf32>
    %108 = arith.subf %104, %107 : vector<8x8xf32>
    %109 = math.exp %108 : vector<8x8xf32>
    %cst_33 = arith.constant dense<0.000000e+00> : vector<8xf32>
    %110 = vector.multi_reduction <add>, %109, %cst_33 [1] : vector<8x8xf32> to vector<8xf32>
    %111 = vector.shape_cast %110 : vector<8xf32> to vector<8x1xf32>
    %112 = tpu.reciprocal %111 {approx = true} : vector<8x1xf32> -> vector<8x1xf32>
    %113 = vector.broadcast %112 : vector<8x1xf32> to vector<8x8xf32>
    %114 = arith.mulf %109, %113 : vector<8x8xf32>
    %cst_34 = arith.constant dense<0.000000e+00> : vector<8x32xf32>
    %115 = tpu.matmul %114, %103, %cst_34 {dimension_numbers = #tpu.dot_dimension_numbers<[1], [0], [0], [1], [0, 0, 1, 1], [], []>} : vector<8x8xf32>, vector<8x32xf32>, vector<8x32xf32> -> vector<8x32xf32>
    %116 = vector.extract_strided_slice %22 {offsets = [8, 64], sizes = [8, 32], strides = [1, 1]} : vector<16x128xf32> to vector<8x32xf32>
    %117 = vector.extract_strided_slice %23 {offsets = [8, 64], sizes = [8, 32], strides = [1, 1]} : vector<16x128xf32> to vector<8x32xf32>
    %118 = vector.extract_strided_slice %24 {offsets = [8, 64], sizes = [8, 32], strides = [1, 1]} : vector<16x128xf32> to vector<8x32xf32>
    %cst_35 = arith.constant dense<0.000000e+00> : vector<8x8xf32>
    %119 = tpu.matmul %116, %117, %cst_35 {dimension_numbers = #tpu.dot_dimension_numbers<[1], [1], [0], [0], [0, 0, 1, 0], [], []>} : vector<8x32xf32>, vector<8x32xf32>, vector<8x8xf32> -> vector<8x8xf32>
    %cst_36 = arith.constant dense<0xFF800000> : vector<8xf32>
    %120 = vector.multi_reduction <maximumf>, %119, %cst_36 [1] : vector<8x8xf32> to vector<8xf32>
    %121 = vector.shape_cast %120 : vector<8xf32> to vector<8x1xf32>
    %122 = vector.broadcast %121 : vector<8x1xf32> to vector<8x8xf32>
    %123 = arith.subf %119, %122 : vector<8x8xf32>
    %124 = math.exp %123 : vector<8x8xf32>
    %cst_37 = arith.constant dense<0.000000e+00> : vector<8xf32>
    %125 = vector.multi_reduction <add>, %124, %cst_37 [1] : vector<8x8xf32> to vector<8xf32>
    %126 = vector.shape_cast %125 : vector<8xf32> to vector<8x1xf32>
    %127 = tpu.reciprocal %126 {approx = true} : vector<8x1xf32> -> vector<8x1xf32>
    %128 = vector.broadcast %127 : vector<8x1xf32> to vector<8x8xf32>
    %129 = arith.mulf %124, %128 : vector<8x8xf32>
    %cst_38 = arith.constant dense<0.000000e+00> : vector<8x32xf32>
    %130 = tpu.matmul %129, %118, %cst_38 {dimension_numbers = #tpu.dot_dimension_numbers<[1], [0], [0], [1], [0, 0, 1, 1], [], []>} : vector<8x8xf32>, vector<8x32xf32>, vector<8x32xf32> -> vector<8x32xf32>
    %131 = vector.extract_strided_slice %22 {offsets = [8, 96], sizes = [8, 32], strides = [1, 1]} : vector<16x128xf32> to vector<8x32xf32>
    %132 = vector.extract_strided_slice %23 {offsets = [8, 96], sizes = [8, 32], strides = [1, 1]} : vector<16x128xf32> to vector<8x32xf32>
    %133 = vector.extract_strided_slice %24 {offsets = [8, 96], sizes = [8, 32], strides = [1, 1]} : vector<16x128xf32> to vector<8x32xf32>
    %cst_39 = arith.constant dense<0.000000e+00> : vector<8x8xf32>
    %134 = tpu.matmul %131, %132, %cst_39 {dimension_numbers = #tpu.dot_dimension_numbers<[1], [1], [0], [0], [0, 0, 1, 0], [], []>} : vector<8x32xf32>, vector<8x32xf32>, vector<8x8xf32> -> vector<8x8xf32>
    %cst_40 = arith.constant dense<0xFF800000> : vector<8xf32>
    %135 = vector.multi_reduction <maximumf>, %134, %cst_40 [1] : vector<8x8xf32> to vector<8xf32>
    %136 = vector.shape_cast %135 : vector<8xf32> to vector<8x1xf32>
    %137 = vector.broadcast %136 : vector<8x1xf32> to vector<8x8xf32>
    %138 = arith.subf %134, %137 : vector<8x8xf32>
    %139 = math.exp %138 : vector<8x8xf32>
    %cst_41 = arith.constant dense<0.000000e+00> : vector<8xf32>
    %140 = vector.multi_reduction <add>, %139, %cst_41 [1] : vector<8x8xf32> to vector<8xf32>
    %141 = vector.shape_cast %140 : vector<8xf32> to vector<8x1xf32>
    %142 = tpu.reciprocal %141 {approx = true} : vector<8x1xf32> -> vector<8x1xf32>
    %143 = vector.broadcast %142 : vector<8x1xf32> to vector<8x8xf32>
    %144 = arith.mulf %139, %143 : vector<8x8xf32>
    %cst_42 = arith.constant dense<0.000000e+00> : vector<8x32xf32>
    %145 = tpu.matmul %144, %133, %cst_42 {dimension_numbers = #tpu.dot_dimension_numbers<[1], [0], [0], [1], [0, 0, 1, 1], [], []>} : vector<8x8xf32>, vector<8x32xf32>, vector<8x32xf32> -> vector<8x32xf32>
    %146 = tpu.concatenate %100, %115, %130, %145 in 1 : vector<8x32xf32>, vector<8x32xf32>, vector<8x32xf32>, vector<8x32xf32> -> vector<8x128xf32>
    %147 = tpu.concatenate %85, %146 in 0 : vector<8x128xf32>, vector<8x128xf32> -> vector<16x128xf32>
    %148 = arith.truncf %147 : vector<16x128xf32> to vector<16x128xbf16>
    %c0_43 = arith.constant 0 : index
    %c0_44 = arith.constant 0 : index
    %c0_45 = arith.constant 0 : index
    %149 = vector.load %arg4[%c0_43, %c0_44, %c0_45] : memref<1x128x128xbf16, #tpu.memory_space<vmem>>, vector<1x128x128xbf16>
    %150 = vector.shape_cast %149 : vector<1x128x128xbf16> to vector<128x128xbf16>
    %cst_46 = arith.constant dense<0.000000e+00> : vector<16x128xf32>
    %151 = tpu.matmul %148, %150, %cst_46 {dimension_numbers = #tpu.dot_dimension_numbers<[1], [0], [0], [1], [0, 0, 1, 1], [], []>} : vector<16x128xbf16>, vector<128x128xbf16>, vector<16x128xf32> -> vector<16x128xf32>
    %152 = arith.addf %3, %151 : vector<16x128xf32>
    %c0_47 = arith.constant 0 : index
    %c0_48 = arith.constant 0 : index
    %c0_49 = arith.constant 0 : index
    %153 = vector.load %arg5[%c0_47, %c0_48, %c0_49] : memref<1x1x128xf32, #tpu.memory_space<vmem>>, vector<1x1x128xf32>
    %154 = vector.shape_cast %153 : vector<1x1x128xf32> to vector<1x128xf32>
    %155 = arith.mulf %152, %152 : vector<16x128xf32>
    %cst_50 = arith.constant dense<0.000000e+00> : vector<16xf32>
    %156 = vector.multi_reduction <add>, %155, %cst_50 [1] : vector<16x128xf32> to vector<16xf32>
    %157 = vector.shape_cast %156 : vector<16xf32> to vector<16x1xf32>
    %cst_51 = arith.constant 1.280000e+02 : f32
    %158 = vector.broadcast %cst_51 : f32 to vector<16x1xf32>
    %159 = arith.divf %157, %158 : vector<16x1xf32>
    %cst_52 = arith.constant 9.99999997E-7 : f32
    %160 = vector.broadcast %cst_52 : f32 to vector<16x1xf32>
    %161 = arith.addf %159, %160 : vector<16x1xf32>
    %162 = math.rsqrt %161 : vector<16x1xf32>
    %163 = vector.broadcast %162 : vector<16x1xf32> to vector<16x128xf32>
    %164 = arith.mulf %152, %163 : vector<16x128xf32>
    %165 = vector.broadcast %154 : vector<1x128xf32> to vector<16x128xf32>
    %166 = arith.mulf %164, %165 : vector<16x128xf32>
    %167 = arith.truncf %166 : vector<16x128xf32> to vector<16x128xbf16>
    %c0_53 = arith.constant 0 : index
    %c0_54 = arith.constant 0 : index
    %c0_55 = arith.constant 0 : index
    %168 = vector.load %arg6[%c0_53, %c0_54, %c0_55] : memref<1x128x768xbf16, #tpu.memory_space<vmem>>, vector<1x128x768xbf16>
    %169 = vector.shape_cast %168 : vector<1x128x768xbf16> to vector<128x768xbf16>
    %cst_56 = arith.constant dense<0.000000e+00> : vector<16x768xf32>
    %170 = tpu.matmul %167, %169, %cst_56 {dimension_numbers = #tpu.dot_dimension_numbers<[1], [0], [0], [1], [0, 0, 1, 1], [], []>} : vector<16x128xbf16>, vector<128x768xbf16>, vector<16x768xf32> -> vector<16x768xf32>
    %171 = vector.extract_strided_slice %170 {offsets = [0, 0], sizes = [16, 384], strides = [1, 1]} : vector<16x768xf32> to vector<16x384xf32>
    %172 = vector.extract_strided_slice %170 {offsets = [0, 384], sizes = [16, 384], strides = [1, 1]} : vector<16x768xf32> to vector<16x384xf32>
    %173 = arith.negf %171 : vector<16x384xf32>
    %174 = math.exp %173 : vector<16x384xf32>
    %cst_57 = arith.constant 1.000000e+00 : f32
    %175 = vector.broadcast %cst_57 : f32 to vector<16x384xf32>
    %176 = arith.addf %175, %174 : vector<16x384xf32>
    %177 = arith.divf %175, %176 : vector<16x384xf32>
    %178 = arith.mulf %171, %177 : vector<16x384xf32>
    %179 = arith.mulf %178, %172 : vector<16x384xf32>
    %180 = arith.truncf %179 : vector<16x384xf32> to vector<16x384xbf16>
    %c0_58 = arith.constant 0 : index
    %c0_59 = arith.constant 0 : index
    %c0_60 = arith.constant 0 : index
    %181 = vector.load %arg7[%c0_58, %c0_59, %c0_60] : memref<1x384x128xbf16, #tpu.memory_space<vmem>>, vector<1x384x128xbf16>
    %182 = vector.shape_cast %181 : vector<1x384x128xbf16> to vector<384x128xbf16>
    %cst_61 = arith.constant dense<0.000000e+00> : vector<16x128xf32>
    %183 = tpu.matmul %180, %182, %cst_61 {dimension_numbers = #tpu.dot_dimension_numbers<[1], [0], [0], [1], [0, 0, 1, 1], [], []>} : vector<16x384xbf16>, vector<384x128xbf16>, vector<16x128xf32> -> vector<16x128xf32>
    %184 = arith.addf %152, %183 : vector<16x128xf32>
    %c0_62 = arith.constant 0 : index
    %c0_63 = arith.constant 0 : index
    %185 = vector.load %arg8[%c0_62, %c0_63] : memref<16x128xf32, #tpu.memory_space<vmem>>, vector<16x128xf32>
    tpu.vector_store %arg8[%c0_62, %c0_63], %184 {strides = array<i32>} : memref<16x128xf32, #tpu.memory_space<vmem>>, vector<16x128xf32>,
    return
  }
  func.func @transform_0(%arg0: i32) -> (i32, i32) {
    %c0_i32 = arith.constant 0 : i32
    %c0_i32_0 = arith.constant 0 : i32
    %c0_i32_1 = arith.constant 0 : i32
    return %c0_i32, %c0_i32_0 : i32, i32
  }
  func.func @transform_1(%arg0: i32) -> (i32, i32, i32) {
    %c0_i32 = arith.constant 0 : i32
    %c0_i32_0 = arith.constant 0 : i32
    %c0_i32_1 = arith.constant 0 : i32
    return %arg0, %c0_i32, %c0_i32_0 : i32, i32, i32
  }
  func.func @transform_2(%arg0: i32) -> (i32, i32, i32) {
    %c0_i32 = arith.constant 0 : i32
    %c0_i32_0 = arith.constant 0 : i32
    %c0_i32_1 = arith.constant 0 : i32
    return %arg0, %c0_i32, %c0_i32_0 : i32, i32, i32
  }
  func.func @transform_3(%arg0: i32) -> (i32, i32, i32) {
    %c0_i32 = arith.constant 0 : i32
    %c0_i32_0 = arith.constant 0 : i32
    %c0_i32_1 = arith.constant 0 : i32
    return %arg0, %c0_i32, %c0_i32_0 : i32, i32, i32
  }
  func.func @transform_4(%arg0: i32) -> (i32, i32, i32) {
    %c0_i32 = arith.constant 0 : i32
    %c0_i32_0 = arith.constant 0 : i32
    %c0_i32_1 = arith.constant 0 : i32
    return %arg0, %c0_i32, %c0_i32_0 : i32, i32, i32
  }
  func.func @transform_5(%arg0: i32) -> (i32, i32, i32) {
    %c0_i32 = arith.constant 0 : i32
    %c0_i32_0 = arith.constant 0 : i32
    %c0_i32_1 = arith.constant 0 : i32
    return %arg0, %c0_i32, %c0_i32_0 : i32, i32, i32
  }
  func.func @transform_6(%arg0: i32) -> (i32, i32, i32) {
    %c0_i32 = arith.constant 0 : i32
    %c0_i32_0 = arith.constant 0 : i32
    %c0_i32_1 = arith.constant 0 : i32
    return %arg0, %c0_i32, %c0_i32_0 : i32, i32, i32
  }
  func.func @transform_7(%arg0: i32) -> (i32, i32) {
    %c0_i32 = arith.constant 0 : i32
    %c0_i32_0 = arith.constant 0 : i32
    %c0_i32_1 = arith.constant 0 : i32
    return %c0_i32, %c0_i32_0 : i32, i32
  }
}

</mosaic_0001>

<llo_original>
// kernel: transformer_forward.3
$region0: #{transformer_forward.3}
  #allocation0 [shape = 'u32[]', space=smem, size = 0x4, offset = 0x4, fixed_abs, tag = 'smem constant byte address 0x4 - core index']
  #allocation1 [shape = 'u32[72,128]{1,0:T(1,128)}', space=vmem, size = 0x9000, scoped, tag = 'internal scratch']
  %s0 = inlined_call_operand.hbm [shape: f32[16,128], index: 0, kind: input, shape index: {}]
  %s1 = inlined_call_operand.vmem [shape: f32[2,1,128], index: 1, kind: input, shape index: {}]
  %s2 = inlined_call_operand.hbm [shape: bf16[2,128,384], index: 2, kind: input, shape index: {}]
  %s3 = inlined_call_operand.hbm [shape: bf16[2,128,128], index: 3, kind: input, shape index: {}]
  %s4 = inlined_call_operand.vmem [shape: f32[2,1,128], index: 4, kind: input, shape index: {}]
  %s5 = inlined_call_operand.hbm [shape: bf16[2,128,768], index: 5, kind: input, shape index: {}]
  %s6 = inlined_call_operand.hbm [shape: bf16[2,384,128], index: 6, kind: input, shape index: {}]
  %s7 = inlined_call_operand.hbm [shape: f32[16,128], index: 7, kind: output, shape index: {}]
  %s8 = sld [smem:[#allocation0]]
  $region85: #{transformer_forward.3} parent=0
    _
  %s10 = ssub.s32 1, %s8
  %s11 = scalar_select 0, %s10, %s8
  $region1: #{transformer_forward.3} parent=0
    #allocation2 [shape = 'u8[8192]{0}', space=vmem, size = 0x2000, scoped, tag = 'input window, operand 0, single buffered']
    #allocation3 [shape = 's32[2]{0}', space=sflag, size = 0x8, scoped, tag = 'scoped memory for transformer_forward.3']
    #allocation4 [shape = 's32[2]{0}', space=sflag, size = 0x8, scoped, tag = 'scoped memory for transformer_forward.3']
    #allocation5 [shape = 'u8[196608]{0}', space=vmem, size = 0x30000, scoped, tag = 'input window, operand 2']
    #allocation6 [shape = 's32[2]{0}', space=sflag, size = 0x8, scoped, tag = 'scoped memory for transformer_forward.3']
    #allocation7 [shape = 'u8[65536]{0}', space=vmem, size = 0x10000, scoped, tag = 'input window, operand 3']
    #allocation8 [shape = 'u8[393216]{0}', space=vmem, size = 0x60000, scoped, tag = 'input window, operand 5']
    #allocation9 [shape = 's32[2]{0}', space=sflag, size = 0x8, scoped, tag = 'scoped memory for transformer_forward.3']
    #allocation10 [shape = 'u8[196608]{0}', space=vmem, size = 0x30000, scoped, tag = 'input window, operand 6']
    #allocation11 [shape = 'u8[8192]{0}', space=vmem, size = 0x2000, scoped, tag = 'output window, operand 0, single buffered']
    %12 = vsyncpa [#allocation3], 0
    %13 = vsyncpa [#allocation6], 0
    %s14 = scalar_lea.sflag [#allocation6], 1
    %15 = vsyncpa %s14, 0
    %16 = vsyncpa [#allocation9], 0
    %s17 = scalar_lea.sflag [#allocation9], 1
    %18 = vsyncpa %s17, 0
    %19 = vsyncpa [#allocation4], 0
    loop: start=0, step=1, limit=4
    $region2: #{transformer_forward.3} parent=1 // loop_pre_header
      _
    $region3: #{transformer_forward.3} parent=1 // loop_header
      %s21 = sphi 0, %s25
      %p22 = scmp.ge.s32.totalorder %s21, 4
      %s29 = sphi 0, %s29
      %s31 = sphi 0, %s29
      %s32 = sphi 0, %s31
      %s46 = sphi 0, %s32
      %s52 = sphi 0, %s54
      %s55 = sphi 0, %s52
      %s56 = sphi 0, %s55
      %s72 = sphi 0, %s56
      %s78 = sphi 0, %s80
      %s81 = sphi 0, %s78
      %s82 = sphi 0, %s81
      %s98 = sphi 0, %s82
      %s104 = sphi 0, %s106
      %s107 = sphi 0, %s104
      %s108 = sphi 0, %s107
      %s124 = sphi 0, %s108
      %s130 = sphi 0, %s132
      %s133 = sphi 0, %s130
      %s134 = sphi 0, %s133
      %s150 = sphi 0, %s134
      %s156 = sphi 0, %s158
      %s159 = sphi 0, %s156
      %s160 = sphi 0, %s159
      %s176 = sphi 0, %s160
      %s182 = sphi 0, %s184
      %s185 = sphi 0, %s182
      %s186 = sphi 0, %s185
      %s202 = sphi 0, %s186
      %s206 = sphi 0, %s206
      %s208 = sphi 0, %s206
      %s209 = sphi 0, %s208
      %s223 = sphi 0, %s209
    $region4: #{transformer_forward.3} parent=1 // loop_header_branch
      %24 = sbr.rel (%p22) target = $region8
    $region5: #{transformer_forward.3} parent=1 // loop_body
      %s26 = ssub.s32 %s21, 1
      %s27 = ssub.s32 %s21, 2
      %s28 = sadd.s32 %s21, 1
      %s30 = sadd.s32 %s29, 1
      %p33 = scmp.eq.s32.totalorder %s21, 1
      %p34 = scmp.ne.s32.totalorder %s29, %s31
      %p35 = scmp.eq.s32.totalorder %s21, 0
      %p36 = por %p34, %p35
      %p37 = scmp.ne.s32.totalorder %s29, %s31
      %p38 = scmp.eq.s32.totalorder %s26, 1
      %p39 = por %p37, %p38
      %p40 = scmp.ne.s32.totalorder %s31, %s32
      %p41 = scmp.eq.s32.totalorder %s26, 0
      %p42 = por %p40, %p41
      %p43 = scmp.ne.s32.totalorder %s31, %s32
      %p44 = scmp.eq.s32.totalorder %s27, 1
      %p45 = por %p43, %p44
      %p47 = scmp.ne.s32.totalorder %s32, %s46
      %p48 = scmp.eq.s32.totalorder %s27, 0
      %p49 = por %p47, %p48
      %s50 = ssub.s32 %s21, %s28
      %p51 = scmp.eq.s32.totalorder %s50, 0
      %s53 = sadd.s32 %s52, 1
      %s54 = scalar_select %p51, %s52, %s53
      %p57 = pneg %p51
      %p58 = scmp.eq.s32.totalorder %s21, 1
      %p59 = por %p57, %p58
      %p60 = scmp.ne.s32.totalorder %s52, %s55
      %p61 = scmp.eq.s32.totalorder %s21, 0
      %p62 = por %p60, %p61
      %p63 = scmp.ne.s32.totalorder %s52, %s55
      %p64 = scmp.eq.s32.totalorder %s26, 1
      %p65 = por %p63, %p64
      %p66 = scmp.ne.s32.totalorder %s55, %s56
      %p67 = scmp.eq.s32.totalorder %s26, 0
      %p68 = por %p66, %p67
      %p69 = scmp.ne.s32.totalorder %s55, %s56
      %p70 = scmp.eq.s32.totalorder %s27, 1
      %p71 = por %p69, %p70
      %p73 = scmp.ne.s32.totalorder %s56, %s72
      %p74 = scmp.eq.s32.totalorder %s27, 0
      %p75 = por %p73, %p74
      %s76 = ssub.s32 %s21, %s28
      %p77 = scmp.eq.s32.totalorder %s76, 0
      %s79 = sadd.s32 %s78, 1
      %s80 = scalar_select %p77, %s78, %s79
      %p83 = pneg %p77
      %p84 = scmp.eq.s32.totalorder %s21, 1
      %p85 = por %p83, %p84
      %p86 = scmp.ne.s32.totalorder %s78, %s81
      %p87 = scmp.eq.s32.totalorder %s21, 0
      %p88 = por %p86, %p87
      %p89 = scmp.ne.s32.totalorder %s78, %s81
      %p90 = scmp.eq.s32.totalorder %s26, 1
      %p91 = por %p89, %p90
      %p92 = scmp.ne.s32.totalorder %s81, %s82
      %p93 = scmp.eq.s32.totalorder %s26, 0
      %p94 = por %p92, %p93
      %p95 = scmp.ne.s32.totalorder %s81, %s82
      %p96 = scmp.eq.s32.totalorder %s27, 1
      %p97 = por %p95, %p96
      %p99 = scmp.ne.s32.totalorder %s82, %s98
      %p100 = scmp.eq.s32.totalorder %s27, 0
      %p101 = por %p99, %p100
      %s102 = ssub.s32 %s21, %s28
      %p103 = scmp.eq.s32.totalorder %s102, 0
      %s105 = sadd.s32 %s104, 1
      %s106 = scalar_select %p103, %s104, %s105
      %p109 = pneg %p103
      %p110 = scmp.eq.s32.totalorder %s21, 1
      %p111 = por %p109, %p110
      %p112 = scmp.ne.s32.totalorder %s104, %s107
      %p113 = scmp.eq.s32.totalorder %s21, 0
      %p114 = por %p112, %p113
      %p115 = scmp.ne.s32.totalorder %s104, %s107
      %p116 = scmp.eq.s32.totalorder %s26, 1
      %p117 = por %p115, %p116
      %p118 = scmp.ne.s32.totalorder %s107, %s108
      %p119 = scmp.eq.s32.totalorder %s26, 0
      %p120 = por %p118, %p119
      %p121 = scmp.ne.s32.totalorder %s107, %s108
      %p122 = scmp.eq.s32.totalorder %s27, 1
      %p123 = por %p121, %p122
      %p125 = scmp.ne.s32.totalorder %s108, %s124
      %p126 = scmp.eq.s32.totalorder %s27, 0
      %p127 = por %p125, %p126
      %s128 = ssub.s32 %s21, %s28
      %p129 = scmp.eq.s32.totalorder %s128, 0
      %s131 = sadd.s32 %s130, 1
      %s132 = scalar_select %p129, %s130, %s131
      %p135 = pneg %p129
      %p136 = scmp.eq.s32.totalorder %s21, 1
      %p137 = por %p135, %p136
      %p138 = scmp.ne.s32.totalorder %s130, %s133
      %p139 = scmp.eq.s32.totalorder %s21, 0
      %p140 = por %p138, %p139
      %p141 = scmp.ne.s32.totalorder %s130, %s133
      %p142 = scmp.eq.s32.totalorder %s26, 1
      %p143 = por %p141, %p142
      %p144 = scmp.ne.s32.totalorder %s133, %s134
      %p145 = scmp.eq.s32.totalorder %s26, 0
      %p146 = por %p144, %p145
      %p147 = scmp.ne.s32.totalorder %s133, %s134
      %p148 = scmp.eq.s32.totalorder %s27, 1
      %p149 = por %p147, %p148
      %p151 = scmp.ne.s32.totalorder %s134, %s150
      %p152 = scmp.eq.s32.totalorder %s27, 0
      %p153 = por %p151, %p152
      %s154 = ssub.s32 %s21, %s28
      %p155 = scmp.eq.s32.totalorder %s154, 0
      %s157 = sadd.s32 %s156, 1
      %s158 = scalar_select %p155, %s156, %s157
      %p161 = pneg %p155
      %p162 = scmp.eq.s32.totalorder %s21, 1
      %p163 = por %p161, %p162
      %p164 = scmp.ne.s32.totalorder %s156, %s159
      %p165 = scmp.eq.s32.totalorder %s21, 0
      %p166 = por %p164, %p165
      %p167 = scmp.ne.s32.totalorder %s156, %s159
      %p168 = scmp.eq.s32.totalorder %s26, 1
      %p169 = por %p167, %p168
      %p170 = scmp.ne.s32.totalorder %s159, %s160
      %p171 = scmp.eq.s32.totalorder %s26, 0
      %p172 = por %p170, %p171
      %p173 = scmp.ne.s32.totalorder %s159, %s160
      %p174 = scmp.eq.s32.totalorder %s27, 1
      %p175 = por %p173, %p174
      %p177 = scmp.ne.s32.totalorder %s160, %s176
      %p178 = scmp.eq.s32.totalorder %s27, 0
      %p179 = por %p177, %p178
      %s180 = ssub.s32 %s21, %s28
      %p181 = scmp.eq.s32.totalorder %s180, 0
      %s183 = sadd.s32 %s182, 1
      %s184 = scalar_select %p181, %s182, %s183
      %p187 = pneg %p181
      %p188 = scmp.eq.s32.totalorder %s21, 1
      %p189 = por %p187, %p188
      %p190 = scmp.ne.s32.totalorder %s182, %s185
      %p191 = scmp.eq.s32.totalorder %s21, 0
      %p192 = por %p190, %p191
      %p193 = scmp.ne.s32.totalorder %s182, %s185
      %p194 = scmp.eq.s32.totalorder %s26, 1
      %p195 = por %p193, %p194
      %p196 = scmp.ne.s32.totalorder %s185, %s186
      %p197 = scmp.eq.s32.totalorder %s26, 0
      %p198 = por %p196, %p197
      %p199 = scmp.ne.s32.totalorder %s185, %s186
      %p200 = scmp.eq.s32.totalorder %s27, 1
      %p201 = por %p199, %p200
      %p203 = scmp.ne.s32.totalorder %s186, %s202
      %p204 = scmp.eq.s32.totalorder %s27, 0
      %p205 = por %p203, %p204
      %s207 = sadd.s32 %s206, 1
      %p210 = scmp.eq.s32.totalorder %s21, 1
      %p211 = scmp.ne.s32.totalorder %s206, %s208
      %p212 = scmp.eq.s32.totalorder %s21, 0
      %p213 = por %p211, %p212
      %p214 = scmp.ne.s32.totalorder %s206, %s208
      %p215 = scmp.eq.s32.totalorder %s26, 1
      %p216 = por %p214, %p215
      %p217 = scmp.ne.s32.totalorder %s208, %s209
      %p218 = scmp.eq.s32.totalorder %s26, 0
      %p219 = por %p217, %p218
      %p220 = scmp.ne.s32.totalorder %s208, %s209
      %p221 = scmp.eq.s32.totalorder %s27, 1
      %p222 = por %p220, %p221
      %p224 = scmp.ne.s32.totalorder %s209, %s223
      %p225 = scmp.eq.s32.totalorder %s27, 0
      %p226 = por %p224, %p225
      %p227 = scmp.le.s32.totalorder 1, %s21
      %p228 = scmp.lt.s32.totalorder %s21, 3
      %p229 = pnand %p227, %p228
      %p230 = pneg %p229
      // Predicated region
      $region9: #{transformer_forward.3} parent=5 // pred_check
        _
      $region10: #{transformer_forward.3} parent=5 // pred_check_branch
        %232 = sbr.rel (%p229) target = $region12
      $region11: #{transformer_forward.3} parent=5 // pred_region
        %s233 = ssub.s32 %s21, 1
        // Predicated region
        $region13: #{transformer_forward.3} parent=11 // pred_check
          %p234 = pneg %p42
        $region14: #{transformer_forward.3} parent=11 // pred_check_branch
          %236 = sbr.rel (%p234) target = $region16
        $region15: #{transformer_forward.3} parent=11 // pred_region
          %238 = vsyncadd [#allocation3], 0
          %s239 = sshll.u32 %s0, 4
          %s240 = int_to_ptr.hbm [resolvable:$true] %s239
          %s241 = sshll.u32 [#allocation2], 4
          %s242 = int_to_ptr.vmem [resolvable:$true] %s241
          %247 = dma.hbm_to_vmem [thread:$0]  %s240, 256, %s242, [#allocation3], 128, 128, 8
        $region16: #{transformer_forward.3} parent=11 // pred_fallthru
          _
      $region12: #{transformer_forward.3} parent=5 // pred_fallthru
        _
      %p248 = scmp.lt.s32.totalorder %s21, 2
      // Predicated region
      $region17: #{transformer_forward.3} parent=5 // pred_check
        %p249 = pneg %p248
      $region18: #{transformer_forward.3} parent=5 // pred_check_branch
        %251 = sbr.rel (%p249) target = $region20
      $region19: #{transformer_forward.3} parent=5 // pred_region
        // Predicated region
        $region21: #{transformer_forward.3} parent=19 // pred_check
          %p252 = pneg %p62
        $region22: #{transformer_forward.3} parent=19 // pred_check_branch
          %254 = sbr.rel (%p252) target = $region24
        $region23: #{transformer_forward.3} parent=19 // pred_region
          %p255 = scmp.lt.s32.totalorder %s21, 1
          %s256 = scalar_select %p255, %s21, 1
          %s257 = scalar_lea.vmem %s1, %s256
        $region24: #{transformer_forward.3} parent=19 // pred_fallthru
          _
        // Predicated region
        $region25: #{transformer_forward.3} parent=19 // pred_check
          %p258 = pneg %p88
        $region26: #{transformer_forward.3} parent=19 // pred_check_branch
          %260 = sbr.rel (%p258) target = $region28
        $region27: #{transformer_forward.3} parent=19 // pred_region
          %s261 = sand.u32 %s21, 1
          %s262 = scalar_lea.sflag [#allocation6], %s261
          %s263 = sand.u32 %s78, 1
          %s264 = smul.addr %s263, 192
          %s265 = scalar_lea.vmem [#allocation5], %s264
          %267 = vsyncadd %s262, 0
          %s268 = smul.addr %s21, 48
          %s269 = smul.addr %s268, 4
          %s270 = scalar_lea.hbm %s2, %s269
          %s271 = sshll.u32 %s270, 4
          %s272 = int_to_ptr.hbm [resolvable:$true] %s271
          %s273 = sshll.u32 %s265, 4
          %s274 = int_to_ptr.vmem [resolvable:$true] %s273
          %279 = dma.hbm_to_vmem [thread:$0]  %s272, 3072, %s274, %s262, 192, 192, 12
        $region28: #{transformer_forward.3} parent=19 // pred_fallthru
          _
        // Predicated region
        $region29: #{transformer_forward.3} parent=19 // pred_check
          %p280 = pneg %p114
        $region30: #{transformer_forward.3} parent=19 // pred_check_branch
          %282 = sbr.rel (%p280) target = $region32
        $region31: #{transformer_forward.3} parent=19 // pred_region
          %s283 = sand.u32 %s21, 1
          %s284 = scalar_lea.sflag [#allocation6], %s283
          %s285 = sand.u32 %s104, 1
          %s286 = smul.addr %s285, 64
          %s287 = scalar_lea.vmem [#allocation7], %s286
          %289 = vsyncadd %s284, 0
          %s290 = smul.addr %s21, 16
          %s291 = smul.addr %s290, 4
          %s292 = scalar_lea.hbm %s3, %s291
          %s293 = sshll.u32 %s292, 4
          %s294 = int_to_ptr.hbm [resolvable:$true] %s293
          %s295 = sshll.u32 %s287, 4
          %s296 = int_to_ptr.vmem [resolvable:$true] %s295
          %301 = dma.hbm_to_vmem [thread:$0]  %s294, 1024, %s296, %s284, 64, 64, 4
        $region32: #{transformer_forward.3} parent=19 // pred_fallthru
          _
        // Predicated region
        $region33: #{transformer_forward.3} parent=19 // pred_check
          %p302 = pneg %p140
        $region34: #{transformer_forward.3} parent=19 // pred_check_branch
          %304 = sbr.rel (%p302) target = $region36
        $region35: #{transformer_forward.3} parent=19 // pred_region
          %p305 = scmp.lt.s32.totalorder %s21, 1
          %s306 = scalar_select %p305, %s21, 1
          %s307 = scalar_lea.vmem %s4, %s306
        $region36: #{transformer_forward.3} parent=19 // pred_fallthru
          _
        // Predicated region
        $region37: #{transformer_forward.3} parent=19 // pred_check
          %p308 = pneg %p166
        $region38: #{transformer_forward.3} parent=19 // pred_check_branch
          %310 = sbr.rel (%p308) target = $region40
        $region39: #{transformer_forward.3} parent=19 // pred_region
          %s311 = sand.u32 %s21, 1
          %s312 = scalar_lea.sflag [#allocation9], %s311
          %s313 = sand.u32 %s156, 1
          %s314 = smul.addr %s313, 384
          %s315 = scalar_lea.vmem [#allocation8], %s314
          %317 = vsyncadd %s312, 0
          %s318 = smul.addr %s21, 96
          %s319 = smul.addr %s318, 4
          %s320 = scalar_lea.hbm %s5, %s319
          %s321 = sshll.u32 %s320, 4
          %s322 = int_to_ptr.hbm [resolvable:$true] %s321
          %s323 = sshll.u32 %s315, 4
          %s324 = int_to_ptr.vmem [resolvable:$true] %s323
          %329 = dma.hbm_to_vmem [thread:$0]  %s322, 6144, %s324, %s312, 384, 384, 24
        $region40: #{transformer_forward.3} parent=19 // pred_fallthru
          _
        // Predicated region
        $region41: #{transformer_forward.3} parent=19 // pred_check
          %p330 = pneg %p192
        $region42: #{transformer_forward.3} parent=19 // pred_check_branch
          %332 = sbr.rel (%p330) target = $region44
        $region43: #{transformer_forward.3} parent=19 // pred_region
          %s333 = sand.u32 %s21, 1
          %s334 = scalar_lea.sflag [#allocation9], %s333
          %s335 = sand.u32 %s182, 1
          %s336 = smul.addr %s335, 192
          %s337 = scalar_lea.vmem [#allocation10], %s336
          %339 = vsyncadd %s334, 0
          %s340 = smul.addr %s21, 48
          %s341 = smul.addr %s340, 4
          %s342 = scalar_lea.hbm %s6, %s341
          %s343 = sshll.u32 %s342, 4
          %s344 = int_to_ptr.hbm [resolvable:$true] %s343
          %s345 = sshll.u32 %s337, 4
          %s346 = int_to_ptr.vmem [resolvable:$true] %s345
          %351 = dma.hbm_to_vmem [thread:$0]  %s344, 3072, %s346, %s334, 64, 64, 4
        $region44: #{transformer_forward.3} parent=19 // pred_fallthru
          _
      $region20: #{transformer_forward.3} parent=5 // pred_fallthru
        _
      %p352 = scmp.le.s32.totalorder 1, %s21
      %p353 = scmp.lt.s32.totalorder %s21, 3
      %p354 = pnand %p352, %p353
      %p355 = pneg %p354
      // Predicated region
      $region45: #{transformer_forward.3} parent=5 // pred_check
        _
      $region46: #{transformer_forward.3} parent=5 // pred_check_branch
        %357 = sbr.rel (%p354) target = $region48
      $region47: #{transformer_forward.3} parent=5 // pred_region
        %s358 = ssub.s32 %s21, 1
        // Predicated region
        $region49: #{transformer_forward.3} parent=47 // pred_check
          %p359 = pneg %p42
        $region50: #{transformer_forward.3} parent=47 // pred_check_branch
          %361 = sbr.rel (%p359) target = $region52
        $region51: #{transformer_forward.3} parent=47 // pred_region
          %363 = dma.done [#allocation3], 256
        $region52: #{transformer_forward.3} parent=47 // pred_fallthru
          _
        %s364 = sand.u32 %s26, 1
        %s365 = scalar_lea.sflag [#allocation6], %s364
        %s366 = sand.u32 %s81, 1
        %s367 = smul.addr %s366, 192
        %s368 = scalar_lea.vmem [#allocation5], %s367
        // Predicated region
        $region53: #{transformer_forward.3} parent=47 // pred_check
          %p369 = pneg %p94
        $region54: #{transformer_forward.3} parent=47 // pred_check_branch
          %371 = sbr.rel (%p369) target = $region56
        $region55: #{transformer_forward.3} parent=47 // pred_region
          %373 = dma.done %s365, 3072
        $region56: #{transformer_forward.3} parent=47 // pred_fallthru
          _
        %s374 = sand.u32 %s26, 1
        %s375 = scalar_lea.sflag [#allocation6], %s374
        %s376 = sand.u32 %s107, 1
        %s377 = smul.addr %s376, 64
        %s378 = scalar_lea.vmem [#allocation7], %s377
        // Predicated region
        $region57: #{transformer_forward.3} parent=47 // pred_check
          %p379 = pneg %p120
        $region58: #{transformer_forward.3} parent=47 // pred_check_branch
          %381 = sbr.rel (%p379) target = $region60
        $region59: #{transformer_forward.3} parent=47 // pred_region
          %383 = dma.done %s375, 1024
        $region60: #{transformer_forward.3} parent=47 // pred_fallthru
          _
        %s384 = sand.u32 %s26, 1
        %s385 = scalar_lea.sflag [#allocation9], %s384
        %s386 = sand.u32 %s159, 1
        %s387 = smul.addr %s386, 384
        %s388 = scalar_lea.vmem [#allocation8], %s387
        // Predicated region
        $region61: #{transformer_forward.3} parent=47 // pred_check
          %p389 = pneg %p172
        $region62: #{transformer_forward.3} parent=47 // pred_check_branch
          %391 = sbr.rel (%p389) target = $region64
        $region63: #{transformer_forward.3} parent=47 // pred_region
          %393 = dma.done %s385, 6144
        $region64: #{transformer_forward.3} parent=47 // pred_fallthru
          _
        %s394 = sand.u32 %s26, 1
        %s395 = scalar_lea.sflag [#allocation9], %s394
        %s396 = sand.u32 %s185, 1
        %s397 = smul.addr %s396, 192
        %s398 = scalar_lea.vmem [#allocation10], %s397
        // Predicated region
        $region65: #{transformer_forward.3} parent=47 // pred_check
          %p399 = pneg %p198
        $region66: #{transformer_forward.3} parent=47 // pred_check_branch
          %401 = sbr.rel (%p399) target = $region68
        $region67: #{transformer_forward.3} parent=47 // pred_region
          %403 = dma.done %s395, 3072
        $region68: #{transformer_forward.3} parent=47 // pred_fallthru
          _
        %p404 = pneg %p42
        %p405 = pneg %p39
        %p406 = scmp.lt.s32.totalorder %s26, 1
        %s407 = scalar_select %p406, %s26, 1
        %s408 = scalar_lea.vmem %s1, %s407
        %p409 = pneg %p68
        %p410 = pneg %p65
        %s411 = sand.u32 %s26, 1
        %s412 = scalar_lea.sflag [#allocation6], %s411
        %s413 = sand.u32 %s81, 1
        %s414 = smul.addr %s413, 192
        %s415 = scalar_lea.vmem [#allocation5], %s414
        %p416 = pneg %p94
        %p417 = pneg %p91
        %s418 = sand.u32 %s26, 1
        %s419 = scalar_lea.sflag [#allocation6], %s418
        %s420 = sand.u32 %s107, 1
        %s421 = smul.addr %s420, 64
        %s422 = scalar_lea.vmem [#allocation7], %s421
        %p423 = pneg %p120
        %p424 = pneg %p117
        %p425 = scmp.lt.s32.totalorder %s26, 1
        %s426 = scalar_select %p425, %s26, 1
        %s427 = scalar_lea.vmem %s4, %s426
        %p428 = pneg %p146
        %p429 = pneg %p143
        %s430 = sand.u32 %s26, 1
        %s431 = scalar_lea.sflag [#allocation9], %s430
        %s432 = sand.u32 %s159, 1
        %s433 = smul.addr %s432, 384
        %s434 = scalar_lea.vmem [#allocation8], %s433
        %p435 = pneg %p172
        %p436 = pneg %p169
        %s437 = sand.u32 %s26, 1
        %s438 = scalar_lea.sflag [#allocation9], %s437
        %s439 = sand.u32 %s185, 1
        %s440 = smul.addr %s439, 192
        %s441 = scalar_lea.vmem [#allocation10], %s440
        %p442 = pneg %p198
        %p443 = pneg %p195
        %p444 = pneg %p219
        %p445 = pneg %p216
        %p446 = scmp.lt.s32.totalorder %s26, 1
        %s447 = scalar_select %p446, %s26, 1
        %s448 = scalar_lea.vmem %s1, %s447
        %p449 = scmp.lt.s32.totalorder %s26, 1
        %s450 = scalar_select %p449, %s26, 1
        %s451 = scalar_lea.vmem %s4, %s450
        %p452 = scmp.eq.s32.totalorder %s26, 0
        // Predicated region
        $region69: #{transformer_forward.3} parent=47 // pred_check
          %p453 = pneg %p452
        $region70: #{transformer_forward.3} parent=47 // pred_check_branch
          %455 = sbr.rel (%p453) target = $region72
        $region71: #{transformer_forward.3} parent=47 // pred_region
          %v456 = vld [vmem:[#allocation2] sm:$0xff]
          %v457 = vld [vmem:[#allocation2 + $0x8] sm:$0xff]
          %458 = vst [vmem:[#allocation11] sm:$0xff] %v456
          %459 = vst [vmem:[#allocation11 + $0x8] sm:$0xff] %v457
        $region72: #{transformer_forward.3} parent=47 // pred_fallthru
          _
        %v460 = vld [vmem:[#allocation11] sm:$0xff]
        %v461 = vld [vmem:[#allocation11 + $0x8] sm:$0xff]
        %v462 = vld [vmem:[%s448] sm:$0x1]
        %v463 = vmul.f32 %v460, %v460
        %v464 = vmul.f32 %v461, %v461
        %465 = vadd.xlane.f32.xlu0 %v463
        %v466 = vpop.xlane.xlu0 %465
        %467 = vadd.xlane.f32.xlu0 %v464
        %v468 = vpop.xlane.xlu0 %467
        %v469 = vrcp.pop 128.0
        %v470 = vmul.f32 128.0, %v469
        %v471 = vsub.f32 1.0, %v470
        %v472 = vmul.f32 %v469, %v471
        %v473 = vadd.f32 %v469, %v472
        %vm474 = vweird.f32 %v469
        %v475 = vsel %vm474, %v469, %v473
        %v476 = vmul.f32 %v466, %v475
        %v477 = vmul.f32 %v468, %v475
        %v478 = vadd.f32 %v476, 1e-06
        %v479 = vadd.f32 %v477, 1e-06
        %v480 = vrsqrt.pop %v478
        %v481 = vmul.f32 %v480, %v478
        %v482 = vmul.f32 %v481, %v480
        %v483 = vmul.f32 0.5, %v482
        %v484 = vsub.f32 1.5, %v483
        %v485 = vmul.f32 %v480, %v484
        %vm486 = vweird.f32 %v478
        %vm487 = vweird.f32 %v480
        %vm488 = vmor %vm486, %vm487
        %v489 = vsel %vm488, %v480, %v485
        %v490 = vrsqrt.pop %v479
        %v491 = vmul.f32 %v490, %v479
        %v492 = vmul.f32 %v491, %v490
        %v493 = vmul.f32 0.5, %v492
        %v494 = vsub.f32 1.5, %v493
        %v495 = vmul.f32 %v490, %v494
        %vm496 = vweird.f32 %v479
        %vm497 = vweird.f32 %v490
        %vm498 = vmor %vm496, %vm497
        %v499 = vsel %vm498, %v490, %v495
        %v500 = vmul.f32 %v460, %v489
        %v501 = vmul.f32 %v461, %v499
        %v503 = vperm.slane %v462, 0
        %v505 = vmul.f32 %v500, %v503
        %v506 = vmul.f32 %v501, %v503
        %v507 = vpack.c.bf16 %v506, %v505
        %v508 = vld [vmem:[%s368] sm:$0xff]
        %v509 = vld [vmem:[%s368 + $0x8] sm:$0xf]
        %v510 = vld [vmem:[%s368 + $0xc] sm:$0xff]
        %v511 = vld [vmem:[%s368 + $0x14] sm:$0xf]
        %v512 = vld [vmem:[%s368 + $0x18] sm:$0xff]
        %v513 = vld [vmem:[%s368 + $0x20] sm:$0xf]
        %v514 = vld [vmem:[%s368 + $0x24] sm:$0xff]
        %v515 = vld [vmem:[%s368 + $0x2c] sm:$0xf]
        %v516 = vld [vmem:[%s368 + $0x30] sm:$0xff]
        %v517 = vld [vmem:[%s368 + $0x38] sm:$0xf]
        %v518 = vld [vmem:[%s368 + $0x3c] sm:$0xff]
        %v519 = vld [vmem:[%s368 + $0x44] sm:$0xf]
        %v520 = vld [vmem:[%s368 + $0x48] sm:$0xff]
        %v521 = vld [vmem:[%s368 + $0x50] sm:$0xf]
        %v522 = vld [vmem:[%s368 + $0x54] sm:$0xff]
        %v523 = vld [vmem:[%s368 + $0x5c] sm:$0xf]
        %v524 = vld [vmem:[%s368 + $0x60] sm:$0xff]
        %v525 = vld [vmem:[%s368 + $0x68] sm:$0xf]
        %v526 = vld [vmem:[%s368 + $0x6c] sm:$0xff]
        %v527 = vld [vmem:[%s368 + $0x74] sm:$0xf]
        %v528 = vld [vmem:[%s368 + $0x78] sm:$0xff]
        %v529 = vld [vmem:[%s368 + $0x80] sm:$0xf]
        %v530 = vld [vmem:[%s368 + $0x84] sm:$0xff]
        %v531 = vld [vmem:[%s368 + $0x8c] sm:$0xf]
        %v532 = vld [vmem:[%s368 + $0x90] sm:$0xff]
        %v533 = vld [vmem:[%s368 + $0x98] sm:$0xf]
        %v534 = vld [vmem:[%s368 + $0x9c] sm:$0xff]
        %v535 = vld [vmem:[%s368 + $0xa4] sm:$0xf]
        %v536 = vld [vmem:[%s368 + $0xa8] sm:$0xff]
        %v537 = vld [vmem:[%s368 + $0xb0] sm:$0xf]
        %v538 = vld [vmem:[%s368 + $0xb4] sm:$0xff]
        %v539 = vld [vmem:[%s368 + $0xbc] sm:$0xf]
        %v572 = vunpack.c.l.b16 %v508
        %v573 = vunpack.c.h.b16 %v508
        %v574 = vunpack.c.l.b16 %v509
        %v575 = vunpack.c.l.b16 %v510
        %v576 = vunpack.c.h.b16 %v510
        %v577 = vunpack.c.l.b16 %v511
        %v578 = vunpack.c.l.b16 %v512
        %v579 = vunpack.c.h.b16 %v512
        %v580 = vunpack.c.l.b16 %v513
        %v581 = vunpack.c.l.b16 %v514
        %v582 = vunpack.c.h.b16 %v514
        %v583 = vunpack.c.l.b16 %v515
        %v584 = vunpack.c.l.b16 %v516
        %v585 = vunpack.c.h.b16 %v516
        %v586 = vunpack.c.l.b16 %v517
        %v587 = vunpack.c.l.b16 %v518
        %v588 = vunpack.c.h.b16 %v518
        %v589 = vunpack.c.l.b16 %v519
        %v590 = vunpack.c.l.b16 %v520
        %v591 = vunpack.c.h.b16 %v520
        %v592 = vunpack.c.l.b16 %v521
        %v593 = vunpack.c.l.b16 %v522
        %v594 = vunpack.c.h.b16 %v522
        %v595 = vunpack.c.l.b16 %v523
        %v596 = vunpack.c.l.b16 %v524
        %v597 = vunpack.c.h.b16 %v524
        %v598 = vunpack.c.l.b16 %v525
        %v599 = vunpack.c.l.b16 %v526
        %v600 = vunpack.c.h.b16 %v526
        %v601 = vunpack.c.l.b16 %v527
        %v602 = vunpack.c.l.b16 %v528
        %v603 = vunpack.c.h.b16 %v528
        %v604 = vunpack.c.l.b16 %v529
        %v605 = vunpack.c.l.b16 %v530
        %v606 = vunpack.c.h.b16 %v530
        %v607 = vunpack.c.l.b16 %v531
        %v608 = vunpack.c.l.b16 %v532
        %v609 = vunpack.c.h.b16 %v532
        %v610 = vunpack.c.l.b16 %v533
        %v611 = vunpack.c.l.b16 %v534
        %v612 = vunpack.c.h.b16 %v534
        %v613 = vunpack.c.l.b16 %v535
        %v614 = vunpack.c.l.b16 %v536
        %v615 = vunpack.c.h.b16 %v536
        %v616 = vunpack.c.l.b16 %v537
        %v617 = vunpack.c.l.b16 %v538
        %v618 = vunpack.c.h.b16 %v538
        %v619 = vunpack.c.l.b16 %v539
        %v620 = vpack.c.b16 %v575, %v572
        %v621 = vpack.c.b16 %v576, %v573
        %v622 = vpack.c.b16 %v577, %v574
        %v623 = vpack.c.b16 %v581, %v578
        %v624 = vpack.c.b16 %v582, %v579
        %v625 = vpack.c.b16 %v583, %v580
        %v626 = vpack.c.b16 %v587, %v584
        %v627 = vpack.c.b16 %v588, %v585
        %v628 = vpack.c.b16 %v589, %v586
        %v629 = vpack.c.b16 %v593, %v590
        %v630 = vpack.c.b16 %v594, %v591
        %v631 = vpack.c.b16 %v595, %v592
        %v632 = vpack.c.b16 %v599, %v596
        %v633 = vpack.c.b16 %v600, %v597
        %v634 = vpack.c.b16 %v601, %v598
        %v635 = vpack.c.b16 %v605, %v602
        %v636 = vpack.c.b16 %v606, %v603
        %v637 = vpack.c.b16 %v607, %v604
        %v638 = vpack.c.b16 %v611, %v608
        %v639 = vpack.c.b16 %v612, %v609
        %v640 = vpack.c.b16 %v613, %v610
        %v641 = vpack.c.b16 %v617, %v614
        %v642 = vpack.c.b16 %v618, %v615
        %v643 = vpack.c.b16 %v619, %v616
        %668 = vmatpush.bf16.msra.mxu0 %v641
        %669 = vmatpush.bf16.msra.mxu0 %v638
        %670 = vmatpush.bf16.msra.mxu0 %v635
        %671 = vmatpush.bf16.msra.mxu0 %v632
        %672 = vmatpush.bf16.msra.mxu0 %v629
        %673 = vmatpush.bf16.msra.mxu0 %v626
        %674 = vmatpush.bf16.msra.mxu0 %v623
        %675 = vmatpush.bf16.msra.mxu0 %v620
        %676 = vmatmul.bf16.gmra.mxu0 %v507
        %v677 = vpop.f32.mrf.mxu0
        %v678 = vadd.f32 0.0, %v677
        %v679 = vpop.f32.mrf.mxu0
        %v680 = vadd.f32 0.0, %v679
        %681 = vdwg.mxu0
        %682 = vmatpush.bf16.msra.mxu0 %v642
        %683 = vmatpush.bf16.msra.mxu0 %v639
        %684 = vmatpush.bf16.msra.mxu0 %v636
        %685 = vmatpush.bf16.msra.mxu0 %v633
        %686 = vmatpush.bf16.msra.mxu0 %v630
        %687 = vmatpush.bf16.msra.mxu0 %v627
        %688 = vmatpush.bf16.msra.mxu0 %v624
        %689 = vmatpush.bf16.msra.mxu0 %v621
        %690 = vmatmul.bf16.gmra.mxu0 %v507
        %v691 = vpop.f32.mrf.mxu0
        %v692 = vadd.f32 0.0, %v691
        %v693 = vpop.f32.mrf.mxu0
        %v694 = vadd.f32 0.0, %v693
        %695 = vdwg.mxu0
        %696 = vmatpush.bf16.msra.mxu0 %v643
        %697 = vmatpush.bf16.msra.mxu0 %v640
        %698 = vmatpush.bf16.msra.mxu0 %v637
        %699 = vmatpush.bf16.msra.mxu0 %v634
        %700 = vmatpush.bf16.msra.mxu0 %v631
        %701 = vmatpush.bf16.msra.mxu0 %v628
        %702 = vmatpush.bf16.msra.mxu0 %v625
        %703 = vmatpush.bf16.msra.mxu0 %v622
        %704 = vmatmul.bf16.gmra.mxu0 %v507
        %v705 = vpop.f32.mrf.mxu0
        %v706 = vadd.f32 0.0, %v705
        %v707 = vpop.f32.mrf.mxu0
        %v708 = vadd.f32 0.0, %v707
        %709 = vdwg.mxu0
        %vm710 = vcmask 261120
        %v712 = vsel %vm710, %v678, 0
        %v715 = vsel %vm710, %v692, 0
        %717 = vmatpush.xpose.msra.mxu0 0.0
        %718 = vmatpush.xpose.msra.mxu0 0.0
        %719 = vmatpush.xpose.msra.mxu0 0.0
        %720 = vmatpush.xpose.msra.mxu0 0.0
        %721 = vmatpush.xpose.msra.mxu0 0.0
        %722 = vmatpush.xpose.msra.mxu0 0.0
        %723 = vmatpush.xpose.msra.mxu0 0.0
        %724 = vmatpush.xpose.msra.mxu0 0.0
        %725 = vmatpush.xpose.msra.mxu0 0.0
        %726 = vmatpush.xpose.msra.mxu0 0.0
        %727 = vmatpush.xpose.msra.mxu0 0.0
        %728 = vmatpush.xpose.msra.mxu0 0.0
        %729 = vmatpush.xpose.msra.mxu0 0.0
        %730 = vmatpush.xpose.msra.mxu0 0.0
        %731 = vmatpush.xpose.msra.mxu0 0.0
        %732 = vmatpush.xpose.msra.mxu0 %v715
        %733 = vmatmul.f32.gmra.mxu0 %v712
        %v734 = vpop.f32.mrf.mxu0
        %v735 = vadd.f32 0.0, %v734
        %736 = vdwg.mxu0
        %vm737 = vcmask 64512
        %v738 = vsel %vm737, %v735, -inf
        %739 = vmax.xlane.f32.xlu0 %v738
        %v740 = vpop.xlane.xlu0 %739
        %v741 = vsub.f32 %v735, %v740
        %v742 = vmul.f32 %v741, 1.442695
        %v743 = vpow.pop %v742
        %v744 = vsel %vm737, %v743, 0.0
        %745 = vadd.xlane.f32.xlu0 %v744
        %v746 = vpop.xlane.xlu0 %745
        %v747 = vrcp.pop %v746
        %v748 = vmul.f32 %v743, %v747
        %v750 = vsel %vm737, %v748, 0
        %752 = vmatpush.msra.mxu0 0.0
        %753 = vmatpush.msra.mxu0 0.0
        %754 = vmatpush.msra.mxu0 0.0
        %755 = vmatpush.msra.mxu0 0.0
        %756 = vmatpush.msra.mxu0 0.0
        %757 = vmatpush.msra.mxu0 0.0
        %758 = vmatpush.msra.mxu0 0.0
        %759 = vmatpush.msra.mxu0 0.0
        %760 = vmatpush.msra.mxu0 0.0
        %761 = vmatpush.msra.mxu0 0.0
        %762 = vmatpush.msra.mxu0 0.0
        %763 = vmatpush.msra.mxu0 0.0
        %764 = vmatpush.msra.mxu0 0.0
        %765 = vmatpush.msra.mxu0 0.0
        %766 = vmatpush.msra.mxu0 0.0
        %767 = vmatpush.msra.mxu0 %v706
        %768 = vmatmul.f32.gmra.mxu0 %v750
        %v769 = vpop.f32.mrf.mxu0
        %v770 = vadd.f32 0.0, %v769
        %771 = vdwg.mxu0
        %772 = vrot.lane.b32.xlu0 %v678, 96
        %v773 = vpop.permute.xlu0 %772
        %774 = vrot.lane.b32.xlu0 %v692, 96
        %v775 = vpop.permute.xlu0 %774
        %v776 = vsel %vm710, %v773, 0
        %v778 = vsel %vm710, %v775, 0
        %780 = vmatpush.xpose.msra.mxu0 0.0
        %781 = vmatpush.xpose.msra.mxu0 0.0
        %782 = vmatpush.xpose.msra.mxu0 0.0
        %783 = vmatpush.xpose.msra.mxu0 0.0
        %784 = vmatpush.xpose.msra.mxu0 0.0
        %785 = vmatpush.xpose.msra.mxu0 0.0
        %786 = vmatpush.xpose.msra.mxu0 0.0
        %787 = vmatpush.xpose.msra.mxu0 0.0
        %788 = vmatpush.xpose.msra.mxu0 0.0
        %789 = vmatpush.xpose.msra.mxu0 0.0
        %790 = vmatpush.xpose.msra.mxu0 0.0
        %791 = vmatpush.xpose.msra.mxu0 0.0
        %792 = vmatpush.xpose.msra.mxu0 0.0
        %793 = vmatpush.xpose.msra.mxu0 0.0
        %794 = vmatpush.xpose.msra.mxu0 0.0
        %795 = vmatpush.xpose.msra.mxu0 %v778
        %796 = vmatmul.f32.gmra.mxu0 %v776
        %v797 = vpop.f32.mrf.mxu0
        %v798 = vadd.f32 0.0, %v797
        %799 = vdwg.mxu0
        %v800 = vsel %vm737, %v798, -inf
        %801 = vmax.xlane.f32.xlu0 %v800
        %v802 = vpop.xlane.xlu0 %801
        %v803 = vsub.f32 %v798, %v802
        %v804 = vmul.f32 %v803, 1.442695
        %v805 = vpow.pop %v804
        %v806 = vsel %vm737, %v805, 0.0
        %807 = vadd.xlane.f32.xlu0 %v806
        %v808 = vpop.xlane.xlu0 %807
        %v809 = vrcp.pop %v808
        %v810 = vmul.f32 %v805, %v809
        %812 = vrot.lane.b32.xlu0 %v706, 96
        %v813 = vpop.permute.xlu0 %812
        %v816 = vsel %vm737, %v810, 0
        %818 = vmatpush.msra.mxu0 0.0
        %819 = vmatpush.msra.mxu0 0.0
        %820 = vmatpush.msra.mxu0 0.0
        %821 = vmatpush.msra.mxu0 0.0
        %822 = vmatpush.msra.mxu0 0.0
        %823 = vmatpush.msra.mxu0 0.0
        %824 = vmatpush.msra.mxu0 0.0
        %825 = vmatpush.msra.mxu0 0.0
        %826 = vmatpush.msra.mxu0 0.0
        %827 = vmatpush.msra.mxu0 0.0
        %828 = vmatpush.msra.mxu0 0.0
        %829 = vmatpush.msra.mxu0 0.0
        %830 = vmatpush.msra.mxu0 0.0
        %831 = vmatpush.msra.mxu0 0.0
        %832 = vmatpush.msra.mxu0 0.0
        %833 = vmatpush.msra.mxu0 %v813
        %834 = vmatmul.f32.gmra.mxu0 %v816
        %v835 = vpop.f32.mrf.mxu0
        %v836 = vadd.f32 0.0, %v835
        %837 = vdwg.mxu0
        %838 = vrot.lane.b32.xlu0 %v678, 64
        %v839 = vpop.permute.xlu0 %838
        %840 = vrot.lane.b32.xlu0 %v692, 64
        %v841 = vpop.permute.xlu0 %840
        %v842 = vsel %vm710, %v839, 0
        %v844 = vsel %vm710, %v841, 0
        %846 = vmatpush.xpose.msra.mxu0 0.0
        %847 = vmatpush.xpose.msra.mxu0 0.0
        %848 = vmatpush.xpose.msra.mxu0 0.0
        %849 = vmatpush.xpose.msra.mxu0 0.0
        %850 = vmatpush.xpose.msra.mxu0 0.0
        %851 = vmatpush.xpose.msra.mxu0 0.0
        %852 = vmatpush.xpose.msra.mxu0 0.0
        %853 = vmatpush.xpose.msra.mxu0 0.0
        %854 = vmatpush.xpose.msra.mxu0 0.0
        %855 = vmatpush.xpose.msra.mxu0 0.0
        %856 = vmatpush.xpose.msra.mxu0 0.0
        %857 = vmatpush.xpose.msra.mxu0 0.0
        %858 = vmatpush.xpose.msra.mxu0 0.0
        %859 = vmatpush.xpose.msra.mxu0 0.0
        %860 = vmatpush.xpose.msra.mxu0 0.0
        %861 = vmatpush.xpose.msra.mxu0 %v844
        %862 = vmatmul.f32.gmra.mxu0 %v842
        %v863 = vpop.f32.mrf.mxu0
        %v864 = vadd.f32 0.0, %v863
        %865 = vdwg.mxu0
        %v866 = vsel %vm737, %v864, -inf
        %867 = vmax.xlane.f32.xlu0 %v866
        %v868 = vpop.xlane.xlu0 %867
        %v869 = vsub.f32 %v864, %v868
        %v870 = vmul.f32 %v869, 1.442695
        %v871 = vpow.pop %v870
        %v872 = vsel %vm737, %v871, 0.0
        %873 = vadd.xlane.f32.xlu0 %v872
        %v874 = vpop.xlane.xlu0 %873
        %v875 = vrcp.pop %v874
        %v876 = vmul.f32 %v871, %v875
        %877 = vrot.lane.b32.xlu0 %v706, 64
        %v878 = vpop.permute.xlu0 %877
        %v881 = vsel %vm737, %v876, 0
        %883 = vmatpush.msra.mxu0 0.0
        %884 = vmatpush.msra.mxu0 0.0
        %885 = vmatpush.msra.mxu0 0.0
        %886 = vmatpush.msra.mxu0 0.0
        %887 = vmatpush.msra.mxu0 0.0
        %888 = vmatpush.msra.mxu0 0.0
        %889 = vmatpush.msra.mxu0 0.0
        %890 = vmatpush.msra.mxu0 0.0
        %891 = vmatpush.msra.mxu0 0.0
        %892 = vmatpush.msra.mxu0 0.0
        %893 = vmatpush.msra.mxu0 0.0
        %894 = vmatpush.msra.mxu0 0.0
        %895 = vmatpush.msra.mxu0 0.0
        %896 = vmatpush.msra.mxu0 0.0
        %897 = vmatpush.msra.mxu0 0.0
        %898 = vmatpush.msra.mxu0 %v878
        %899 = vmatmul.f32.gmra.mxu0 %v881
        %v900 = vpop.f32.mrf.mxu0
        %v901 = vadd.f32 0.0, %v900
        %902 = vdwg.mxu0
        %903 = vrot.lane.b32.xlu0 %v678, 32
        %v904 = vpop.permute.xlu0 %903
        %905 = vrot.lane.b32.xlu0 %v692, 32
        %v906 = vpop.permute.xlu0 %905
        %v907 = vsel %vm710, %v904, 0
        %v909 = vsel %vm710, %v906, 0
        %911 = vmatpush.xpose.msra.mxu0 0.0
        %912 = vmatpush.xpose.msra.mxu0 0.0
        %913 = vmatpush.xpose.msra.mxu0 0.0
        %914 = vmatpush.xpose.msra.mxu0 0.0
        %915 = vmatpush.xpose.msra.mxu0 0.0
        %916 = vmatpush.xpose.msra.mxu0 0.0
        %917 = vmatpush.xpose.msra.mxu0 0.0
        %918 = vmatpush.xpose.msra.mxu0 0.0
        %919 = vmatpush.xpose.msra.mxu0 0.0
        %920 = vmatpush.xpose.msra.mxu0 0.0
        %921 = vmatpush.xpose.msra.mxu0 0.0
        %922 = vmatpush.xpose.msra.mxu0 0.0
        %923 = vmatpush.xpose.msra.mxu0 0.0
        %924 = vmatpush.xpose.msra.mxu0 0.0
        %925 = vmatpush.xpose.msra.mxu0 0.0
        %926 = vmatpush.xpose.msra.mxu0 %v909
        %927 = vmatmul.f32.gmra.mxu0 %v907
        %v928 = vpop.f32.mrf.mxu0
        %v929 = vadd.f32 0.0, %v928
        %930 = vdwg.mxu0
        %v931 = vsel %vm737, %v929, -inf
        %932 = vmax.xlane.f32.xlu0 %v931
        %v933 = vpop.xlane.xlu0 %932
        %v934 = vsub.f32 %v929, %v933
        %v935 = vmul.f32 %v934, 1.442695
        %v936 = vpow.pop %v935
        %v937 = vsel %vm737, %v936, 0.0
        %938 = vadd.xlane.f32.xlu0 %v937
        %v939 = vpop.xlane.xlu0 %938
        %v940 = vrcp.pop %v939
        %v941 = vmul.f32 %v936, %v940
        %942 = vrot.lane.b32.xlu0 %v706, 32
        %v943 = vpop.permute.xlu0 %942
        %v946 = vsel %vm737, %v941, 0
        %948 = vmatpush.msra.mxu0 0.0
        %949 = vmatpush.msra.mxu0 0.0
        %950 = vmatpush.msra.mxu0 0.0
        %951 = vmatpush.msra.mxu0 0.0
        %952 = vmatpush.msra.mxu0 0.0
        %953 = vmatpush.msra.mxu0 0.0
        %954 = vmatpush.msra.mxu0 0.0
        %955 = vmatpush.msra.mxu0 0.0
        %956 = vmatpush.msra.mxu0 0.0
        %957 = vmatpush.msra.mxu0 0.0
        %958 = vmatpush.msra.mxu0 0.0
        %959 = vmatpush.msra.mxu0 0.0
        %960 = vmatpush.msra.mxu0 0.0
        %961 = vmatpush.msra.mxu0 0.0
        %962 = vmatpush.msra.mxu0 0.0
        %963 = vmatpush.msra.mxu0 %v943
        %964 = vmatmul.f32.gmra.mxu0 %v946
        %v965 = vpop.f32.mrf.mxu0
        %v966 = vadd.f32 0.0, %v965
        %967 = vdwg.mxu0
        %969 = vrot.lane.b32.xlu0 %v836, 32
        %v970 = vpop.permute.xlu0 %969
        %973 = vrot.lane.b32.xlu0 %v901, 64
        %v974 = vpop.permute.xlu0 %973
        %977 = vrot.lane.b32.xlu0 %v966, 96
        %v978 = vpop.permute.xlu0 %977
        %v980 = vsel %vm710, %v770, %v970
        %vm981 = vcmask 523264
        %v982 = vsel %vm981, %v980, %v974
        %vm983 = vcmask 785408
        %v984 = vsel %vm983, %v982, %v978
        %v986 = vsel %vm710, %v680, 0
        %v989 = vsel %vm710, %v694, 0
        %991 = vmatpush.xpose.msra.mxu0 0.0
        %992 = vmatpush.xpose.msra.mxu0 0.0
        %993 = vmatpush.xpose.msra.mxu0 0.0
        %994 = vmatpush.xpose.msra.mxu0 0.0
        %995 = vmatpush.xpose.msra.mxu0 0.0
        %996 = vmatpush.xpose.msra.mxu0 0.0
        %997 = vmatpush.xpose.msra.mxu0 0.0
        %998 = vmatpush.xpose.msra.mxu0 0.0
        %999 = vmatpush.xpose.msra.mxu0 0.0
        %1000 = vmatpush.xpose.msra.mxu0 0.0
        %1001 = vmatpush.xpose.msra.mxu0 0.0
        %1002 = vmatpush.xpose.msra.mxu0 0.0
        %1003 = vmatpush.xpose.msra.mxu0 0.0
        %1004 = vmatpush.xpose.msra.mxu0 0.0
        %1005 = vmatpush.xpose.msra.mxu0 0.0
        %1006 = vmatpush.xpose.msra.mxu0 %v989
        %1007 = vmatmul.f32.gmra.mxu0 %v986
        %v1008 = vpop.f32.mrf.mxu0
        %v1009 = vadd.f32 0.0, %v1008
        %1010 = vdwg.mxu0
        %v1011 = vsel %vm737, %v1009, -inf
        %1012 = vmax.xlane.f32.xlu0 %v1011
        %v1013 = vpop.xlane.xlu0 %1012
        %v1014 = vsub.f32 %v1009, %v1013
        %v1015 = vmul.f32 %v1014, 1.442695
        %v1016 = vpow.pop %v1015
        %v1017 = vsel %vm737, %v1016, 0.0
        %1018 = vadd.xlane.f32.xlu0 %v1017
        %v1019 = vpop.xlane.xlu0 %1018
        %v1020 = vrcp.pop %v1019
        %v1021 = vmul.f32 %v1016, %v1020
        %v1023 = vsel %vm737, %v1021, 0
        %1025 = vmatpush.msra.mxu0 0.0
        %1026 = vmatpush.msra.mxu0 0.0
        %1027 = vmatpush.msra.mxu0 0.0
        %1028 = vmatpush.msra.mxu0 0.0
        %1029 = vmatpush.msra.mxu0 0.0
        %1030 = vmatpush.msra.mxu0 0.0
        %1031 = vmatpush.msra.mxu0 0.0
        %1032 = vmatpush.msra.mxu0 0.0
        %1033 = vmatpush.msra.mxu0 0.0
        %1034 = vmatpush.msra.mxu0 0.0
        %1035 = vmatpush.msra.mxu0 0.0
        %1036 = vmatpush.msra.mxu0 0.0
        %1037 = vmatpush.msra.mxu0 0.0
        %1038 = vmatpush.msra.mxu0 0.0
        %1039 = vmatpush.msra.mxu0 0.0
        %1040 = vmatpush.msra.mxu0 %v708
        %1041 = vmatmul.f32.gmra.mxu0 %v1023
        %v1042 = vpop.f32.mrf.mxu0
        %v1043 = vadd.f32 0.0, %v1042
        %1044 = vdwg.mxu0
        %1045 = vrot.lane.b32.xlu0 %v680, 96
        %v1046 = vpop.permute.xlu0 %1045
        %1047 = vrot.lane.b32.xlu0 %v694, 96
        %v1048 = vpop.permute.xlu0 %1047
        %v1049 = vsel %vm710, %v1046, 0
        %v1051 = vsel %vm710, %v1048, 0
        %1053 = vmatpush.xpose.msra.mxu0 0.0
        %1054 = vmatpush.xpose.msra.mxu0 0.0
        %1055 = vmatpush.xpose.msra.mxu0 0.0
        %1056 = vmatpush.xpose.msra.mxu0 0.0
        %1057 = vmatpush.xpose.msra.mxu0 0.0
        %1058 = vmatpush.xpose.msra.mxu0 0.0
        %1059 = vmatpush.xpose.msra.mxu0 0.0
        %1060 = vmatpush.xpose.msra.mxu0 0.0
        %1061 = vmatpush.xpose.msra.mxu0 0.0
        %1062 = vmatpush.xpose.msra.mxu0 0.0
        %1063 = vmatpush.xpose.msra.mxu0 0.0
        %1064 = vmatpush.xpose.msra.mxu0 0.0
        %1065 = vmatpush.xpose.msra.mxu0 0.0
        %1066 = vmatpush.xpose.msra.mxu0 0.0
        %1067 = vmatpush.xpose.msra.mxu0 0.0
        %1068 = vmatpush.xpose.msra.mxu0 %v1051
        %1069 = vmatmul.f32.gmra.mxu0 %v1049
        %v1070 = vpop.f32.mrf.mxu0
        %v1071 = vadd.f32 0.0, %v1070
        %1072 = vdwg.mxu0
        %v1073 = vsel %vm737, %v1071, -inf
        %1074 = vmax.xlane.f32.xlu0 %v1073
        %v1075 = vpop.xlane.xlu0 %1074
        %v1076 = vsub.f32 %v1071, %v1075
        %v1077 = vmul.f32 %v1076, 1.442695
        %v1078 = vpow.pop %v1077
        %v1079 = vsel %vm737, %v1078, 0.0
        %1080 = vadd.xlane.f32.xlu0 %v1079
        %v1081 = vpop.xlane.xlu0 %1080
        %v1082 = vrcp.pop %v1081
        %v1083 = vmul.f32 %v1078, %v1082
        %1085 = vrot.lane.b32.xlu0 %v708, 96
        %v1086 = vpop.permute.xlu0 %1085
        %v1089 = vsel %vm737, %v1083, 0
        %1091 = vmatpush.msra.mxu0 0.0
        %1092 = vmatpush.msra.mxu0 0.0
        %1093 = vmatpush.msra.mxu0 0.0
        %1094 = vmatpush.msra.mxu0 0.0
        %1095 = vmatpush.msra.mxu0 0.0
        %1096 = vmatpush.msra.mxu0 0.0
        %1097 = vmatpush.msra.mxu0 0.0
        %1098 = vmatpush.msra.mxu0 0.0
        %1099 = vmatpush.msra.mxu0 0.0
        %1100 = vmatpush.msra.mxu0 0.0
        %1101 = vmatpush.msra.mxu0 0.0
        %1102 = vmatpush.msra.mxu0 0.0
        %1103 = vmatpush.msra.mxu0 0.0
        %1104 = vmatpush.msra.mxu0 0.0
        %1105 = vmatpush.msra.mxu0 0.0
        %1106 = vmatpush.msra.mxu0 %v1086
        %1107 = vmatmul.f32.gmra.mxu0 %v1089
        %v1108 = vpop.f32.mrf.mxu0
        %v1109 = vadd.f32 0.0, %v1108
        %1110 = vdwg.mxu0
        %1111 = vrot.lane.b32.xlu0 %v680, 64
        %v1112 = vpop.permute.xlu0 %1111
        %1113 = vrot.lane.b32.xlu0 %v694, 64
        %v1114 = vpop.permute.xlu0 %1113
        %v1115 = vsel %vm710, %v1112, 0
        %v1117 = vsel %vm710, %v1114, 0
        %1119 = vmatpush.xpose.msra.mxu0 0.0
        %1120 = vmatpush.xpose.msra.mxu0 0.0
        %1121 = vmatpush.xpose.msra.mxu0 0.0
        %1122 = vmatpush.xpose.msra.mxu0 0.0
        %1123 = vmatpush.xpose.msra.mxu0 0.0
        %1124 = vmatpush.xpose.msra.mxu0 0.0
        %1125 = vmatpush.xpose.msra.mxu0 0.0
        %1126 = vmatpush.xpose.msra.mxu0 0.0
        %1127 = vmatpush.xpose.msra.mxu0 0.0
        %1128 = vmatpush.xpose.msra.mxu0 0.0
        %1129 = vmatpush.xpose.msra.mxu0 0.0
        %1130 = vmatpush.xpose.msra.mxu0 0.0
        %1131 = vmatpush.xpose.msra.mxu0 0.0
        %1132 = vmatpush.xpose.msra.mxu0 0.0
        %1133 = vmatpush.xpose.msra.mxu0 0.0
        %1134 = vmatpush.xpose.msra.mxu0 %v1117
        %1135 = vmatmul.f32.gmra.mxu0 %v1115
        %v1136 = vpop.f32.mrf.mxu0
        %v1137 = vadd.f32 0.0, %v1136
        %1138 = vdwg.mxu0
        %v1139 = vsel %vm737, %v1137, -inf
        %1140 = vmax.xlane.f32.xlu0 %v1139
        %v1141 = vpop.xlane.xlu0 %1140
        %v1142 = vsub.f32 %v1137, %v1141
        %v1143 = vmul.f32 %v1142, 1.442695
        %v1144 = vpow.pop %v1143
        %v1145 = vsel %vm737, %v1144, 0.0
        %1146 = vadd.xlane.f32.xlu0 %v1145
        %v1147 = vpop.xlane.xlu0 %1146
        %v1148 = vrcp.pop %v1147
        %v1149 = vmul.f32 %v1144, %v1148
        %1150 = vrot.lane.b32.xlu0 %v708, 64
        %v1151 = vpop.permute.xlu0 %1150
        %v1154 = vsel %vm737, %v1149, 0
        %1156 = vmatpush.msra.mxu0 0.0
        %1157 = vmatpush.msra.mxu0 0.0
        %1158 = vmatpush.msra.mxu0 0.0
        %1159 = vmatpush.msra.mxu0 0.0
        %1160 = vmatpush.msra.mxu0 0.0
        %1161 = vmatpush.msra.mxu0 0.0
        %1162 = vmatpush.msra.mxu0 0.0
        %1163 = vmatpush.msra.mxu0 0.0
        %1164 = vmatpush.msra.mxu0 0.0
        %1165 = vmatpush.msra.mxu0 0.0
        %1166 = vmatpush.msra.mxu0 0.0
        %1167 = vmatpush.msra.mxu0 0.0
        %1168 = vmatpush.msra.mxu0 0.0
        %1169 = vmatpush.msra.mxu0 0.0
        %1170 = vmatpush.msra.mxu0 0.0
        %1171 = vmatpush.msra.mxu0 %v1151
        %1172 = vmatmul.f32.gmra.mxu0 %v1154
        %v1173 = vpop.f32.mrf.mxu0
        %v1174 = vadd.f32 0.0, %v1173
        %1175 = vdwg.mxu0
        %1176 = vrot.lane.b32.xlu0 %v680, 32
        %v1177 = vpop.permute.xlu0 %1176
        %1178 = vrot.lane.b32.xlu0 %v694, 32
        %v1179 = vpop.permute.xlu0 %1178
        %v1180 = vsel %vm710, %v1177, 0
        %v1182 = vsel %vm710, %v1179, 0
        %1184 = vmatpush.xpose.msra.mxu0 0.0
        %1185 = vmatpush.xpose.msra.mxu0 0.0
        %1186 = vmatpush.xpose.msra.mxu0 0.0
        %1187 = vmatpush.xpose.msra.mxu0 0.0
        %1188 = vmatpush.xpose.msra.mxu0 0.0
        %1189 = vmatpush.xpose.msra.mxu0 0.0
        %1190 = vmatpush.xpose.msra.mxu0 0.0
        %1191 = vmatpush.xpose.msra.mxu0 0.0
        %1192 = vmatpush.xpose.msra.mxu0 0.0
        %1193 = vmatpush.xpose.msra.mxu0 0.0
        %1194 = vmatpush.xpose.msra.mxu0 0.0
        %1195 = vmatpush.xpose.msra.mxu0 0.0
        %1196 = vmatpush.xpose.msra.mxu0 0.0
        %1197 = vmatpush.xpose.msra.mxu0 0.0
        %1198 = vmatpush.xpose.msra.mxu0 0.0
        %1199 = vmatpush.xpose.msra.mxu0 %v1182
        %1200 = vmatmul.f32.gmra.mxu0 %v1180
        %v1201 = vpop.f32.mrf.mxu0
        %v1202 = vadd.f32 0.0, %v1201
        %1203 = vdwg.mxu0
        %v1204 = vsel %vm737, %v1202, -inf
        %1205 = vmax.xlane.f32.xlu0 %v1204
        %v1206 = vpop.xlane.xlu0 %1205
        %v1207 = vsub.f32 %v1202, %v1206
        %v1208 = vmul.f32 %v1207, 1.442695
        %v1209 = vpow.pop %v1208
        %v1210 = vsel %vm737, %v1209, 0.0
        %1211 = vadd.xlane.f32.xlu0 %v1210
        %v1212 = vpop.xlane.xlu0 %1211
        %v1213 = vrcp.pop %v1212
        %v1214 = vmul.f32 %v1209, %v1213
        %1215 = vrot.lane.b32.xlu0 %v708, 32
        %v1216 = vpop.permute.xlu0 %1215
        %v1219 = vsel %vm737, %v1214, 0
        %1221 = vmatpush.msra.mxu0 0.0
        %1222 = vmatpush.msra.mxu0 0.0
        %1223 = vmatpush.msra.mxu0 0.0
        %1224 = vmatpush.msra.mxu0 0.0
        %1225 = vmatpush.msra.mxu0 0.0
        %1226 = vmatpush.msra.mxu0 0.0
        %1227 = vmatpush.msra.mxu0 0.0
        %1228 = vmatpush.msra.mxu0 0.0
        %1229 = vmatpush.msra.mxu0 0.0
        %1230 = vmatpush.msra.mxu0 0.0
        %1231 = vmatpush.msra.mxu0 0.0
        %1232 = vmatpush.msra.mxu0 0.0
        %1233 = vmatpush.msra.mxu0 0.0
        %1234 = vmatpush.msra.mxu0 0.0
        %1235 = vmatpush.msra.mxu0 0.0
        %1236 = vmatpush.msra.mxu0 %v1216
        %1237 = vmatmul.f32.gmra.mxu0 %v1219
        %v1238 = vpop.f32.mrf.mxu0
        %v1239 = vadd.f32 0.0, %v1238
        %1240 = vdwg.mxu0
        %1242 = vrot.lane.b32.xlu0 %v1109, 32
        %v1243 = vpop.permute.xlu0 %1242
        %1246 = vrot.lane.b32.xlu0 %v1174, 64
        %v1247 = vpop.permute.xlu0 %1246
        %1250 = vrot.lane.b32.xlu0 %v1239, 96
        %v1251 = vpop.permute.xlu0 %1250
        %v1253 = vsel %vm710, %v1043, %v1243
        %v1254 = vsel %vm981, %v1253, %v1247
        %v1255 = vsel %vm983, %v1254, %v1251
        %v1256 = vpack.c.bf16 %v1255, %v984
        %v1257 = vld [vmem:[%s378] sm:$0xf]
        %v1258 = vld [vmem:[%s378 + $0x4] sm:$0xf]
        %v1259 = vld [vmem:[%s378 + $0x8] sm:$0xf]
        %v1260 = vld [vmem:[%s378 + $0xc] sm:$0xf]
        %v1261 = vld [vmem:[%s378 + $0x10] sm:$0xf]
        %v1262 = vld [vmem:[%s378 + $0x14] sm:$0xf]
        %v1263 = vld [vmem:[%s378 + $0x18] sm:$0xf]
        %v1264 = vld [vmem:[%s378 + $0x1c] sm:$0xf]
        %v1265 = vld [vmem:[%s378 + $0x20] sm:$0xf]
        %v1266 = vld [vmem:[%s378 + $0x24] sm:$0xf]
        %v1267 = vld [vmem:[%s378 + $0x28] sm:$0xf]
        %v1268 = vld [vmem:[%s378 + $0x2c] sm:$0xf]
        %v1269 = vld [vmem:[%s378 + $0x30] sm:$0xf]
        %v1270 = vld [vmem:[%s378 + $0x34] sm:$0xf]
        %v1271 = vld [vmem:[%s378 + $0x38] sm:$0xf]
        %v1272 = vld [vmem:[%s378 + $0x3c] sm:$0xf]
        %v1289 = vunpack.c.l.b16 %v1257
        %v1290 = vunpack.c.l.b16 %v1258
        %v1291 = vunpack.c.l.b16 %v1259
        %v1292 = vunpack.c.l.b16 %v1260
        %v1293 = vunpack.c.l.b16 %v1261
        %v1294 = vunpack.c.l.b16 %v1262
        %v1295 = vunpack.c.l.b16 %v1263
        %v1296 = vunpack.c.l.b16 %v1264
        %v1297 = vunpack.c.l.b16 %v1265
        %v1298 = vunpack.c.l.b16 %v1266
        %v1299 = vunpack.c.l.b16 %v1267
        %v1300 = vunpack.c.l.b16 %v1268
        %v1301 = vunpack.c.l.b16 %v1269
        %v1302 = vunpack.c.l.b16 %v1270
        %v1303 = vunpack.c.l.b16 %v1271
        %v1304 = vunpack.c.l.b16 %v1272
        %v1305 = vpack.c.b16 %v1290, %v1289
        %v1306 = vpack.c.b16 %v1292, %v1291
        %v1307 = vpack.c.b16 %v1294, %v1293
        %v1308 = vpack.c.b16 %v1296, %v1295
        %v1309 = vpack.c.b16 %v1298, %v1297
        %v1310 = vpack.c.b16 %v1300, %v1299
        %v1311 = vpack.c.b16 %v1302, %v1301
        %v1312 = vpack.c.b16 %v1304, %v1303
        %1321 = vmatpush.bf16.msra.mxu0 %v1312
        %1322 = vmatpush.bf16.msra.mxu0 %v1311
        %1323 = vmatpush.bf16.msra.mxu0 %v1310
        %1324 = vmatpush.bf16.msra.mxu0 %v1309
        %1325 = vmatpush.bf16.msra.mxu0 %v1308
        %1326 = vmatpush.bf16.msra.mxu0 %v1307
        %1327 = vmatpush.bf16.msra.mxu0 %v1306
        %1328 = vmatpush.bf16.msra.mxu0 %v1305
        %1329 = vmatmul.bf16.gmra.mxu0 %v1256
        %v1330 = vpop.f32.mrf.mxu0
        %v1331 = vadd.f32 0.0, %v1330
        %v1332 = vpop.f32.mrf.mxu0
        %v1333 = vadd.f32 0.0, %v1332
        %1334 = vdwg.mxu0
        %v1335 = vadd.f32 %v460, %v1331
        %v1336 = vadd.f32 %v461, %v1333
        %v1337 = vld [vmem:[%s451] sm:$0x1]
        %v1338 = vmul.f32 %v1335, %v1335
        %v1339 = vmul.f32 %v1336, %v1336
        %1340 = vadd.xlane.f32.xlu0 %v1338
        %v1341 = vpop.xlane.xlu0 %1340
        %1342 = vadd.xlane.f32.xlu0 %v1339
        %v1343 = vpop.xlane.xlu0 %1342
        %v1344 = vmul.f32 %v1341, %v475
        %v1345 = vmul.f32 %v1343, %v475
        %v1346 = vadd.f32 %v1344, 1e-06
        %v1347 = vadd.f32 %v1345, 1e-06
        %v1348 = vrsqrt.pop %v1346
        %v1349 = vmul.f32 %v1348, %v1346
        %v1350 = vmul.f32 %v1349, %v1348
        %v1351 = vmul.f32 0.5, %v1350
        %v1352 = vsub.f32 1.5, %v1351
        %v1353 = vmul.f32 %v1348, %v1352
        %vm1354 = vweird.f32 %v1346
        %vm1355 = vweird.f32 %v1348
        %vm1356 = vmor %vm1354, %vm1355
        %v1357 = vsel %vm1356, %v1348, %v1353
        %v1358 = vrsqrt.pop %v1347
        %v1359 = vmul.f32 %v1358, %v1347
        %v1360 = vmul.f32 %v1359, %v1358
        %v1361 = vmul.f32 0.5, %v1360
        %v1362 = vsub.f32 1.5, %v1361
        %v1363 = vmul.f32 %v1358, %v1362
        %vm1364 = vweird.f32 %v1347
        %vm1365 = vweird.f32 %v1358
        %vm1366 = vmor %vm1364, %vm1365
        %v1367 = vsel %vm1366, %v1358, %v1363
        %v1368 = vmul.f32 %v1335, %v1357
        %v1369 = vmul.f32 %v1336, %v1367
        %v1371 = vperm.slane %v1337, 0
        %v1373 = vmul.f32 %v1368, %v1371
        %v1374 = vmul.f32 %v1369, %v1371
        %v1375 = vpack.c.bf16 %v1374, %v1373
        %v1376 = vld [vmem:[%s388] sm:$0xff]
        %v1377 = vld [vmem:[%s388 + $0x8] sm:$0xff]
        %v1378 = vld [vmem:[%s388 + $0x10] sm:$0xff]
        %v1379 = vld [vmem:[%s388 + $0x18] sm:$0xff]
        %v1380 = vld [vmem:[%s388 + $0x20] sm:$0xff]
        %v1381 = vld [vmem:[%s388 + $0x28] sm:$0xff]
        %v1382 = vld [vmem:[%s388 + $0x30] sm:$0xff]
        %v1383 = vld [vmem:[%s388 + $0x38] sm:$0xff]
        %v1384 = vld [vmem:[%s388 + $0x40] sm:$0xff]
        %v1385 = vld [vmem:[%s388 + $0x48] sm:$0xff]
        %v1386 = vld [vmem:[%s388 + $0x50] sm:$0xff]
        %v1387 = vld [vmem:[%s388 + $0x58] sm:$0xff]
        %v1388 = vld [vmem:[%s388 + $0x60] sm:$0xff]
        %v1389 = vld [vmem:[%s388 + $0x68] sm:$0xff]
        %v1390 = vld [vmem:[%s388 + $0x70] sm:$0xff]
        %v1391 = vld [vmem:[%s388 + $0x78] sm:$0xff]
        %v1392 = vld [vmem:[%s388 + $0x80] sm:$0xff]
        %v1393 = vld [vmem:[%s388 + $0x88] sm:$0xff]
        %v1394 = vld [vmem:[%s388 + $0x90] sm:$0xff]
        %v1395 = vld [vmem:[%s388 + $0x98] sm:$0xff]
        %v1396 = vld [vmem:[%s388 + $0xa0] sm:$0xff]
        %v1397 = vld [vmem:[%s388 + $0xa8] sm:$0xff]
        %v1398 = vld [vmem:[%s388 + $0xb0] sm:$0xff]
        %v1399 = vld [vmem:[%s388 + $0xb8] sm:$0xff]
        %v1400 = vld [vmem:[%s388 + $0xc0] sm:$0xff]
        %v1401 = vld [vmem:[%s388 + $0xc8] sm:$0xff]
        %v1402 = vld [vmem:[%s388 + $0xd0] sm:$0xff]
        %v1403 = vld [vmem:[%s388 + $0xd8] sm:$0xff]
        %v1404 = vld [vmem:[%s388 + $0xe0] sm:$0xff]
        %v1405 = vld [vmem:[%s388 + $0xe8] sm:$0xff]
        %v1406 = vld [vmem:[%s388 + $0xf0] sm:$0xff]
        %v1407 = vld [vmem:[%s388 + $0xf8] sm:$0xff]
        %v1408 = vld [vmem:[%s388 + $0x100] sm:$0xff]
        %v1409 = vld [vmem:[%s388 + $0x108] sm:$0xff]
        %v1410 = vld [vmem:[%s388 + $0x110] sm:$0xff]
        %v1411 = vld [vmem:[%s388 + $0x118] sm:$0xff]
        %v1412 = vld [vmem:[%s388 + $0x120] sm:$0xff]
        %v1413 = vld [vmem:[%s388 + $0x128] sm:$0xff]
        %v1414 = vld [vmem:[%s388 + $0x130] sm:$0xff]
        %v1415 = vld [vmem:[%s388 + $0x138] sm:$0xff]
        %v1416 = vld [vmem:[%s388 + $0x140] sm:$0xff]
        %v1417 = vld [vmem:[%s388 + $0x148] sm:$0xff]
        %v1418 = vld [vmem:[%s388 + $0x150] sm:$0xff]
        %v1419 = vld [vmem:[%s388 + $0x158] sm:$0xff]
        %v1420 = vld [vmem:[%s388 + $0x160] sm:$0xff]
        %v1421 = vld [vmem:[%s388 + $0x168] sm:$0xff]
        %v1422 = vld [vmem:[%s388 + $0x170] sm:$0xff]
        %v1423 = vld [vmem:[%s388 + $0x178] sm:$0xff]
        %v1472 = vunpack.c.l.b16 %v1376
        %v1473 = vunpack.c.h.b16 %v1376
        %v1474 = vunpack.c.l.b16 %v1377
        %v1475 = vunpack.c.h.b16 %v1377
        %v1476 = vunpack.c.l.b16 %v1378
        %v1477 = vunpack.c.h.b16 %v1378
        %v1478 = vunpack.c.l.b16 %v1379
        %v1479 = vunpack.c.h.b16 %v1379
        %v1480 = vunpack.c.l.b16 %v1380
        %v1481 = vunpack.c.h.b16 %v1380
        %v1482 = vunpack.c.l.b16 %v1381
        %v1483 = vunpack.c.h.b16 %v1381
        %v1484 = vunpack.c.l.b16 %v1382
        %v1485 = vunpack.c.h.b16 %v1382
        %v1486 = vunpack.c.l.b16 %v1383
        %v1487 = vunpack.c.h.b16 %v1383
        %v1488 = vunpack.c.l.b16 %v1384
        %v1489 = vunpack.c.h.b16 %v1384
        %v1490 = vunpack.c.l.b16 %v1385
        %v1491 = vunpack.c.h.b16 %v1385
        %v1492 = vunpack.c.l.b16 %v1386
        %v1493 = vunpack.c.h.b16 %v1386
        %v1494 = vunpack.c.l.b16 %v1387
        %v1495 = vunpack.c.h.b16 %v1387
        %v1496 = vunpack.c.l.b16 %v1388
        %v1497 = vunpack.c.h.b16 %v1388
        %v1498 = vunpack.c.l.b16 %v1389
        %v1499 = vunpack.c.h.b16 %v1389
        %v1500 = vunpack.c.l.b16 %v1390
        %v1501 = vunpack.c.h.b16 %v1390
        %v1502 = vunpack.c.l.b16 %v1391
        %v1503 = vunpack.c.h.b16 %v1391
        %v1504 = vunpack.c.l.b16 %v1392
        %v1505 = vunpack.c.h.b16 %v1392
        %v1506 = vunpack.c.l.b16 %v1393
        %v1507 = vunpack.c.h.b16 %v1393
        %v1508 = vunpack.c.l.b16 %v1394
        %v1509 = vunpack.c.h.b16 %v1394
        %v1510 = vunpack.c.l.b16 %v1395
        %v1511 = vunpack.c.h.b16 %v1395
        %v1512 = vunpack.c.l.b16 %v1396
        %v1513 = vunpack.c.h.b16 %v1396
        %v1514 = vunpack.c.l.b16 %v1397
        %v1515 = vunpack.c.h.b16 %v1397
        %v1516 = vunpack.c.l.b16 %v1398
        %v1517 = vunpack.c.h.b16 %v1398
        %v1518 = vunpack.c.l.b16 %v1399
        %v1519 = vunpack.c.h.b16 %v1399
        %v1520 = vunpack.c.l.b16 %v1400
        %v1521 = vunpack.c.h.b16 %v1400
        %v1522 = vunpack.c.l.b16 %v1401
        %v1523 = vunpack.c.h.b16 %v1401
        %v1524 = vunpack.c.l.b16 %v1402
        %v1525 = vunpack.c.h.b16 %v1402
        %v1526 = vunpack.c.l.b16 %v1403
        %v1527 = vunpack.c.h.b16 %v1403
        %v1528 = vunpack.c.l.b16 %v1404
        %v1529 = vunpack.c.h.b16 %v1404
        %v1530 = vunpack.c.l.b16 %v1405
        %v1531 = vunpack.c.h.b16 %v1405
        %v1532 = vunpack.c.l.b16 %v1406
        %v1533 = vunpack.c.h.b16 %v1406
        %v1534 = vunpack.c.l.b16 %v1407
        %v1535 = vunpack.c.h.b16 %v1407
        %v1536 = vunpack.c.l.b16 %v1408
        %v1537 = vunpack.c.h.b16 %v1408
        %v1538 = vunpack.c.l.b16 %v1409
        %v1539 = vunpack.c.h.b16 %v1409
        %v1540 = vunpack.c.l.b16 %v1410
        %v1541 = vunpack.c.h.b16 %v1410
        %v1542 = vunpack.c.l.b16 %v1411
        %v1543 = vunpack.c.h.b16 %v1411
        %v1544 = vunpack.c.l.b16 %v1412
        %v1545 = vunpack.c.h.b16 %v1412
        %v1546 = vunpack.c.l.b16 %v1413
        %v1547 = vunpack.c.h.b16 %v1413
        %v1548 = vunpack.c.l.b16 %v1414
        %v1549 = vunpack.c.h.b16 %v1414
        %v1550 = vunpack.c.l.b16 %v1415
        %v1551 = vunpack.c.h.b16 %v1415
        %v1552 = vunpack.c.l.b16 %v1416
        %v1553 = vunpack.c.h.b16 %v1416
        %v1554 = vunpack.c.l.b16 %v1417
        %v1555 = vunpack.c.h.b16 %v1417
        %v1556 = vunpack.c.l.b16 %v1418
        %v1557 = vunpack.c.h.b16 %v1418
        %v1558 = vunpack.c.l.b16 %v1419
        %v1559 = vunpack.c.h.b16 %v1419
        %v1560 = vunpack.c.l.b16 %v1420
        %v1561 = vunpack.c.h.b16 %v1420
        %v1562 = vunpack.c.l.b16 %v1421
        %v1563 = vunpack.c.h.b16 %v1421
        %v1564 = vunpack.c.l.b16 %v1422
        %v1565 = vunpack.c.h.b16 %v1422
        %v1566 = vunpack.c.l.b16 %v1423
        %v1567 = vunpack.c.h.b16 %v1423
        %v1568 = vpack.c.b16 %v1478, %v1472
        %v1569 = vpack.c.b16 %v1479, %v1473
        %v1570 = vpack.c.b16 %v1480, %v1474
        %v1571 = vpack.c.b16 %v1481, %v1475
        %v1572 = vpack.c.b16 %v1482, %v1476
        %v1573 = vpack.c.b16 %v1483, %v1477
        %v1574 = vpack.c.b16 %v1490, %v1484
        %v1575 = vpack.c.b16 %v1491, %v1485
        %v1576 = vpack.c.b16 %v1492, %v1486
        %v1577 = vpack.c.b16 %v1493, %v1487
        %v1578 = vpack.c.b16 %v1494, %v1488
        %v1579 = vpack.c.b16 %v1495, %v1489
        %v1580 = vpack.c.b16 %v1502, %v1496
        %v1581 = vpack.c.b16 %v1503, %v1497
        %v1582 = vpack.c.b16 %v1504, %v1498
        %v1583 = vpack.c.b16 %v1505, %v1499
        %v1584 = vpack.c.b16 %v1506, %v1500
        %v1585 = vpack.c.b16 %v1507, %v1501
        %v1586 = vpack.c.b16 %v1514, %v1508
        %v1587 = vpack.c.b16 %v1515, %v1509
        %v1588 = vpack.c.b16 %v1516, %v1510
        %v1589 = vpack.c.b16 %v1517, %v1511
        %v1590 = vpack.c.b16 %v1518, %v1512
        %v1591 = vpack.c.b16 %v1519, %v1513
        %v1592 = vpack.c.b16 %v1526, %v1520
        %v1593 = vpack.c.b16 %v1527, %v1521
        %v1594 = vpack.c.b16 %v1528, %v1522
        %v1595 = vpack.c.b16 %v1529, %v1523
        %v1596 = vpack.c.b16 %v1530, %v1524
        %v1597 = vpack.c.b16 %v1531, %v1525
        %v1598 = vpack.c.b16 %v1538, %v1532
        %v1599 = vpack.c.b16 %v1539, %v1533
        %v1600 = vpack.c.b16 %v1540, %v1534
        %v1601 = vpack.c.b16 %v1541, %v1535
        %v1602 = vpack.c.b16 %v1542, %v1536
        %v1603 = vpack.c.b16 %v1543, %v1537
        %v1604 = vpack.c.b16 %v1550, %v1544
        %v1605 = vpack.c.b16 %v1551, %v1545
        %v1606 = vpack.c.b16 %v1552, %v1546
        %v1607 = vpack.c.b16 %v1553, %v1547
        %v1608 = vpack.c.b16 %v1554, %v1548
        %v1609 = vpack.c.b16 %v1555, %v1549
        %v1610 = vpack.c.b16 %v1562, %v1556
        %v1611 = vpack.c.b16 %v1563, %v1557
        %v1612 = vpack.c.b16 %v1564, %v1558
        %v1613 = vpack.c.b16 %v1565, %v1559
        %v1614 = vpack.c.b16 %v1566, %v1560
        %v1615 = vpack.c.b16 %v1567, %v1561
        %1664 = vmatpush.bf16.msra.mxu0 %v1610
        %1665 = vmatpush.bf16.msra.mxu0 %v1604
        %1666 = vmatpush.bf16.msra.mxu0 %v1598
        %1667 = vmatpush.bf16.msra.mxu0 %v1592
        %1668 = vmatpush.bf16.msra.mxu0 %v1586
        %1669 = vmatpush.bf16.msra.mxu0 %v1580
        %1670 = vmatpush.bf16.msra.mxu0 %v1574
        %1671 = vmatpush.bf16.msra.mxu0 %v1568
        %1672 = vmatmul.bf16.gmra.mxu0 %v1375
        %v1673 = vpop.f32.mrf.mxu0
        %v1674 = vadd.f32 0.0, %v1673
        %v1675 = vpop.f32.mrf.mxu0
        %v1676 = vadd.f32 0.0, %v1675
        %1677 = vdwg.mxu0
        %1678 = vmatpush.bf16.msra.mxu0 %v1611
        %1679 = vmatpush.bf16.msra.mxu0 %v1605
        %1680 = vmatpush.bf16.msra.mxu0 %v1599
        %1681 = vmatpush.bf16.msra.mxu0 %v1593
        %1682 = vmatpush.bf16.msra.mxu0 %v1587
        %1683 = vmatpush.bf16.msra.mxu0 %v1581
        %1684 = vmatpush.bf16.msra.mxu0 %v1575
        %1685 = vmatpush.bf16.msra.mxu0 %v1569
        %1686 = vmatmul.bf16.gmra.mxu0 %v1375
        %v1687 = vpop.f32.mrf.mxu0
        %v1688 = vadd.f32 0.0, %v1687
        %v1689 = vpop.f32.mrf.mxu0
        %v1690 = vadd.f32 0.0, %v1689
        %1691 = vdwg.mxu0
        %1692 = vmatpush.bf16.msra.mxu0 %v1612
        %1693 = vmatpush.bf16.msra.mxu0 %v1606
        %1694 = vmatpush.bf16.msra.mxu0 %v1600
        %1695 = vmatpush.bf16.msra.mxu0 %v1594
        %1696 = vmatpush.bf16.msra.mxu0 %v1588
        %1697 = vmatpush.bf16.msra.mxu0 %v1582
        %1698 = vmatpush.bf16.msra.mxu0 %v1576
        %1699 = vmatpush.bf16.msra.mxu0 %v1570
        %1700 = vmatmul.bf16.gmra.mxu0 %v1375
        %v1701 = vpop.f32.mrf.mxu0
        %v1702 = vadd.f32 0.0, %v1701
        %v1703 = vpop.f32.mrf.mxu0
        %v1704 = vadd.f32 0.0, %v1703
        %1705 = vdwg.mxu0
        %1706 = vmatpush.bf16.msra.mxu0 %v1613
        %1707 = vmatpush.bf16.msra.mxu0 %v1607
        %1708 = vmatpush.bf16.msra.mxu0 %v1601
        %1709 = vmatpush.bf16.msra.mxu0 %v1595
        %1710 = vmatpush.bf16.msra.mxu0 %v1589
        %1711 = vmatpush.bf16.msra.mxu0 %v1583
        %1712 = vmatpush.bf16.msra.mxu0 %v1577
        %1713 = vmatpush.bf16.msra.mxu0 %v1571
        %1714 = vmatmul.bf16.gmra.mxu0 %v1375
        %v1715 = vpop.f32.mrf.mxu0
        %v1716 = vadd.f32 0.0, %v1715
        %v1717 = vpop.f32.mrf.mxu0
        %v1718 = vadd.f32 0.0, %v1717
        %1719 = vdwg.mxu0
        %1720 = vmatpush.bf16.msra.mxu0 %v1614
        %1721 = vmatpush.bf16.msra.mxu0 %v1608
        %1722 = vmatpush.bf16.msra.mxu0 %v1602
        %1723 = vmatpush.bf16.msra.mxu0 %v1596
        %1724 = vmatpush.bf16.msra.mxu0 %v1590
        %1725 = vmatpush.bf16.msra.mxu0 %v1584
        %1726 = vmatpush.bf16.msra.mxu0 %v1578
        %1727 = vmatpush.bf16.msra.mxu0 %v1572
        %1728 = vmatmul.bf16.gmra.mxu0 %v1375
        %v1729 = vpop.f32.mrf.mxu0
        %v1730 = vadd.f32 0.0, %v1729
        %v1731 = vpop.f32.mrf.mxu0
        %v1732 = vadd.f32 0.0, %v1731
        %1733 = vdwg.mxu0
        %1734 = vmatpush.bf16.msra.mxu0 %v1615
        %1735 = vmatpush.bf16.msra.mxu0 %v1609
        %1736 = vmatpush.bf16.msra.mxu0 %v1603
        %1737 = vmatpush.bf16.msra.mxu0 %v1597
        %1738 = vmatpush.bf16.msra.mxu0 %v1591
        %1739 = vmatpush.bf16.msra.mxu0 %v1585
        %1740 = vmatpush.bf16.msra.mxu0 %v1579
        %1741 = vmatpush.bf16.msra.mxu0 %v1573
        %1742 = vmatmul.bf16.gmra.mxu0 %v1375
        %v1743 = vpop.f32.mrf.mxu0
        %v1744 = vadd.f32 0.0, %v1743
        %v1745 = vpop.f32.mrf.mxu0
        %v1746 = vadd.f32 0.0, %v1745
        %1747 = vdwg.mxu0
        %v1748 = vxor.u32 %v1674, 2147483648
        %v1749 = vxor.u32 %v1688, 2147483648
        %v1750 = vxor.u32 %v1702, 2147483648
        %v1751 = vxor.u32 %v1676, 2147483648
        %v1752 = vxor.u32 %v1690, 2147483648
        %v1753 = vxor.u32 %v1704, 2147483648
        %v1754 = vmul.f32 %v1748, 1.442695
        %v1755 = vpow.pop %v1754
        %v1756 = vmul.f32 %v1749, 1.442695
        %v1757 = vpow.pop %v1756
        %v1758 = vmul.f32 %v1750, 1.442695
        %v1759 = vpow.pop %v1758
        %v1760 = vmul.f32 %v1751, 1.442695
        %v1761 = vpow.pop %v1760
        %v1762 = vmul.f32 %v1752, 1.442695
        %v1763 = vpow.pop %v1762
        %v1764 = vmul.f32 %v1753, 1.442695
        %v1765 = vpow.pop %v1764
        %v1766 = vadd.f32 %v1755, 1.0
        %v1767 = vadd.f32 %v1757, 1.0
        %v1768 = vadd.f32 %v1759, 1.0
        %v1769 = vadd.f32 %v1761, 1.0
        %v1770 = vadd.f32 %v1763, 1.0
        %v1771 = vadd.f32 %v1765, 1.0
        %v1772 = vrcp.pop %v1766
        %v1773 = vmul.f32 %v1766, %v1772
        %v1774 = vsub.f32 1.0, %v1773
        %v1775 = vmul.f32 %v1772, %v1774
        %v1776 = vadd.f32 %v1772, %v1775
        %vm1777 = vweird.f32 %v1766
        %vm1778 = vweird.f32 %v1772
        %vm1779 = vmor %vm1777, %vm1778
        %v1780 = vsel %vm1779, %v1772, %v1776
        %v1781 = vand.u32 2147483647, %v1766
        %vm1782 = vcmp.eq.f32.partialorder %v1781, 8.507059e+37
        %v1783 = vand.u32 %v1766, 2147483648
        %v1784 = vor.u32 1.1754944e-38, %v1783
        %v1785 = vsel %vm1782, %v1784, %v1780
        %v1786 = vmul.f32 1.0, %v1785
        %v1787 = vrcp.pop %v1767
        %v1788 = vmul.f32 %v1767, %v1787
        %v1789 = vsub.f32 1.0, %v1788
        %v1790 = vmul.f32 %v1787, %v1789
        %v1791 = vadd.f32 %v1787, %v1790
        %vm1792 = vweird.f32 %v1767
        %vm1793 = vweird.f32 %v1787
        %vm1794 = vmor %vm1792, %vm1793
        %v1795 = vsel %vm1794, %v1787, %v1791
        %v1796 = vand.u32 2147483647, %v1767
        %vm1797 = vcmp.eq.f32.partialorder %v1796, 8.507059e+37
        %v1798 = vand.u32 %v1767, 2147483648
        %v1799 = vor.u32 1.1754944e-38, %v1798
        %v1800 = vsel %vm1797, %v1799, %v1795
        %v1801 = vmul.f32 1.0, %v1800
        %v1802 = vrcp.pop %v1768
        %v1803 = vmul.f32 %v1768, %v1802
        %v1804 = vsub.f32 1.0, %v1803
        %v1805 = vmul.f32 %v1802, %v1804
        %v1806 = vadd.f32 %v1802, %v1805
        %vm1807 = vweird.f32 %v1768
        %vm1808 = vweird.f32 %v1802
        %vm1809 = vmor %vm1807, %vm1808
        %v1810 = vsel %vm1809, %v1802, %v1806
        %v1811 = vand.u32 2147483647, %v1768
        %vm1812 = vcmp.eq.f32.partialorder %v1811, 8.507059e+37
        %v1813 = vand.u32 %v1768, 2147483648
        %v1814 = vor.u32 1.1754944e-38, %v1813
        %v1815 = vsel %vm1812, %v1814, %v1810
        %v1816 = vmul.f32 1.0, %v1815
        %v1817 = vrcp.pop %v1769
        %v1818 = vmul.f32 %v1769, %v1817
        %v1819 = vsub.f32 1.0, %v1818
        %v1820 = vmul.f32 %v1817, %v1819
        %v1821 = vadd.f32 %v1817, %v1820
        %vm1822 = vweird.f32 %v1769
        %vm1823 = vweird.f32 %v1817
        %vm1824 = vmor %vm1822, %vm1823
        %v1825 = vsel %vm1824, %v1817, %v1821
        %v1826 = vand.u32 2147483647, %v1769
        %vm1827 = vcmp.eq.f32.partialorder %v1826, 8.507059e+37
        %v1828 = vand.u32 %v1769, 2147483648
        %v1829 = vor.u32 1.1754944e-38, %v1828
        %v1830 = vsel %vm1827, %v1829, %v1825
        %v1831 = vmul.f32 1.0, %v1830
        %v1832 = vrcp.pop %v1770
        %v1833 = vmul.f32 %v1770, %v1832
        %v1834 = vsub.f32 1.0, %v1833
        %v1835 = vmul.f32 %v1832, %v1834
        %v1836 = vadd.f32 %v1832, %v1835
        %vm1837 = vweird.f32 %v1770
        %vm1838 = vweird.f32 %v1832
        %vm1839 = vmor %vm1837, %vm1838
        %v1840 = vsel %vm1839, %v1832, %v1836
        %v1841 = vand.u32 2147483647, %v1770
        %vm1842 = vcmp.eq.f32.partialorder %v1841, 8.507059e+37
        %v1843 = vand.u32 %v1770, 2147483648
        %v1844 = vor.u32 1.1754944e-38, %v1843
        %v1845 = vsel %vm1842, %v1844, %v1840
        %v1846 = vmul.f32 1.0, %v1845
        %v1847 = vrcp.pop %v1771
        %v1848 = vmul.f32 %v1771, %v1847
        %v1849 = vsub.f32 1.0, %v1848
        %v1850 = vmul.f32 %v1847, %v1849
        %v1851 = vadd.f32 %v1847, %v1850
        %vm1852 = vweird.f32 %v1771
        %vm1853 = vweird.f32 %v1847
        %vm1854 = vmor %vm1852, %vm1853
        %v1855 = vsel %vm1854, %v1847, %v1851
        %v1856 = vand.u32 2147483647, %v1771
        %vm1857 = vcmp.eq.f32.partialorder %v1856, 8.507059e+37
        %v1858 = vand.u32 %v1771, 2147483648
        %v1859 = vor.u32 1.1754944e-38, %v1858
        %v1860 = vsel %vm1857, %v1859, %v1855
        %v1861 = vmul.f32 1.0, %v1860
        %v1862 = vmul.f32 %v1674, %v1786
        %v1863 = vmul.f32 %v1688, %v1801
        %v1864 = vmul.f32 %v1702, %v1816
        %v1865 = vmul.f32 %v1676, %v1831
        %v1866 = vmul.f32 %v1690, %v1846
        %v1867 = vmul.f32 %v1704, %v1861
        %v1868 = vmul.f32 %v1862, %v1716
        %v1869 = vmul.f32 %v1863, %v1730
        %v1870 = vmul.f32 %v1864, %v1744
        %v1871 = vmul.f32 %v1865, %v1718
        %v1872 = vmul.f32 %v1866, %v1732
        %v1873 = vmul.f32 %v1867, %v1746
        %v1874 = vpack.c.bf16 %v1871, %v1868
        %v1875 = vpack.c.bf16 %v1872, %v1869
        %v1876 = vpack.c.bf16 %v1873, %v1870
        %v1877 = vld [vmem:[%s398] sm:$0xf]
        %v1878 = vld [vmem:[%s398 + $0x4] sm:$0xf]
        %v1879 = vld [vmem:[%s398 + $0x8] sm:$0xf]
        %v1880 = vld [vmem:[%s398 + $0xc] sm:$0xf]
        %v1881 = vld [vmem:[%s398 + $0x10] sm:$0xf]
        %v1882 = vld [vmem:[%s398 + $0x14] sm:$0xf]
        %v1883 = vld [vmem:[%s398 + $0x18] sm:$0xf]
        %v1884 = vld [vmem:[%s398 + $0x1c] sm:$0xf]
        %v1885 = vld [vmem:[%s398 + $0x20] sm:$0xf]
        %v1886 = vld [vmem:[%s398 + $0x24] sm:$0xf]
        %v1887 = vld [vmem:[%s398 + $0x28] sm:$0xf]
        %v1888 = vld [vmem:[%s398 + $0x2c] sm:$0xf]
        %v1889 = vld [vmem:[%s398 + $0x30] sm:$0xf]
        %v1890 = vld [vmem:[%s398 + $0x34] sm:$0xf]
        %v1891 = vld [vmem:[%s398 + $0x38] sm:$0xf]
        %v1892 = vld [vmem:[%s398 + $0x3c] sm:$0xf]
        %v1893 = vld [vmem:[%s398 + $0x40] sm:$0xf]
        %v1894 = vld [vmem:[%s398 + $0x44] sm:$0xf]
        %v1895 = vld [vmem:[%s398 + $0x48] sm:$0xf]
        %v1896 = vld [vmem:[%s398 + $0x4c] sm:$0xf]
        %v1897 = vld [vmem:[%s398 + $0x50] sm:$0xf]
        %v1898 = vld [vmem:[%s398 + $0x54] sm:$0xf]
        %v1899 = vld [vmem:[%s398 + $0x58] sm:$0xf]
        %v1900 = vld [vmem:[%s398 + $0x5c] sm:$0xf]
        %v1901 = vld [vmem:[%s398 + $0x60] sm:$0xf]
        %v1902 = vld [vmem:[%s398 + $0x64] sm:$0xf]
        %v1903 = vld [vmem:[%s398 + $0x68] sm:$0xf]
        %v1904 = vld [vmem:[%s398 + $0x6c] sm:$0xf]
        %v1905 = vld [vmem:[%s398 + $0x70] sm:$0xf]
        %v1906 = vld [vmem:[%s398 + $0x74] sm:$0xf]
        %v1907 = vld [vmem:[%s398 + $0x78] sm:$0xf]
        %v1908 = vld [vmem:[%s398 + $0x7c] sm:$0xf]
        %v1909 = vld [vmem:[%s398 + $0x80] sm:$0xf]
        %v1910 = vld [vmem:[%s398 + $0x84] sm:$0xf]
        %v1911 = vld [vmem:[%s398 + $0x88] sm:$0xf]
        %v1912 = vld [vmem:[%s398 + $0x8c] sm:$0xf]
        %v1913 = vld [vmem:[%s398 + $0x90] sm:$0xf]
        %v1914 = vld [vmem:[%s398 + $0x94] sm:$0xf]
        %v1915 = vld [vmem:[%s398 + $0x98] sm:$0xf]
        %v1916 = vld [vmem:[%s398 + $0x9c] sm:$0xf]
        %v1917 = vld [vmem:[%s398 + $0xa0] sm:$0xf]
        %v1918 = vld [vmem:[%s398 + $0xa4] sm:$0xf]
        %v1919 = vld [vmem:[%s398 + $0xa8] sm:$0xf]
        %v1920 = vld [vmem:[%s398 + $0xac] sm:$0xf]
        %v1921 = vld [vmem:[%s398 + $0xb0] sm:$0xf]
        %v1922 = vld [vmem:[%s398 + $0xb4] sm:$0xf]
        %v1923 = vld [vmem:[%s398 + $0xb8] sm:$0xf]
        %v1924 = vld [vmem:[%s398 + $0xbc] sm:$0xf]
        %v1973 = vunpack.c.l.b16 %v1877
        %v1974 = vunpack.c.l.b16 %v1878
        %v1975 = vunpack.c.l.b16 %v1879
        %v1976 = vunpack.c.l.b16 %v1880
        %v1977 = vunpack.c.l.b16 %v1881
        %v1978 = vunpack.c.l.b16 %v1882
        %v1979 = vunpack.c.l.b16 %v1883
        %v1980 = vunpack.c.l.b16 %v1884
        %v1981 = vunpack.c.l.b16 %v1885
        %v1982 = vunpack.c.l.b16 %v1886
        %v1983 = vunpack.c.l.b16 %v1887
        %v1984 = vunpack.c.l.b16 %v1888
        %v1985 = vunpack.c.l.b16 %v1889
        %v1986 = vunpack.c.l.b16 %v1890
        %v1987 = vunpack.c.l.b16 %v1891
        %v1988 = vunpack.c.l.b16 %v1892
        %v1989 = vunpack.c.l.b16 %v1893
        %v1990 = vunpack.c.l.b16 %v1894
        %v1991 = vunpack.c.l.b16 %v1895
        %v1992 = vunpack.c.l.b16 %v1896
        %v1993 = vunpack.c.l.b16 %v1897
        %v1994 = vunpack.c.l.b16 %v1898
        %v1995 = vunpack.c.l.b16 %v1899
        %v1996 = vunpack.c.l.b16 %v1900
        %v1997 = vunpack.c.l.b16 %v1901
        %v1998 = vunpack.c.l.b16 %v1902
        %v1999 = vunpack.c.l.b16 %v1903
        %v2000 = vunpack.c.l.b16 %v1904
        %v2001 = vunpack.c.l.b16 %v1905
        %v2002 = vunpack.c.l.b16 %v1906
        %v2003 = vunpack.c.l.b16 %v1907
        %v2004 = vunpack.c.l.b16 %v1908
        %v2005 = vunpack.c.l.b16 %v1909
        %v2006 = vunpack.c.l.b16 %v1910
        %v2007 = vunpack.c.l.b16 %v1911
        %v2008 = vunpack.c.l.b16 %v1912
        %v2009 = vunpack.c.l.b16 %v1913
        %v2010 = vunpack.c.l.b16 %v1914
        %v2011 = vunpack.c.l.b16 %v1915
        %v2012 = vunpack.c.l.b16 %v1916
        %v2013 = vunpack.c.l.b16 %v1917
        %v2014 = vunpack.c.l.b16 %v1918
        %v2015 = vunpack.c.l.b16 %v1919
        %v2016 = vunpack.c.l.b16 %v1920
        %v2017 = vunpack.c.l.b16 %v1921
        %v2018 = vunpack.c.l.b16 %v1922
        %v2019 = vunpack.c.l.b16 %v1923
        %v2020 = vunpack.c.l.b16 %v1924
        %v2021 = vpack.c.b16 %v1974, %v1973
        %v2022 = vpack.c.b16 %v1976, %v1975
        %v2023 = vpack.c.b16 %v1978, %v1977
        %v2024 = vpack.c.b16 %v1980, %v1979
        %v2025 = vpack.c.b16 %v1982, %v1981
        %v2026 = vpack.c.b16 %v1984, %v1983
        %v2027 = vpack.c.b16 %v1986, %v1985
        %v2028 = vpack.c.b16 %v1988, %v1987
        %v2029 = vpack.c.b16 %v1990, %v1989
        %v2030 = vpack.c.b16 %v1992, %v1991
        %v2031 = vpack.c.b16 %v1994, %v1993
        %v2032 = vpack.c.b16 %v1996, %v1995
        %v2033 = vpack.c.b16 %v1998, %v1997
        %v2034 = vpack.c.b16 %v2000, %v1999
        %v2035 = vpack.c.b16 %v2002, %v2001
        %v2036 = vpack.c.b16 %v2004, %v2003
        %v2037 = vpack.c.b16 %v2006, %v2005
        %v2038 = vpack.c.b16 %v2008, %v2007
        %v2039 = vpack.c.b16 %v2010, %v2009
        %v2040 = vpack.c.b16 %v2012, %v2011
        %v2041 = vpack.c.b16 %v2014, %v2013
        %v2042 = vpack.c.b16 %v2016, %v2015
        %v2043 = vpack.c.b16 %v2018, %v2017
        %v2044 = vpack.c.b16 %v2020, %v2019
        %2069 = vmatpush.bf16.msra.mxu0 %v2028
        %2070 = vmatpush.bf16.msra.mxu0 %v2027
        %2071 = vmatpush.bf16.msra.mxu0 %v2026
        %2072 = vmatpush.bf16.msra.mxu0 %v2025
        %2073 = vmatpush.bf16.msra.mxu0 %v2024
        %2074 = vmatpush.bf16.msra.mxu0 %v2023
        %2075 = vmatpush.bf16.msra.mxu0 %v2022
        %2076 = vmatpush.bf16.msra.mxu0 %v2021
        %2077 = vmatmul.bf16.gmra.mxu0 %v1874
        %v2078 = vpop.f32.mrf.mxu0
        %v2079 = vadd.f32 0.0, %v2078
        %v2080 = vpop.f32.mrf.mxu0
        %v2081 = vadd.f32 0.0, %v2080
        %2082 = vdwg.mxu0
        %2083 = vmatpush.bf16.msra.mxu0 %v2036
        %2084 = vmatpush.bf16.msra.mxu0 %v2035
        %2085 = vmatpush.bf16.msra.mxu0 %v2034
        %2086 = vmatpush.bf16.msra.mxu0 %v2033
        %2087 = vmatpush.bf16.msra.mxu0 %v2032
        %2088 = vmatpush.bf16.msra.mxu0 %v2031
        %2089 = vmatpush.bf16.msra.mxu0 %v2030
        %2090 = vmatpush.bf16.msra.mxu0 %v2029
        %2091 = vmatmul.bf16.gmra.mxu0 %v1875
        %v2092 = vpop.f32.mrf.mxu0
        %v2093 = vadd.f32 %v2079, %v2092
        %v2094 = vpop.f32.mrf.mxu0
        %v2095 = vadd.f32 %v2081, %v2094
        %2096 = vdwg.mxu0
        %2097 = vmatpush.bf16.msra.mxu0 %v2044
        %2098 = vmatpush.bf16.msra.mxu0 %v2043
        %2099 = vmatpush.bf16.msra.mxu0 %v2042
        %2100 = vmatpush.bf16.msra.mxu0 %v2041
        %2101 = vmatpush.bf16.msra.mxu0 %v2040
        %2102 = vmatpush.bf16.msra.mxu0 %v2039
        %2103 = vmatpush.bf16.msra.mxu0 %v2038
        %2104 = vmatpush.bf16.msra.mxu0 %v2037
        %2105 = vmatmul.bf16.gmra.mxu0 %v1876
        %v2106 = vpop.f32.mrf.mxu0
        %v2107 = vadd.f32 %v2093, %v2106
        %v2108 = vpop.f32.mrf.mxu0
        %v2109 = vadd.f32 %v2095, %v2108
        %2110 = vdwg.mxu0
        %v2111 = vadd.f32 %v1335, %v2107
        %v2112 = vadd.f32 %v1336, %v2109
        %2113 = vst [vmem:[#allocation11] sm:$0xff] %v2111
        %2114 = vst [vmem:[#allocation11 + $0x8] sm:$0xff] %v2112
        // Predicated region
        $region73: #{transformer_forward.3} parent=47 // pred_check
          %p2115 = pneg %p216
        $region74: #{transformer_forward.3} parent=47 // pred_check_branch
          %2117 = sbr.rel (%p2115) target = $region76
        $region75: #{transformer_forward.3} parent=47 // pred_region
          %2119 = vsyncadd [#allocation4], 0
          %s2120 = sshll.u32 [#allocation11], 4
          %s2121 = int_to_ptr.vmem [resolvable:$true] %s2120
          %s2122 = sshll.u32 %s7, 4
          %s2123 = int_to_ptr.hbm [resolvable:$true] %s2122
          %2128 = dma.vmem_to_hbm [thread:$0]  %s2121, 256, %s2123, [#allocation4], 128, 128, 8
        $region76: #{transformer_forward.3} parent=47 // pred_fallthru
          _
        // Predicated region
        $region77: #{transformer_forward.3} parent=47 // pred_check
          %p2129 = pneg %p216
        $region78: #{transformer_forward.3} parent=47 // pred_check_branch
          %2131 = sbr.rel (%p2129) target = $region80
        $region79: #{transformer_forward.3} parent=47 // pred_region
          %2133 = dma.done [#allocation4], 256
        $region80: #{transformer_forward.3} parent=47 // pred_fallthru
          _
      $region48: #{transformer_forward.3} parent=5 // pred_fallthru
        _
      %p2134 = scmp.le.s32.totalorder 2, %s21
      // Predicated region
      $region81: #{transformer_forward.3} parent=5 // pred_check
        %p2135 = pneg %p2134
      $region82: #{transformer_forward.3} parent=5 // pred_check_branch
        %2137 = sbr.rel (%p2135) target = $region84
      $region83: #{transformer_forward.3} parent=5 // pred_region
        %s2138 = ssub.s32 %s21, 2
      $region84: #{transformer_forward.3} parent=5 // pred_fallthru
        _
    $region6: #{transformer_forward.3} parent=1 // loop_footer
      %s25 = sadd.s32 1, %s21
    $region7: #{transformer_forward.3} parent=1 // loop_footer_branch
      %20 = sbr.rel target = $region3
    $region8: #{transformer_forward.3} parent=1 // loop_exit
      _
    %2139 = vsyncpa [#allocation3], 1
    %s2140 = scalar_lea.sflag [#allocation3], 1
    %2141 = vsyncpa %s2140, 1
    %2142 = vsyncpa [#allocation6], 1
    %s2143 = scalar_lea.sflag [#allocation6], 1
    %2144 = vsyncpa %s2143, 1
    %2145 = vsyncpa [#allocation9], 1
    %s2146 = scalar_lea.sflag [#allocation9], 1
    %2147 = vsyncpa %s2146, 1
    %2148 = vsyncpa [#allocation4], 1
    %s2149 = scalar_lea.sflag [#allocation4], 1
    %2150 = vsyncpa %s2149, 1

// kernel: transformer_forward.2
$region0: #{transformer_forward.2}
  #allocation0 [shape = 'u32[]', space=smem, size = 0x4, offset = 0x4, fixed_abs, tag = 'smem constant byte address 0x4 - core index']
  #allocation1 [shape = 'u32[72,128]{1,0:T(1,128)}', space=vmem, size = 0x9000, scoped, tag = 'internal scratch']
  %s0 = inlined_call_operand.hbm [shape: f32[32,128], index: 0, kind: input, shape index: {}]
  %s1 = inlined_call_operand.vmem [shape: f32[2,1,128], index: 1, kind: input, shape index: {}]
  %s2 = inlined_call_operand.hbm [shape: bf16[2,128,384], index: 2, kind: input, shape index: {}]
  %s3 = inlined_call_operand.hbm [shape: bf16[2,128,128], index: 3, kind: input, shape index: {}]
  %s4 = inlined_call_operand.hbm [shape: f32[2,1,128], index: 4, kind: input, shape index: {}]
  %s5 = inlined_call_operand.hbm [shape: bf16[2,128,768], index: 5, kind: input, shape index: {}]
  %s6 = inlined_call_operand.hbm [shape: bf16[2,384,128], index: 6, kind: input, shape index: {}]
  %s7 = inlined_call_operand.vmem [shape: f32[1,128], index: 7, kind: input, shape index: {}]
  %s8 = inlined_call_operand.hbm [shape: f32[32,128], index: 8, kind: output, shape index: {}]
  %s9 = sld [smem:[#allocation0]]
  $region97: #{transformer_forward.2} parent=0
    _
  %s11 = ssub.s32 1, %s9
  %s12 = scalar_select 0, %s11, %s9
  $region1: #{transformer_forward.2} parent=0
    #allocation2 [shape = 'u8[16384]{0}', space=vmem, size = 0x4000, scoped, tag = 'input window, operand 0, single buffered']
    #allocation3 [shape = 's32[2]{0}', space=sflag, size = 0x8, scoped, tag = 'scoped memory for transformer_forward.2']
    #allocation4 [shape = 's32[2]{0}', space=sflag, size = 0x8, scoped, tag = 'scoped memory for transformer_forward.2']
    #allocation5 [shape = 'u8[196608]{0}', space=vmem, size = 0x30000, scoped, tag = 'input window, operand 2']
    #allocation6 [shape = 's32[2]{0}', space=sflag, size = 0x8, scoped, tag = 'scoped memory for transformer_forward.2']
    #allocation7 [shape = 'u8[65536]{0}', space=vmem, size = 0x10000, scoped, tag = 'input window, operand 3']
    #allocation8 [shape = 'u8[1024]{0}', space=vmem, size = 0x400, scoped, tag = 'input window, operand 4']
    #allocation9 [shape = 's32[2]{0}', space=sflag, size = 0x8, scoped, tag = 'scoped memory for transformer_forward.2']
    #allocation10 [shape = 'u8[393216]{0}', space=vmem, size = 0x60000, scoped, tag = 'input window, operand 5']
    #allocation11 [shape = 'u8[196608]{0}', space=vmem, size = 0x30000, scoped, tag = 'input window, operand 6']
    #allocation12 [shape = 's32[2]{0}', space=sflag, size = 0x8, scoped, tag = 'scoped memory for transformer_forward.2']
    #allocation13 [shape = 'u8[16384]{0}', space=vmem, size = 0x4000, scoped, tag = 'output window, operand 0, single buffered']
    %13 = vsyncpa [#allocation3], 0
    %14 = vsyncpa [#allocation6], 0
    %s15 = scalar_lea.sflag [#allocation6], 1
    %16 = vsyncpa %s15, 0
    %17 = vsyncpa [#allocation9], 0
    %s18 = scalar_lea.sflag [#allocation9], 1
    %19 = vsyncpa %s18, 0
    %20 = vsyncpa [#allocation12], 0
    %s21 = scalar_lea.sflag [#allocation12], 1
    %22 = vsyncpa %s21, 0
    %23 = vsyncpa [#allocation4], 0
    loop: start=0, step=1, limit=4
    $region2: #{transformer_forward.2} parent=1 // loop_pre_header
      _
    $region3: #{transformer_forward.2} parent=1 // loop_header
      %s25 = sphi 0, %s29
      %p26 = scmp.ge.s32.totalorder %s25, 4
      %s33 = sphi 0, %s33
      %s35 = sphi 0, %s33
      %s36 = sphi 0, %s35
      %s50 = sphi 0, %s36
      %s56 = sphi 0, %s58
      %s59 = sphi 0, %s56
      %s60 = sphi 0, %s59
      %s76 = sphi 0, %s60
      %s82 = sphi 0, %s84
      %s85 = sphi 0, %s82
      %s86 = sphi 0, %s85
      %s102 = sphi 0, %s86
      %s108 = sphi 0, %s110
      %s111 = sphi 0, %s108
      %s112 = sphi 0, %s111
      %s128 = sphi 0, %s112
      %s134 = sphi 0, %s136
      %s137 = sphi 0, %s134
      %s138 = sphi 0, %s137
      %s154 = sphi 0, %s138
      %s160 = sphi 0, %s162
      %s163 = sphi 0, %s160
      %s164 = sphi 0, %s163
      %s180 = sphi 0, %s164
      %s186 = sphi 0, %s188
      %s189 = sphi 0, %s186
      %s190 = sphi 0, %s189
      %s206 = sphi 0, %s190
      %s210 = sphi 0, %s210
      %s212 = sphi 0, %s210
      %s213 = sphi 0, %s212
      %s227 = sphi 0, %s213
      %s231 = sphi 0, %s231
      %s233 = sphi 0, %s231
      %s234 = sphi 0, %s233
      %s248 = sphi 0, %s234
    $region4: #{transformer_forward.2} parent=1 // loop_header_branch
      %28 = sbr.rel (%p26) target = $region8
    $region5: #{transformer_forward.2} parent=1 // loop_body
      %s30 = ssub.s32 %s25, 1
      %s31 = ssub.s32 %s25, 2
      %s32 = sadd.s32 %s25, 1
      %s34 = sadd.s32 %s33, 1
      %p37 = scmp.eq.s32.totalorder %s25, 1
      %p38 = scmp.ne.s32.totalorder %s33, %s35
      %p39 = scmp.eq.s32.totalorder %s25, 0
      %p40 = por %p38, %p39
      %p41 = scmp.ne.s32.totalorder %s33, %s35
      %p42 = scmp.eq.s32.totalorder %s30, 1
      %p43 = por %p41, %p42
      %p44 = scmp.ne.s32.totalorder %s35, %s36
      %p45 = scmp.eq.s32.totalorder %s30, 0
      %p46 = por %p44, %p45
      %p47 = scmp.ne.s32.totalorder %s35, %s36
      %p48 = scmp.eq.s32.totalorder %s31, 1
      %p49 = por %p47, %p48
      %p51 = scmp.ne.s32.totalorder %s36, %s50
      %p52 = scmp.eq.s32.totalorder %s31, 0
      %p53 = por %p51, %p52
      %s54 = ssub.s32 %s25, %s32
      %p55 = scmp.eq.s32.totalorder %s54, 0
      %s57 = sadd.s32 %s56, 1
      %s58 = scalar_select %p55, %s56, %s57
      %p61 = pneg %p55
      %p62 = scmp.eq.s32.totalorder %s25, 1
      %p63 = por %p61, %p62
      %p64 = scmp.ne.s32.totalorder %s56, %s59
      %p65 = scmp.eq.s32.totalorder %s25, 0
      %p66 = por %p64, %p65
      %p67 = scmp.ne.s32.totalorder %s56, %s59
      %p68 = scmp.eq.s32.totalorder %s30, 1
      %p69 = por %p67, %p68
      %p70 = scmp.ne.s32.totalorder %s59, %s60
      %p71 = scmp.eq.s32.totalorder %s30, 0
      %p72 = por %p70, %p71
      %p73 = scmp.ne.s32.totalorder %s59, %s60
      %p74 = scmp.eq.s32.totalorder %s31, 1
      %p75 = por %p73, %p74
      %p77 = scmp.ne.s32.totalorder %s60, %s76
      %p78 = scmp.eq.s32.totalorder %s31, 0
      %p79 = por %p77, %p78
      %s80 = ssub.s32 %s25, %s32
      %p81 = scmp.eq.s32.totalorder %s80, 0
      %s83 = sadd.s32 %s82, 1
      %s84 = scalar_select %p81, %s82, %s83
      %p87 = pneg %p81
      %p88 = scmp.eq.s32.totalorder %s25, 1
      %p89 = por %p87, %p88
      %p90 = scmp.ne.s32.totalorder %s82, %s85
      %p91 = scmp.eq.s32.totalorder %s25, 0
      %p92 = por %p90, %p91
      %p93 = scmp.ne.s32.totalorder %s82, %s85
      %p94 = scmp.eq.s32.totalorder %s30, 1
      %p95 = por %p93, %p94
      %p96 = scmp.ne.s32.totalorder %s85, %s86
      %p97 = scmp.eq.s32.totalorder %s30, 0
      %p98 = por %p96, %p97
      %p99 = scmp.ne.s32.totalorder %s85, %s86
      %p100 = scmp.eq.s32.totalorder %s31, 1
      %p101 = por %p99, %p100
      %p103 = scmp.ne.s32.totalorder %s86, %s102
      %p104 = scmp.eq.s32.totalorder %s31, 0
      %p105 = por %p103, %p104
      %s106 = ssub.s32 %s25, %s32
      %p107 = scmp.eq.s32.totalorder %s106, 0
      %s109 = sadd.s32 %s108, 1
      %s110 = scalar_select %p107, %s108, %s109
      %p113 = pneg %p107
      %p114 = scmp.eq.s32.totalorder %s25, 1
      %p115 = por %p113, %p114
      %p116 = scmp.ne.s32.totalorder %s108, %s111
      %p117 = scmp.eq.s32.totalorder %s25, 0
      %p118 = por %p116, %p117
      %p119 = scmp.ne.s32.totalorder %s108, %s111
      %p120 = scmp.eq.s32.totalorder %s30, 1
      %p121 = por %p119, %p120
      %p122 = scmp.ne.s32.totalorder %s111, %s112
      %p123 = scmp.eq.s32.totalorder %s30, 0
      %p124 = por %p122, %p123
      %p125 = scmp.ne.s32.totalorder %s111, %s112
      %p126 = scmp.eq.s32.totalorder %s31, 1
      %p127 = por %p125, %p126
      %p129 = scmp.ne.s32.totalorder %s112, %s128
      %p130 = scmp.eq.s32.totalorder %s31, 0
      %p131 = por %p129, %p130
      %s132 = ssub.s32 %s25, %s32
      %p133 = scmp.eq.s32.totalorder %s132, 0
      %s135 = sadd.s32 %s134, 1
      %s136 = scalar_select %p133, %s134, %s135
      %p139 = pneg %p133
      %p140 = scmp.eq.s32.totalorder %s25, 1
      %p141 = por %p139, %p140
      %p142 = scmp.ne.s32.totalorder %s134, %s137
      %p143 = scmp.eq.s32.totalorder %s25, 0
      %p144 = por %p142, %p143
      %p145 = scmp.ne.s32.totalorder %s134, %s137
      %p146 = scmp.eq.s32.totalorder %s30, 1
      %p147 = por %p145, %p146
      %p148 = scmp.ne.s32.totalorder %s137, %s138
      %p149 = scmp.eq.s32.totalorder %s30, 0
      %p150 = por %p148, %p149
      %p151 = scmp.ne.s32.totalorder %s137, %s138
      %p152 = scmp.eq.s32.totalorder %s31, 1
      %p153 = por %p151, %p152
      %p155 = scmp.ne.s32.totalorder %s138, %s154
      %p156 = scmp.eq.s32.totalorder %s31, 0
      %p157 = por %p155, %p156
      %s158 = ssub.s32 %s25, %s32
      %p159 = scmp.eq.s32.totalorder %s158, 0
      %s161 = sadd.s32 %s160, 1
      %s162 = scalar_select %p159, %s160, %s161
      %p165 = pneg %p159
      %p166 = scmp.eq.s32.totalorder %s25, 1
      %p167 = por %p165, %p166
      %p168 = scmp.ne.s32.totalorder %s160, %s163
      %p169 = scmp.eq.s32.totalorder %s25, 0
      %p170 = por %p168, %p169
      %p171 = scmp.ne.s32.totalorder %s160, %s163
      %p172 = scmp.eq.s32.totalorder %s30, 1
      %p173 = por %p171, %p172
      %p174 = scmp.ne.s32.totalorder %s163, %s164
      %p175 = scmp.eq.s32.totalorder %s30, 0
      %p176 = por %p174, %p175
      %p177 = scmp.ne.s32.totalorder %s163, %s164
      %p178 = scmp.eq.s32.totalorder %s31, 1
      %p179 = por %p177, %p178
      %p181 = scmp.ne.s32.totalorder %s164, %s180
      %p182 = scmp.eq.s32.totalorder %s31, 0
      %p183 = por %p181, %p182
      %s184 = ssub.s32 %s25, %s32
      %p185 = scmp.eq.s32.totalorder %s184, 0
      %s187 = sadd.s32 %s186, 1
      %s188 = scalar_select %p185, %s186, %s187
      %p191 = pneg %p185
      %p192 = scmp.eq.s32.totalorder %s25, 1
      %p193 = por %p191, %p192
      %p194 = scmp.ne.s32.totalorder %s186, %s189
      %p195 = scmp.eq.s32.totalorder %s25, 0
      %p196 = por %p194, %p195
      %p197 = scmp.ne.s32.totalorder %s186, %s189
      %p198 = scmp.eq.s32.totalorder %s30, 1
      %p199 = por %p197, %p198
      %p200 = scmp.ne.s32.totalorder %s189, %s190
      %p201 = scmp.eq.s32.totalorder %s30, 0
      %p202 = por %p200, %p201
      %p203 = scmp.ne.s32.totalorder %s189, %s190
      %p204 = scmp.eq.s32.totalorder %s31, 1
      %p205 = por %p203, %p204
      %p207 = scmp.ne.s32.totalorder %s190, %s206
      %p208 = scmp.eq.s32.totalorder %s31, 0
      %p209 = por %p207, %p208
      %s211 = sadd.s32 %s210, 1
      %p214 = scmp.eq.s32.totalorder %s25, 1
      %p215 = scmp.ne.s32.totalorder %s210, %s212
      %p216 = scmp.eq.s32.totalorder %s25, 0
      %p217 = por %p215, %p216
      %p218 = scmp.ne.s32.totalorder %s210, %s212
      %p219 = scmp.eq.s32.totalorder %s30, 1
      %p220 = por %p218, %p219
      %p221 = scmp.ne.s32.totalorder %s212, %s213
      %p222 = scmp.eq.s32.totalorder %s30, 0
      %p223 = por %p221, %p222
      %p224 = scmp.ne.s32.totalorder %s212, %s213
      %p225 = scmp.eq.s32.totalorder %s31, 1
      %p226 = por %p224, %p225
      %p228 = scmp.ne.s32.totalorder %s213, %s227
      %p229 = scmp.eq.s32.totalorder %s31, 0
      %p230 = por %p228, %p229
      %s232 = sadd.s32 %s231, 1
      %p235 = scmp.eq.s32.totalorder %s25, 1
      %p236 = scmp.ne.s32.totalorder %s231, %s233
      %p237 = scmp.eq.s32.totalorder %s25, 0
      %p238 = por %p236, %p237
      %p239 = scmp.ne.s32.totalorder %s231, %s233
      %p240 = scmp.eq.s32.totalorder %s30, 1
      %p241 = por %p239, %p240
      %p242 = scmp.ne.s32.totalorder %s233, %s234
      %p243 = scmp.eq.s32.totalorder %s30, 0
      %p244 = por %p242, %p243
      %p245 = scmp.ne.s32.totalorder %s233, %s234
      %p246 = scmp.eq.s32.totalorder %s31, 1
      %p247 = por %p245, %p246
      %p249 = scmp.ne.s32.totalorder %s234, %s248
      %p250 = scmp.eq.s32.totalorder %s31, 0
      %p251 = por %p249, %p250
      %p252 = scmp.le.s32.totalorder 1, %s25
      %p253 = scmp.lt.s32.totalorder %s25, 3
      %p254 = pnand %p252, %p253
      %p255 = pneg %p254
      // Predicated region
      $region9: #{transformer_forward.2} parent=5 // pred_check
        _
      $region10: #{transformer_forward.2} parent=5 // pred_check_branch
        %257 = sbr.rel (%p254) target = $region12
      $region11: #{transformer_forward.2} parent=5 // pred_region
        %s258 = ssub.s32 %s25, 1
        // Predicated region
        $region13: #{transformer_forward.2} parent=11 // pred_check
          %p259 = pneg %p46
        $region14: #{transformer_forward.2} parent=11 // pred_check_branch
          %261 = sbr.rel (%p259) target = $region16
        $region15: #{transformer_forward.2} parent=11 // pred_region
          %263 = vsyncadd [#allocation3], 0
          %s264 = sshll.u32 %s0, 4
          %s265 = int_to_ptr.hbm [resolvable:$true] %s264
          %s266 = sshll.u32 [#allocation2], 4
          %s267 = int_to_ptr.vmem [resolvable:$true] %s266
          %272 = dma.hbm_to_vmem [thread:$0]  %s265, 512, %s267, [#allocation3], 128, 128, 8
        $region16: #{transformer_forward.2} parent=11 // pred_fallthru
          _
        // Predicated region
        $region17: #{transformer_forward.2} parent=11 // pred_check
          %p273 = pneg %p223
        $region18: #{transformer_forward.2} parent=11 // pred_check_branch
          %275 = sbr.rel (%p273) target = $region20
        $region19: #{transformer_forward.2} parent=11 // pred_region
          _
        $region20: #{transformer_forward.2} parent=11 // pred_fallthru
          _
      $region12: #{transformer_forward.2} parent=5 // pred_fallthru
        _
      %p276 = scmp.lt.s32.totalorder %s25, 2
      // Predicated region
      $region21: #{transformer_forward.2} parent=5 // pred_check
        %p277 = pneg %p276
      $region22: #{transformer_forward.2} parent=5 // pred_check_branch
        %279 = sbr.rel (%p277) target = $region24
      $region23: #{transformer_forward.2} parent=5 // pred_region
        // Predicated region
        $region25: #{transformer_forward.2} parent=23 // pred_check
          %p280 = pneg %p66
        $region26: #{transformer_forward.2} parent=23 // pred_check_branch
          %282 = sbr.rel (%p280) target = $region28
        $region27: #{transformer_forward.2} parent=23 // pred_region
          %p283 = scmp.lt.s32.totalorder %s25, 1
          %s284 = scalar_select %p283, %s25, 1
          %s285 = scalar_lea.vmem %s1, %s284
        $region28: #{transformer_forward.2} parent=23 // pred_fallthru
          _
        // Predicated region
        $region29: #{transformer_forward.2} parent=23 // pred_check
          %p286 = pneg %p92
        $region30: #{transformer_forward.2} parent=23 // pred_check_branch
          %288 = sbr.rel (%p286) target = $region32
        $region31: #{transformer_forward.2} parent=23 // pred_region
          %s289 = sand.u32 %s25, 1
          %s290 = scalar_lea.sflag [#allocation6], %s289
          %s291 = sand.u32 %s82, 1
          %s292 = smul.addr %s291, 192
          %s293 = scalar_lea.vmem [#allocation5], %s292
          %295 = vsyncadd %s290, 0
          %s296 = smul.addr %s25, 48
          %s297 = smul.addr %s296, 4
          %s298 = scalar_lea.hbm %s2, %s297
          %s299 = sshll.u32 %s298, 4
          %s300 = int_to_ptr.hbm [resolvable:$true] %s299
          %s301 = sshll.u32 %s293, 4
          %s302 = int_to_ptr.vmem [resolvable:$true] %s301
          %307 = dma.hbm_to_vmem [thread:$0]  %s300, 3072, %s302, %s290, 192, 192, 12
        $region32: #{transformer_forward.2} parent=23 // pred_fallthru
          _
        // Predicated region
        $region33: #{transformer_forward.2} parent=23 // pred_check
          %p308 = pneg %p118
        $region34: #{transformer_forward.2} parent=23 // pred_check_branch
          %310 = sbr.rel (%p308) target = $region36
        $region35: #{transformer_forward.2} parent=23 // pred_region
          %s311 = sand.u32 %s25, 1
          %s312 = scalar_lea.sflag [#allocation6], %s311
          %s313 = sand.u32 %s108, 1
          %s314 = smul.addr %s313, 64
          %s315 = scalar_lea.vmem [#allocation7], %s314
          %317 = vsyncadd %s312, 0
          %s318 = smul.addr %s25, 16
          %s319 = smul.addr %s318, 4
          %s320 = scalar_lea.hbm %s3, %s319
          %s321 = sshll.u32 %s320, 4
          %s322 = int_to_ptr.hbm [resolvable:$true] %s321
          %s323 = sshll.u32 %s315, 4
          %s324 = int_to_ptr.vmem [resolvable:$true] %s323
          %329 = dma.hbm_to_vmem [thread:$0]  %s322, 1024, %s324, %s312, 64, 64, 4
        $region36: #{transformer_forward.2} parent=23 // pred_fallthru
          _
        // Predicated region
        $region37: #{transformer_forward.2} parent=23 // pred_check
          %p330 = pneg %p144
        $region38: #{transformer_forward.2} parent=23 // pred_check_branch
          %332 = sbr.rel (%p330) target = $region40
        $region39: #{transformer_forward.2} parent=23 // pred_region
          %s333 = sand.u32 %s25, 1
          %s334 = scalar_lea.sflag [#allocation9], %s333
          %s335 = sand.u32 %s134, 1
          %s336 = scalar_lea.vmem [#allocation8], %s335
          %338 = vsyncadd %s334, 0
          %s339 = scalar_lea.hbm %s4, %s25
          %s341 = sshll.u32 %s339, 4
          %s342 = int_to_ptr.hbm [resolvable:$true] %s341
          %s343 = sshll.u32 %s336, 4
          %s344 = int_to_ptr.vmem [resolvable:$true] %s343
          %346 = dma.hbm_to_vmem [thread:$0]  %s342, 16, %s344, %s334
        $region40: #{transformer_forward.2} parent=23 // pred_fallthru
          _
        // Predicated region
        $region41: #{transformer_forward.2} parent=23 // pred_check
          %p347 = pneg %p170
        $region42: #{transformer_forward.2} parent=23 // pred_check_branch
          %349 = sbr.rel (%p347) target = $region44
        $region43: #{transformer_forward.2} parent=23 // pred_region
          %s350 = sand.u32 %s25, 1
          %s351 = scalar_lea.sflag [#allocation9], %s350
          %s352 = sand.u32 %s160, 1
          %s353 = smul.addr %s352, 384
          %s354 = scalar_lea.vmem [#allocation10], %s353
          %356 = vsyncadd %s351, 0
          %s357 = smul.addr %s25, 96
          %s358 = smul.addr %s357, 4
          %s359 = scalar_lea.hbm %s5, %s358
          %s360 = sshll.u32 %s359, 4
          %s361 = int_to_ptr.hbm [resolvable:$true] %s360
          %s362 = sshll.u32 %s354, 4
          %s363 = int_to_ptr.vmem [resolvable:$true] %s362
          %368 = dma.hbm_to_vmem [thread:$0]  %s361, 6144, %s363, %s351, 384, 384, 24
        $region44: #{transformer_forward.2} parent=23 // pred_fallthru
          _
        // Predicated region
        $region45: #{transformer_forward.2} parent=23 // pred_check
          %p369 = pneg %p196
        $region46: #{transformer_forward.2} parent=23 // pred_check_branch
          %371 = sbr.rel (%p369) target = $region48
        $region47: #{transformer_forward.2} parent=23 // pred_region
          %s372 = sand.u32 %s186, 1
          %s373 = scalar_lea.sflag [#allocation12], %s372
          %s374 = sand.u32 %s186, 1
          %s375 = smul.addr %s374, 192
          %s376 = scalar_lea.vmem [#allocation11], %s375
          %378 = vsyncadd %s373, 0
          %s379 = smul.addr %s25, 48
          %s380 = smul.addr %s379, 4
          %s381 = scalar_lea.hbm %s6, %s380
          %s382 = sshll.u32 %s381, 4
          %s383 = int_to_ptr.hbm [resolvable:$true] %s382
          %s384 = sshll.u32 %s376, 4
          %s385 = int_to_ptr.vmem [resolvable:$true] %s384
          %390 = dma.hbm_to_vmem [thread:$0]  %s383, 3072, %s385, %s373, 64, 64, 4
        $region48: #{transformer_forward.2} parent=23 // pred_fallthru
          _
      $region24: #{transformer_forward.2} parent=5 // pred_fallthru
        _
      %p391 = scmp.le.s32.totalorder 1, %s25
      %p392 = scmp.lt.s32.totalorder %s25, 3
      %p393 = pnand %p391, %p392
      %p394 = pneg %p393
      // Predicated region
      $region49: #{transformer_forward.2} parent=5 // pred_check
        _
      $region50: #{transformer_forward.2} parent=5 // pred_check_branch
        %396 = sbr.rel (%p393) target = $region52
      $region51: #{transformer_forward.2} parent=5 // pred_region
        %s397 = ssub.s32 %s25, 1
        // Predicated region
        $region53: #{transformer_forward.2} parent=51 // pred_check
          %p398 = pneg %p46
        $region54: #{transformer_forward.2} parent=51 // pred_check_branch
          %400 = sbr.rel (%p398) target = $region56
        $region55: #{transformer_forward.2} parent=51 // pred_region
          %402 = dma.done [#allocation3], 512
        $region56: #{transformer_forward.2} parent=51 // pred_fallthru
          _
        %s403 = sand.u32 %s30, 1
        %s404 = scalar_lea.sflag [#allocation6], %s403
        %s405 = sand.u32 %s85, 1
        %s406 = smul.addr %s405, 192
        %s407 = scalar_lea.vmem [#allocation5], %s406
        // Predicated region
        $region57: #{transformer_forward.2} parent=51 // pred_check
          %p408 = pneg %p98
        $region58: #{transformer_forward.2} parent=51 // pred_check_branch
          %410 = sbr.rel (%p408) target = $region60
        $region59: #{transformer_forward.2} parent=51 // pred_region
          %412 = dma.done %s404, 3072
        $region60: #{transformer_forward.2} parent=51 // pred_fallthru
          _
        %s413 = sand.u32 %s30, 1
        %s414 = scalar_lea.sflag [#allocation6], %s413
        %s415 = sand.u32 %s111, 1
        %s416 = smul.addr %s415, 64
        %s417 = scalar_lea.vmem [#allocation7], %s416
        // Predicated region
        $region61: #{transformer_forward.2} parent=51 // pred_check
          %p418 = pneg %p124
        $region62: #{transformer_forward.2} parent=51 // pred_check_branch
          %420 = sbr.rel (%p418) target = $region64
        $region63: #{transformer_forward.2} parent=51 // pred_region
          %422 = dma.done %s414, 1024
        $region64: #{transformer_forward.2} parent=51 // pred_fallthru
          _
        %s423 = sand.u32 %s30, 1
        %s424 = scalar_lea.sflag [#allocation9], %s423
        %s425 = sand.u32 %s137, 1
        %s426 = scalar_lea.vmem [#allocation8], %s425
        // Predicated region
        $region65: #{transformer_forward.2} parent=51 // pred_check
          %p427 = pneg %p150
        $region66: #{transformer_forward.2} parent=51 // pred_check_branch
          %429 = sbr.rel (%p427) target = $region68
        $region67: #{transformer_forward.2} parent=51 // pred_region
          %431 = dma.done %s424, 16
        $region68: #{transformer_forward.2} parent=51 // pred_fallthru
          _
        %s432 = sand.u32 %s30, 1
        %s433 = scalar_lea.sflag [#allocation9], %s432
        %s434 = sand.u32 %s163, 1
        %s435 = smul.addr %s434, 384
        %s436 = scalar_lea.vmem [#allocation10], %s435
        // Predicated region
        $region69: #{transformer_forward.2} parent=51 // pred_check
          %p437 = pneg %p176
        $region70: #{transformer_forward.2} parent=51 // pred_check_branch
          %439 = sbr.rel (%p437) target = $region72
        $region71: #{transformer_forward.2} parent=51 // pred_region
          %441 = dma.done %s433, 6144
        $region72: #{transformer_forward.2} parent=51 // pred_fallthru
          _
        %s442 = sand.u32 %s189, 1
        %s443 = scalar_lea.sflag [#allocation12], %s442
        %s444 = sand.u32 %s189, 1
        %s445 = smul.addr %s444, 192
        %s446 = scalar_lea.vmem [#allocation11], %s445
        // Predicated region
        $region73: #{transformer_forward.2} parent=51 // pred_check
          %p447 = pneg %p202
        $region74: #{transformer_forward.2} parent=51 // pred_check_branch
          %449 = sbr.rel (%p447) target = $region76
        $region75: #{transformer_forward.2} parent=51 // pred_region
          %451 = dma.done %s443, 3072
        $region76: #{transformer_forward.2} parent=51 // pred_fallthru
          _
        %p452 = pneg %p46
        %p453 = pneg %p43
        %p454 = scmp.lt.s32.totalorder %s30, 1
        %s455 = scalar_select %p454, %s30, 1
        %s456 = scalar_lea.vmem %s1, %s455
        %p457 = pneg %p72
        %p458 = pneg %p69
        %s459 = sand.u32 %s30, 1
        %s460 = scalar_lea.sflag [#allocation6], %s459
        %s461 = sand.u32 %s85, 1
        %s462 = smul.addr %s461, 192
        %s463 = scalar_lea.vmem [#allocation5], %s462
        %p464 = pneg %p98
        %p465 = pneg %p95
        %s466 = sand.u32 %s30, 1
        %s467 = scalar_lea.sflag [#allocation6], %s466
        %s468 = sand.u32 %s111, 1
        %s469 = smul.addr %s468, 64
        %s470 = scalar_lea.vmem [#allocation7], %s469
        %p471 = pneg %p124
        %p472 = pneg %p121
        %s473 = sand.u32 %s30, 1
        %s474 = scalar_lea.sflag [#allocation9], %s473
        %s475 = sand.u32 %s137, 1
        %s476 = scalar_lea.vmem [#allocation8], %s475
        %p477 = pneg %p150
        %p478 = pneg %p147
        %s479 = sand.u32 %s30, 1
        %s480 = scalar_lea.sflag [#allocation9], %s479
        %s481 = sand.u32 %s163, 1
        %s482 = smul.addr %s481, 384
        %s483 = scalar_lea.vmem [#allocation10], %s482
        %p484 = pneg %p176
        %p485 = pneg %p173
        %s486 = sand.u32 %s189, 1
        %s487 = scalar_lea.sflag [#allocation12], %s486
        %s488 = sand.u32 %s189, 1
        %s489 = smul.addr %s488, 192
        %s490 = scalar_lea.vmem [#allocation11], %s489
        %p491 = pneg %p202
        %p492 = pneg %p199
        %p493 = pneg %p223
        %p494 = pneg %p220
        %p495 = pneg %p244
        %p496 = pneg %p241
        %p497 = scmp.lt.s32.totalorder %s30, 1
        %s498 = scalar_select %p497, %s30, 1
        %s499 = scalar_lea.vmem %s1, %s498
        %p500 = scmp.eq.s32.totalorder %s30, 0
        // Predicated region
        $region77: #{transformer_forward.2} parent=51 // pred_check
          %p501 = pneg %p500
        $region78: #{transformer_forward.2} parent=51 // pred_check_branch
          %503 = sbr.rel (%p501) target = $region80
        $region79: #{transformer_forward.2} parent=51 // pred_region
          %v504 = vld [vmem:[#allocation2] sm:$0xff]
          %v505 = vld [vmem:[#allocation2 + $0x8] sm:$0xff]
          %v506 = vld [vmem:[#allocation2 + $0x10] sm:$0xff]
          %v507 = vld [vmem:[#allocation2 + $0x18] sm:$0xff]
          %508 = vst [vmem:[#allocation13] sm:$0xff] %v504
          %509 = vst [vmem:[#allocation13 + $0x8] sm:$0xff] %v505
          %510 = vst [vmem:[#allocation13 + $0x10] sm:$0xff] %v506
          %511 = vst [vmem:[#allocation13 + $0x18] sm:$0xff] %v507
        $region80: #{transformer_forward.2} parent=51 // pred_fallthru
          _
        %v512 = vld [vmem:[#allocation13] sm:$0xff]
        %v513 = vld [vmem:[#allocation13 + $0x8] sm:$0xff]
        %v514 = vld [vmem:[#allocation13 + $0x10] sm:$0xff]
        %v515 = vld [vmem:[#allocation13 + $0x18] sm:$0xff]
        %v516 = vld [vmem:[%s499] sm:$0x1]
        %v517 = vmul.f32 %v512, %v512
        %v518 = vmul.f32 %v513, %v513
        %v519 = vmul.f32 %v514, %v514
        %v520 = vmul.f32 %v515, %v515
        %521 = vadd.xlane.f32.xlu0 %v517
        %v522 = vpop.xlane.xlu0 %521
        %523 = vadd.xlane.f32.xlu0 %v518
        %v524 = vpop.xlane.xlu0 %523
        %525 = vadd.xlane.f32.xlu0 %v519
        %v526 = vpop.xlane.xlu0 %525
        %527 = vadd.xlane.f32.xlu0 %v520
        %v528 = vpop.xlane.xlu0 %527
        %v529 = vrcp.pop 128.0
        %v530 = vmul.f32 128.0, %v529
        %v531 = vsub.f32 1.0, %v530
        %v532 = vmul.f32 %v529, %v531
        %v533 = vadd.f32 %v529, %v532
        %vm534 = vweird.f32 %v529
        %v535 = vsel %vm534, %v529, %v533
        %v536 = vmul.f32 %v522, %v535
        %v537 = vmul.f32 %v524, %v535
        %v538 = vmul.f32 %v526, %v535
        %v539 = vmul.f32 %v528, %v535
        %v540 = vadd.f32 %v536, 1e-06
        %v541 = vadd.f32 %v537, 1e-06
        %v542 = vadd.f32 %v538, 1e-06
        %v543 = vadd.f32 %v539, 1e-06
        %v544 = vrsqrt.pop %v540
        %v545 = vmul.f32 %v544, %v540
        %v546 = vmul.f32 %v545, %v544
        %v547 = vmul.f32 0.5, %v546
        %v548 = vsub.f32 1.5, %v547
        %v549 = vmul.f32 %v544, %v548
        %vm550 = vweird.f32 %v540
        %vm551 = vweird.f32 %v544
        %vm552 = vmor %vm550, %vm551
        %v553 = vsel %vm552, %v544, %v549
        %v554 = vrsqrt.pop %v541
        %v555 = vmul.f32 %v554, %v541
        %v556 = vmul.f32 %v555, %v554
        %v557 = vmul.f32 0.5, %v556
        %v558 = vsub.f32 1.5, %v557
        %v559 = vmul.f32 %v554, %v558
        %vm560 = vweird.f32 %v541
        %vm561 = vweird.f32 %v554
        %vm562 = vmor %vm560, %vm561
        %v563 = vsel %vm562, %v554, %v559
        %v564 = vrsqrt.pop %v542
        %v565 = vmul.f32 %v564, %v542
        %v566 = vmul.f32 %v565, %v564
        %v567 = vmul.f32 0.5, %v566
        %v568 = vsub.f32 1.5, %v567
        %v569 = vmul.f32 %v564, %v568
        %vm570 = vweird.f32 %v542
        %vm571 = vweird.f32 %v564
        %vm572 = vmor %vm570, %vm571
        %v573 = vsel %vm572, %v564, %v569
        %v574 = vrsqrt.pop %v543
        %v575 = vmul.f32 %v574, %v543
        %v576 = vmul.f32 %v575, %v574
        %v577 = vmul.f32 0.5, %v576
        %v578 = vsub.f32 1.5, %v577
        %v579 = vmul.f32 %v574, %v578
        %vm580 = vweird.f32 %v543
        %vm581 = vweird.f32 %v574
        %vm582 = vmor %vm580, %vm581
        %v583 = vsel %vm582, %v574, %v579
        %v584 = vmul.f32 %v512, %v553
        %v585 = vmul.f32 %v513, %v563
        %v586 = vmul.f32 %v514, %v573
        %v587 = vmul.f32 %v515, %v583
        %v589 = vperm.slane %v516, 0
        %v591 = vmul.f32 %v584, %v589
        %v592 = vmul.f32 %v585, %v589
        %v593 = vmul.f32 %v586, %v589
        %v594 = vmul.f32 %v587, %v589
        %v595 = vpack.c.bf16 %v592, %v591
        %v596 = vpack.c.bf16 %v594, %v593
        %v597 = vld [vmem:[%s407] sm:$0xff]
        %v598 = vld [vmem:[%s407 + $0x8] sm:$0xf]
        %v599 = vld [vmem:[%s407 + $0xc] sm:$0xff]
        %v600 = vld [vmem:[%s407 + $0x14] sm:$0xf]
        %v601 = vld [vmem:[%s407 + $0x18] sm:$0xff]
        %v602 = vld [vmem:[%s407 + $0x20] sm:$0xf]
        %v603 = vld [vmem:[%s407 + $0x24] sm:$0xff]
        %v604 = vld [vmem:[%s407 + $0x2c] sm:$0xf]
        %v605 = vld [vmem:[%s407 + $0x30] sm:$0xff]
        %v606 = vld [vmem:[%s407 + $0x38] sm:$0xf]
        %v607 = vld [vmem:[%s407 + $0x3c] sm:$0xff]
        %v608 = vld [vmem:[%s407 + $0x44] sm:$0xf]
        %v609 = vld [vmem:[%s407 + $0x48] sm:$0xff]
        %v610 = vld [vmem:[%s407 + $0x50] sm:$0xf]
        %v611 = vld [vmem:[%s407 + $0x54] sm:$0xff]
        %v612 = vld [vmem:[%s407 + $0x5c] sm:$0xf]
        %v613 = vld [vmem:[%s407 + $0x60] sm:$0xff]
        %v614 = vld [vmem:[%s407 + $0x68] sm:$0xf]
        %v615 = vld [vmem:[%s407 + $0x6c] sm:$0xff]
        %v616 = vld [vmem:[%s407 + $0x74] sm:$0xf]
        %v617 = vld [vmem:[%s407 + $0x78] sm:$0xff]
        %v618 = vld [vmem:[%s407 + $0x80] sm:$0xf]
        %v619 = vld [vmem:[%s407 + $0x84] sm:$0xff]
        %v620 = vld [vmem:[%s407 + $0x8c] sm:$0xf]
        %v621 = vld [vmem:[%s407 + $0x90] sm:$0xff]
        %v622 = vld [vmem:[%s407 + $0x98] sm:$0xf]
        %v623 = vld [vmem:[%s407 + $0x9c] sm:$0xff]
        %v624 = vld [vmem:[%s407 + $0xa4] sm:$0xf]
        %v625 = vld [vmem:[%s407 + $0xa8] sm:$0xff]
        %v626 = vld [vmem:[%s407 + $0xb0] sm:$0xf]
        %v627 = vld [vmem:[%s407 + $0xb4] sm:$0xff]
        %v628 = vld [vmem:[%s407 + $0xbc] sm:$0xf]
        %v661 = vunpack.c.l.b16 %v597
        %v662 = vunpack.c.h.b16 %v597
        %v663 = vunpack.c.l.b16 %v598
        %v664 = vunpack.c.l.b16 %v599
        %v665 = vunpack.c.h.b16 %v599
        %v666 = vunpack.c.l.b16 %v600
        %v667 = vunpack.c.l.b16 %v601
        %v668 = vunpack.c.h.b16 %v601
        %v669 = vunpack.c.l.b16 %v602
        %v670 = vunpack.c.l.b16 %v603
        %v671 = vunpack.c.h.b16 %v603
        %v672 = vunpack.c.l.b16 %v604
        %v673 = vunpack.c.l.b16 %v605
        %v674 = vunpack.c.h.b16 %v605
        %v675 = vunpack.c.l.b16 %v606
        %v676 = vunpack.c.l.b16 %v607
        %v677 = vunpack.c.h.b16 %v607
        %v678 = vunpack.c.l.b16 %v608
        %v679 = vunpack.c.l.b16 %v609
        %v680 = vunpack.c.h.b16 %v609
        %v681 = vunpack.c.l.b16 %v610
        %v682 = vunpack.c.l.b16 %v611
        %v683 = vunpack.c.h.b16 %v611
        %v684 = vunpack.c.l.b16 %v612
        %v685 = vunpack.c.l.b16 %v613
        %v686 = vunpack.c.h.b16 %v613
        %v687 = vunpack.c.l.b16 %v614
        %v688 = vunpack.c.l.b16 %v615
        %v689 = vunpack.c.h.b16 %v615
        %v690 = vunpack.c.l.b16 %v616
        %v691 = vunpack.c.l.b16 %v617
        %v692 = vunpack.c.h.b16 %v617
        %v693 = vunpack.c.l.b16 %v618
        %v694 = vunpack.c.l.b16 %v619
        %v695 = vunpack.c.h.b16 %v619
        %v696 = vunpack.c.l.b16 %v620
        %v697 = vunpack.c.l.b16 %v621
        %v698 = vunpack.c.h.b16 %v621
        %v699 = vunpack.c.l.b16 %v622
        %v700 = vunpack.c.l.b16 %v623
        %v701 = vunpack.c.h.b16 %v623
        %v702 = vunpack.c.l.b16 %v624
        %v703 = vunpack.c.l.b16 %v625
        %v704 = vunpack.c.h.b16 %v625
        %v705 = vunpack.c.l.b16 %v626
        %v706 = vunpack.c.l.b16 %v627
        %v707 = vunpack.c.h.b16 %v627
        %v708 = vunpack.c.l.b16 %v628
        %v709 = vpack.c.b16 %v664, %v661
        %v710 = vpack.c.b16 %v665, %v662
        %v711 = vpack.c.b16 %v666, %v663
        %v712 = vpack.c.b16 %v670, %v667
        %v713 = vpack.c.b16 %v671, %v668
        %v714 = vpack.c.b16 %v672, %v669
        %v715 = vpack.c.b16 %v676, %v673
        %v716 = vpack.c.b16 %v677, %v674
        %v717 = vpack.c.b16 %v678, %v675
        %v718 = vpack.c.b16 %v682, %v679
        %v719 = vpack.c.b16 %v683, %v680
        %v720 = vpack.c.b16 %v684, %v681
        %v721 = vpack.c.b16 %v688, %v685
        %v722 = vpack.c.b16 %v689, %v686
        %v723 = vpack.c.b16 %v690, %v687
        %v724 = vpack.c.b16 %v694, %v691
        %v725 = vpack.c.b16 %v695, %v692
        %v726 = vpack.c.b16 %v696, %v693
        %v727 = vpack.c.b16 %v700, %v697
        %v728 = vpack.c.b16 %v701, %v698
        %v729 = vpack.c.b16 %v702, %v699
        %v730 = vpack.c.b16 %v706, %v703
        %v731 = vpack.c.b16 %v707, %v704
        %v732 = vpack.c.b16 %v708, %v705
        %757 = vmatpush.bf16.msra.mxu0 %v730
        %758 = vmatpush.bf16.msra.mxu0 %v727
        %759 = vmatpush.bf16.msra.mxu0 %v724
        %760 = vmatpush.bf16.msra.mxu0 %v721
        %761 = vmatpush.bf16.msra.mxu0 %v718
        %762 = vmatpush.bf16.msra.mxu0 %v715
        %763 = vmatpush.bf16.msra.mxu0 %v712
        %764 = vmatpush.bf16.msra.mxu0 %v709
        %765 = vmatmul.bf16.gmra.mxu0 %v595
        %v766 = vpop.f32.mrf.mxu0
        %v767 = vadd.f32 0.0, %v766
        %v768 = vpop.f32.mrf.mxu0
        %v769 = vadd.f32 0.0, %v768
        %770 = vmatmul.bf16.gmra.mxu0 %v596
        %v771 = vpop.f32.mrf.mxu0
        %v772 = vadd.f32 0.0, %v771
        %v773 = vpop.f32.mrf.mxu0
        %v774 = vadd.f32 0.0, %v773
        %775 = vdwg.mxu0
        %776 = vmatpush.bf16.msra.mxu0 %v731
        %777 = vmatpush.bf16.msra.mxu0 %v728
        %778 = vmatpush.bf16.msra.mxu0 %v725
        %779 = vmatpush.bf16.msra.mxu0 %v722
        %780 = vmatpush.bf16.msra.mxu0 %v719
        %781 = vmatpush.bf16.msra.mxu0 %v716
        %782 = vmatpush.bf16.msra.mxu0 %v713
        %783 = vmatpush.bf16.msra.mxu0 %v710
        %784 = vmatmul.bf16.gmra.mxu0 %v595
        %v785 = vpop.f32.mrf.mxu0
        %v786 = vadd.f32 0.0, %v785
        %v787 = vpop.f32.mrf.mxu0
        %v788 = vadd.f32 0.0, %v787
        %789 = vmatmul.bf16.gmra.mxu0 %v596
        %v790 = vpop.f32.mrf.mxu0
        %v791 = vadd.f32 0.0, %v790
        %v792 = vpop.f32.mrf.mxu0
        %v793 = vadd.f32 0.0, %v792
        %794 = vdwg.mxu0
        %795 = vmatpush.bf16.msra.mxu0 %v732
        %796 = vmatpush.bf16.msra.mxu0 %v729
        %797 = vmatpush.bf16.msra.mxu0 %v726
        %798 = vmatpush.bf16.msra.mxu0 %v723
        %799 = vmatpush.bf16.msra.mxu0 %v720
        %800 = vmatpush.bf16.msra.mxu0 %v717
        %801 = vmatpush.bf16.msra.mxu0 %v714
        %802 = vmatpush.bf16.msra.mxu0 %v711
        %803 = vmatmul.bf16.gmra.mxu0 %v595
        %v804 = vpop.f32.mrf.mxu0
        %v805 = vadd.f32 0.0, %v804
        %v806 = vpop.f32.mrf.mxu0
        %v807 = vadd.f32 0.0, %v806
        %808 = vmatmul.bf16.gmra.mxu0 %v596
        %v809 = vpop.f32.mrf.mxu0
        %v810 = vadd.f32 0.0, %v809
        %v811 = vpop.f32.mrf.mxu0
        %v812 = vadd.f32 0.0, %v811
        %813 = vdwg.mxu0
        %vm814 = vcmask 261120
        %v816 = vsel %vm814, %v767, 0
        %v819 = vsel %vm814, %v769, 0
        %v822 = vsel %vm814, %v786, 0
        %v825 = vsel %vm814, %v788, 0
        %827 = vmatpush.xpose.msra.mxu0 0.0
        %828 = vmatpush.xpose.msra.mxu0 0.0
        %829 = vmatpush.xpose.msra.mxu0 0.0
        %830 = vmatpush.xpose.msra.mxu0 0.0
        %831 = vmatpush.xpose.msra.mxu0 0.0
        %832 = vmatpush.xpose.msra.mxu0 0.0
        %833 = vmatpush.xpose.msra.mxu0 0.0
        %834 = vmatpush.xpose.msra.mxu0 0.0
        %835 = vmatpush.xpose.msra.mxu0 0.0
        %836 = vmatpush.xpose.msra.mxu0 0.0
        %837 = vmatpush.xpose.msra.mxu0 0.0
        %838 = vmatpush.xpose.msra.mxu0 0.0
        %839 = vmatpush.xpose.msra.mxu0 0.0
        %840 = vmatpush.xpose.msra.mxu0 0.0
        %841 = vmatpush.xpose.msra.mxu0 %v825
        %842 = vmatpush.xpose.msra.mxu0 %v822
        %843 = vmatmul.f32.gmra.mxu0 %v816
        %v844 = vpop.f32.mrf.mxu0
        %v845 = vadd.f32 0.0, %v844
        %846 = vmatmul.f32.gmra.mxu0 %v819
        %v847 = vpop.f32.mrf.mxu0
        %v848 = vadd.f32 0.0, %v847
        %849 = vdwg.mxu0
        %vm850 = vcmask 130048
        %v851 = vsel %vm850, %v845, -inf
        %852 = vmax.xlane.f32.xlu0 %v851
        %v853 = vpop.xlane.xlu0 %852
        %v854 = vsel %vm850, %v848, -inf
        %855 = vmax.xlane.f32.xlu0 %v854
        %v856 = vpop.xlane.xlu0 %855
        %v857 = vsub.f32 %v845, %v853
        %v858 = vsub.f32 %v848, %v856
        %v859 = vmul.f32 %v857, 1.442695
        %v860 = vpow.pop %v859
        %v861 = vmul.f32 %v858, 1.442695
        %v862 = vpow.pop %v861
        %v863 = vsel %vm850, %v860, 0.0
        %864 = vadd.xlane.f32.xlu0 %v863
        %v865 = vpop.xlane.xlu0 %864
        %v866 = vsel %vm850, %v862, 0.0
        %867 = vadd.xlane.f32.xlu0 %v866
        %v868 = vpop.xlane.xlu0 %867
        %v869 = vrcp.pop %v865
        %v870 = vrcp.pop %v868
        %v871 = vmul.f32 %v860, %v869
        %v872 = vmul.f32 %v862, %v870
        %v874 = vsel %vm850, %v871, 0
        %v877 = vsel %vm850, %v872, 0
        %879 = vmatpush.msra.mxu0 0.0
        %880 = vmatpush.msra.mxu0 0.0
        %881 = vmatpush.msra.mxu0 0.0
        %882 = vmatpush.msra.mxu0 0.0
        %883 = vmatpush.msra.mxu0 0.0
        %884 = vmatpush.msra.mxu0 0.0
        %885 = vmatpush.msra.mxu0 0.0
        %886 = vmatpush.msra.mxu0 0.0
        %887 = vmatpush.msra.mxu0 0.0
        %888 = vmatpush.msra.mxu0 0.0
        %889 = vmatpush.msra.mxu0 0.0
        %890 = vmatpush.msra.mxu0 0.0
        %891 = vmatpush.msra.mxu0 0.0
        %892 = vmatpush.msra.mxu0 0.0
        %893 = vmatpush.msra.mxu0 %v807
        %894 = vmatpush.msra.mxu0 %v805
        %895 = vmatmul.f32.gmra.mxu0 %v874
        %v896 = vpop.f32.mrf.mxu0
        %v897 = vadd.f32 0.0, %v896
        %898 = vmatmul.f32.gmra.mxu0 %v877
        %v899 = vpop.f32.mrf.mxu0
        %v900 = vadd.f32 0.0, %v899
        %901 = vdwg.mxu0
        %902 = vrot.lane.b32.xlu0 %v767, 96
        %v903 = vpop.permute.xlu0 %902
        %904 = vrot.lane.b32.xlu0 %v769, 96
        %v905 = vpop.permute.xlu0 %904
        %906 = vrot.lane.b32.xlu0 %v786, 96
        %v907 = vpop.permute.xlu0 %906
        %908 = vrot.lane.b32.xlu0 %v788, 96
        %v909 = vpop.permute.xlu0 %908
        %v910 = vsel %vm814, %v903, 0
        %v912 = vsel %vm814, %v905, 0
        %v914 = vsel %vm814, %v907, 0
        %v916 = vsel %vm814, %v909, 0
        %918 = vmatpush.xpose.msra.mxu0 0.0
        %919 = vmatpush.xpose.msra.mxu0 0.0
        %920 = vmatpush.xpose.msra.mxu0 0.0
        %921 = vmatpush.xpose.msra.mxu0 0.0
        %922 = vmatpush.xpose.msra.mxu0 0.0
        %923 = vmatpush.xpose.msra.mxu0 0.0
        %924 = vmatpush.xpose.msra.mxu0 0.0
        %925 = vmatpush.xpose.msra.mxu0 0.0
        %926 = vmatpush.xpose.msra.mxu0 0.0
        %927 = vmatpush.xpose.msra.mxu0 0.0
        %928 = vmatpush.xpose.msra.mxu0 0.0
        %929 = vmatpush.xpose.msra.mxu0 0.0
        %930 = vmatpush.xpose.msra.mxu0 0.0
        %931 = vmatpush.xpose.msra.mxu0 0.0
        %932 = vmatpush.xpose.msra.mxu0 %v916
        %933 = vmatpush.xpose.msra.mxu0 %v914
        %934 = vmatmul.f32.gmra.mxu0 %v910
        %v935 = vpop.f32.mrf.mxu0
        %v936 = vadd.f32 0.0, %v935
        %937 = vmatmul.f32.gmra.mxu0 %v912
        %v938 = vpop.f32.mrf.mxu0
        %v939 = vadd.f32 0.0, %v938
        %940 = vdwg.mxu0
        %v941 = vsel %vm850, %v936, -inf
        %942 = vmax.xlane.f32.xlu0 %v941
        %v943 = vpop.xlane.xlu0 %942
        %v944 = vsel %vm850, %v939, -inf
        %945 = vmax.xlane.f32.xlu0 %v944
        %v946 = vpop.xlane.xlu0 %945
        %v947 = vsub.f32 %v936, %v943
        %v948 = vsub.f32 %v939, %v946
        %v949 = vmul.f32 %v947, 1.442695
        %v950 = vpow.pop %v949
        %v951 = vmul.f32 %v948, 1.442695
        %v952 = vpow.pop %v951
        %v953 = vsel %vm850, %v950, 0.0
        %954 = vadd.xlane.f32.xlu0 %v953
        %v955 = vpop.xlane.xlu0 %954
        %v956 = vsel %vm850, %v952, 0.0
        %957 = vadd.xlane.f32.xlu0 %v956
        %v958 = vpop.xlane.xlu0 %957
        %v959 = vrcp.pop %v955
        %v960 = vrcp.pop %v958
        %v961 = vmul.f32 %v950, %v959
        %v962 = vmul.f32 %v952, %v960
        %965 = vrot.lane.b32.xlu0 %v805, 96
        %v966 = vpop.permute.xlu0 %965
        %967 = vrot.lane.b32.xlu0 %v807, 96
        %v968 = vpop.permute.xlu0 %967
        %v972 = vsel %vm850, %v961, 0
        %v975 = vsel %vm850, %v962, 0
        %977 = vmatpush.msra.mxu0 0.0
        %978 = vmatpush.msra.mxu0 0.0
        %979 = vmatpush.msra.mxu0 0.0
        %980 = vmatpush.msra.mxu0 0.0
        %981 = vmatpush.msra.mxu0 0.0
        %982 = vmatpush.msra.mxu0 0.0
        %983 = vmatpush.msra.mxu0 0.0
        %984 = vmatpush.msra.mxu0 0.0
        %985 = vmatpush.msra.mxu0 0.0
        %986 = vmatpush.msra.mxu0 0.0
        %987 = vmatpush.msra.mxu0 0.0
        %988 = vmatpush.msra.mxu0 0.0
        %989 = vmatpush.msra.mxu0 0.0
        %990 = vmatpush.msra.mxu0 0.0
        %991 = vmatpush.msra.mxu0 %v968
        %992 = vmatpush.msra.mxu0 %v966
        %993 = vmatmul.f32.gmra.mxu0 %v972
        %v994 = vpop.f32.mrf.mxu0
        %v995 = vadd.f32 0.0, %v994
        %996 = vmatmul.f32.gmra.mxu0 %v975
        %v997 = vpop.f32.mrf.mxu0
        %v998 = vadd.f32 0.0, %v997
        %999 = vdwg.mxu0
        %1000 = vrot.lane.b32.xlu0 %v767, 64
        %v1001 = vpop.permute.xlu0 %1000
        %1002 = vrot.lane.b32.xlu0 %v769, 64
        %v1003 = vpop.permute.xlu0 %1002
        %1004 = vrot.lane.b32.xlu0 %v786, 64
        %v1005 = vpop.permute.xlu0 %1004
        %1006 = vrot.lane.b32.xlu0 %v788, 64
        %v1007 = vpop.permute.xlu0 %1006
        %v1008 = vsel %vm814, %v1001, 0
        %v1010 = vsel %vm814, %v1003, 0
        %v1012 = vsel %vm814, %v1005, 0
        %v1014 = vsel %vm814, %v1007, 0
        %1016 = vmatpush.xpose.msra.mxu0 0.0
        %1017 = vmatpush.xpose.msra.mxu0 0.0
        %1018 = vmatpush.xpose.msra.mxu0 0.0
        %1019 = vmatpush.xpose.msra.mxu0 0.0
        %1020 = vmatpush.xpose.msra.mxu0 0.0
        %1021 = vmatpush.xpose.msra.mxu0 0.0
        %1022 = vmatpush.xpose.msra.mxu0 0.0
        %1023 = vmatpush.xpose.msra.mxu0 0.0
        %1024 = vmatpush.xpose.msra.mxu0 0.0
        %1025 = vmatpush.xpose.msra.mxu0 0.0
        %1026 = vmatpush.xpose.msra.mxu0 0.0
        %1027 = vmatpush.xpose.msra.mxu0 0.0
        %1028 = vmatpush.xpose.msra.mxu0 0.0
        %1029 = vmatpush.xpose.msra.mxu0 0.0
        %1030 = vmatpush.xpose.msra.mxu0 %v1014
        %1031 = vmatpush.xpose.msra.mxu0 %v1012
        %1032 = vmatmul.f32.gmra.mxu0 %v1008
        %v1033 = vpop.f32.mrf.mxu0
        %v1034 = vadd.f32 0.0, %v1033
        %1035 = vmatmul.f32.gmra.mxu0 %v1010
        %v1036 = vpop.f32.mrf.mxu0
        %v1037 = vadd.f32 0.0, %v1036
        %1038 = vdwg.mxu0
        %v1039 = vsel %vm850, %v1034, -inf
        %1040 = vmax.xlane.f32.xlu0 %v1039
        %v1041 = vpop.xlane.xlu0 %1040
        %v1042 = vsel %vm850, %v1037, -inf
        %1043 = vmax.xlane.f32.xlu0 %v1042
        %v1044 = vpop.xlane.xlu0 %1043
        %v1045 = vsub.f32 %v1034, %v1041
        %v1046 = vsub.f32 %v1037, %v1044
        %v1047 = vmul.f32 %v1045, 1.442695
        %v1048 = vpow.pop %v1047
        %v1049 = vmul.f32 %v1046, 1.442695
        %v1050 = vpow.pop %v1049
        %v1051 = vsel %vm850, %v1048, 0.0
        %1052 = vadd.xlane.f32.xlu0 %v1051
        %v1053 = vpop.xlane.xlu0 %1052
        %v1054 = vsel %vm850, %v1050, 0.0
        %1055 = vadd.xlane.f32.xlu0 %v1054
        %v1056 = vpop.xlane.xlu0 %1055
        %v1057 = vrcp.pop %v1053
        %v1058 = vrcp.pop %v1056
        %v1059 = vmul.f32 %v1048, %v1057
        %v1060 = vmul.f32 %v1050, %v1058
        %1061 = vrot.lane.b32.xlu0 %v805, 64
        %v1062 = vpop.permute.xlu0 %1061
        %1063 = vrot.lane.b32.xlu0 %v807, 64
        %v1064 = vpop.permute.xlu0 %1063
        %v1068 = vsel %vm850, %v1059, 0
        %v1071 = vsel %vm850, %v1060, 0
        %1073 = vmatpush.msra.mxu0 0.0
        %1074 = vmatpush.msra.mxu0 0.0
        %1075 = vmatpush.msra.mxu0 0.0
        %1076 = vmatpush.msra.mxu0 0.0
        %1077 = vmatpush.msra.mxu0 0.0
        %1078 = vmatpush.msra.mxu0 0.0
        %1079 = vmatpush.msra.mxu0 0.0
        %1080 = vmatpush.msra.mxu0 0.0
        %1081 = vmatpush.msra.mxu0 0.0
        %1082 = vmatpush.msra.mxu0 0.0
        %1083 = vmatpush.msra.mxu0 0.0
        %1084 = vmatpush.msra.mxu0 0.0
        %1085 = vmatpush.msra.mxu0 0.0
        %1086 = vmatpush.msra.mxu0 0.0
        %1087 = vmatpush.msra.mxu0 %v1064
        %1088 = vmatpush.msra.mxu0 %v1062
        %1089 = vmatmul.f32.gmra.mxu0 %v1068
        %v1090 = vpop.f32.mrf.mxu0
        %v1091 = vadd.f32 0.0, %v1090
        %1092 = vmatmul.f32.gmra.mxu0 %v1071
        %v1093 = vpop.f32.mrf.mxu0
        %v1094 = vadd.f32 0.0, %v1093
        %1095 = vdwg.mxu0
        %1096 = vrot.lane.b32.xlu0 %v767, 32
        %v1097 = vpop.permute.xlu0 %1096
        %1098 = vrot.lane.b32.xlu0 %v769, 32
        %v1099 = vpop.permute.xlu0 %1098
        %1100 = vrot.lane.b32.xlu0 %v786, 32
        %v1101 = vpop.permute.xlu0 %1100
        %1102 = vrot.lane.b32.xlu0 %v788, 32
        %v1103 = vpop.permute.xlu0 %1102
        %v1104 = vsel %vm814, %v1097, 0
        %v1106 = vsel %vm814, %v1099, 0
        %v1108 = vsel %vm814, %v1101, 0
        %v1110 = vsel %vm814, %v1103, 0
        %1112 = vmatpush.xpose.msra.mxu0 0.0
        %1113 = vmatpush.xpose.msra.mxu0 0.0
        %1114 = vmatpush.xpose.msra.mxu0 0.0
        %1115 = vmatpush.xpose.msra.mxu0 0.0
        %1116 = vmatpush.xpose.msra.mxu0 0.0
        %1117 = vmatpush.xpose.msra.mxu0 0.0
        %1118 = vmatpush.xpose.msra.mxu0 0.0
        %1119 = vmatpush.xpose.msra.mxu0 0.0
        %1120 = vmatpush.xpose.msra.mxu0 0.0
        %1121 = vmatpush.xpose.msra.mxu0 0.0
        %1122 = vmatpush.xpose.msra.mxu0 0.0
        %1123 = vmatpush.xpose.msra.mxu0 0.0
        %1124 = vmatpush.xpose.msra.mxu0 0.0
        %1125 = vmatpush.xpose.msra.mxu0 0.0
        %1126 = vmatpush.xpose.msra.mxu0 %v1110
        %1127 = vmatpush.xpose.msra.mxu0 %v1108
        %1128 = vmatmul.f32.gmra.mxu0 %v1104
        %v1129 = vpop.f32.mrf.mxu0
        %v1130 = vadd.f32 0.0, %v1129
        %1131 = vmatmul.f32.gmra.mxu0 %v1106
        %v1132 = vpop.f32.mrf.mxu0
        %v1133 = vadd.f32 0.0, %v1132
        %1134 = vdwg.mxu0
        %v1135 = vsel %vm850, %v1130, -inf
        %1136 = vmax.xlane.f32.xlu0 %v1135
        %v1137 = vpop.xlane.xlu0 %1136
        %v1138 = vsel %vm850, %v1133, -inf
        %1139 = vmax.xlane.f32.xlu0 %v1138
        %v1140 = vpop.xlane.xlu0 %1139
        %v1141 = vsub.f32 %v1130, %v1137
        %v1142 = vsub.f32 %v1133, %v1140
        %v1143 = vmul.f32 %v1141, 1.442695
        %v1144 = vpow.pop %v1143
        %v1145 = vmul.f32 %v1142, 1.442695
        %v1146 = vpow.pop %v1145
        %v1147 = vsel %vm850, %v1144, 0.0
        %1148 = vadd.xlane.f32.xlu0 %v1147
        %v1149 = vpop.xlane.xlu0 %1148
        %v1150 = vsel %vm850, %v1146, 0.0
        %1151 = vadd.xlane.f32.xlu0 %v1150
        %v1152 = vpop.xlane.xlu0 %1151
        %v1153 = vrcp.pop %v1149
        %v1154 = vrcp.pop %v1152
        %v1155 = vmul.f32 %v1144, %v1153
        %v1156 = vmul.f32 %v1146, %v1154
        %1157 = vrot.lane.b32.xlu0 %v805, 32
        %v1158 = vpop.permute.xlu0 %1157
        %1159 = vrot.lane.b32.xlu0 %v807, 32
        %v1160 = vpop.permute.xlu0 %1159
        %v1164 = vsel %vm850, %v1155, 0
        %v1167 = vsel %vm850, %v1156, 0
        %1169 = vmatpush.msra.mxu0 0.0
        %1170 = vmatpush.msra.mxu0 0.0
        %1171 = vmatpush.msra.mxu0 0.0
        %1172 = vmatpush.msra.mxu0 0.0
        %1173 = vmatpush.msra.mxu0 0.0
        %1174 = vmatpush.msra.mxu0 0.0
        %1175 = vmatpush.msra.mxu0 0.0
        %1176 = vmatpush.msra.mxu0 0.0
        %1177 = vmatpush.msra.mxu0 0.0
        %1178 = vmatpush.msra.mxu0 0.0
        %1179 = vmatpush.msra.mxu0 0.0
        %1180 = vmatpush.msra.mxu0 0.0
        %1181 = vmatpush.msra.mxu0 0.0
        %1182 = vmatpush.msra.mxu0 0.0
        %1183 = vmatpush.msra.mxu0 %v1160
        %1184 = vmatpush.msra.mxu0 %v1158
        %1185 = vmatmul.f32.gmra.mxu0 %v1164
        %v1186 = vpop.f32.mrf.mxu0
        %v1187 = vadd.f32 0.0, %v1186
        %1188 = vmatmul.f32.gmra.mxu0 %v1167
        %v1189 = vpop.f32.mrf.mxu0
        %v1190 = vadd.f32 0.0, %v1189
        %1191 = vdwg.mxu0
        %1194 = vrot.lane.b32.xlu0 %v995, 32
        %v1195 = vpop.permute.xlu0 %1194
        %1196 = vrot.lane.b32.xlu0 %v998, 32
        %v1197 = vpop.permute.xlu0 %1196
        %1202 = vrot.lane.b32.xlu0 %v1091, 64
        %v1203 = vpop.permute.xlu0 %1202
        %1204 = vrot.lane.b32.xlu0 %v1094, 64
        %v1205 = vpop.permute.xlu0 %1204
        %1210 = vrot.lane.b32.xlu0 %v1187, 96
        %v1211 = vpop.permute.xlu0 %1210
        %1212 = vrot.lane.b32.xlu0 %v1190, 96
        %v1213 = vpop.permute.xlu0 %1212
        %v1216 = vsel %vm814, %v897, %v1195
        %v1217 = vsel %vm814, %v900, %v1197
        %vm1218 = vcmask 523264
        %v1219 = vsel %vm1218, %v1216, %v1203
        %v1220 = vsel %vm1218, %v1217, %v1205
        %vm1221 = vcmask 785408
        %v1222 = vsel %vm1221, %v1219, %v1211
        %v1223 = vsel %vm1221, %v1220, %v1213
        %v1225 = vsel %vm814, %v772, 0
        %v1228 = vsel %vm814, %v774, 0
        %v1231 = vsel %vm814, %v791, 0
        %v1234 = vsel %vm814, %v793, 0
        %1236 = vmatpush.xpose.msra.mxu0 0.0
        %1237 = vmatpush.xpose.msra.mxu0 0.0
        %1238 = vmatpush.xpose.msra.mxu0 0.0
        %1239 = vmatpush.xpose.msra.mxu0 0.0
        %1240 = vmatpush.xpose.msra.mxu0 0.0
        %1241 = vmatpush.xpose.msra.mxu0 0.0
        %1242 = vmatpush.xpose.msra.mxu0 0.0
        %1243 = vmatpush.xpose.msra.mxu0 0.0
        %1244 = vmatpush.xpose.msra.mxu0 0.0
        %1245 = vmatpush.xpose.msra.mxu0 0.0
        %1246 = vmatpush.xpose.msra.mxu0 0.0
        %1247 = vmatpush.xpose.msra.mxu0 0.0
        %1248 = vmatpush.xpose.msra.mxu0 0.0
        %1249 = vmatpush.xpose.msra.mxu0 0.0
        %1250 = vmatpush.xpose.msra.mxu0 %v1234
        %1251 = vmatpush.xpose.msra.mxu0 %v1231
        %1252 = vmatmul.f32.gmra.mxu0 %v1225
        %v1253 = vpop.f32.mrf.mxu0
        %v1254 = vadd.f32 0.0, %v1253
        %1255 = vmatmul.f32.gmra.mxu0 %v1228
        %v1256 = vpop.f32.mrf.mxu0
        %v1257 = vadd.f32 0.0, %v1256
        %1258 = vdwg.mxu0
        %v1259 = vsel %vm850, %v1254, -inf
        %1260 = vmax.xlane.f32.xlu0 %v1259
        %v1261 = vpop.xlane.xlu0 %1260
        %v1262 = vsel %vm850, %v1257, -inf
        %1263 = vmax.xlane.f32.xlu0 %v1262
        %v1264 = vpop.xlane.xlu0 %1263
        %v1265 = vsub.f32 %v1254, %v1261
        %v1266 = vsub.f32 %v1257, %v1264
        %v1267 = vmul.f32 %v1265, 1.442695
        %v1268 = vpow.pop %v1267
        %v1269 = vmul.f32 %v1266, 1.442695
        %v1270 = vpow.pop %v1269
        %v1271 = vsel %vm850, %v1268, 0.0
        %1272 = vadd.xlane.f32.xlu0 %v1271
        %v1273 = vpop.xlane.xlu0 %1272
        %v1274 = vsel %vm850, %v1270, 0.0
        %1275 = vadd.xlane.f32.xlu0 %v1274
        %v1276 = vpop.xlane.xlu0 %1275
        %v1277 = vrcp.pop %v1273
        %v1278 = vrcp.pop %v1276
        %v1279 = vmul.f32 %v1268, %v1277
        %v1280 = vmul.f32 %v1270, %v1278
        %v1282 = vsel %vm850, %v1279, 0
        %v1285 = vsel %vm850, %v1280, 0
        %1287 = vmatpush.msra.mxu0 0.0
        %1288 = vmatpush.msra.mxu0 0.0
        %1289 = vmatpush.msra.mxu0 0.0
        %1290 = vmatpush.msra.mxu0 0.0
        %1291 = vmatpush.msra.mxu0 0.0
        %1292 = vmatpush.msra.mxu0 0.0
        %1293 = vmatpush.msra.mxu0 0.0
        %1294 = vmatpush.msra.mxu0 0.0
        %1295 = vmatpush.msra.mxu0 0.0
        %1296 = vmatpush.msra.mxu0 0.0
        %1297 = vmatpush.msra.mxu0 0.0
        %1298 = vmatpush.msra.mxu0 0.0
        %1299 = vmatpush.msra.mxu0 0.0
        %1300 = vmatpush.msra.mxu0 0.0
        %1301 = vmatpush.msra.mxu0 %v812
        %1302 = vmatpush.msra.mxu0 %v810
        %1303 = vmatmul.f32.gmra.mxu0 %v1282
        %v1304 = vpop.f32.mrf.mxu0
        %v1305 = vadd.f32 0.0, %v1304
        %1306 = vmatmul.f32.gmra.mxu0 %v1285
        %v1307 = vpop.f32.mrf.mxu0
        %v1308 = vadd.f32 0.0, %v1307
        %1309 = vdwg.mxu0
        %1310 = vrot.lane.b32.xlu0 %v772, 96
        %v1311 = vpop.permute.xlu0 %1310
        %1312 = vrot.lane.b32.xlu0 %v774, 96
        %v1313 = vpop.permute.xlu0 %1312
        %1314 = vrot.lane.b32.xlu0 %v791, 96
        %v1315 = vpop.permute.xlu0 %1314
        %1316 = vrot.lane.b32.xlu0 %v793, 96
        %v1317 = vpop.permute.xlu0 %1316
        %v1318 = vsel %vm814, %v1311, 0
        %v1320 = vsel %vm814, %v1313, 0
        %v1322 = vsel %vm814, %v1315, 0
        %v1324 = vsel %vm814, %v1317, 0
        %1326 = vmatpush.xpose.msra.mxu0 0.0
        %1327 = vmatpush.xpose.msra.mxu0 0.0
        %1328 = vmatpush.xpose.msra.mxu0 0.0
        %1329 = vmatpush.xpose.msra.mxu0 0.0
        %1330 = vmatpush.xpose.msra.mxu0 0.0
        %1331 = vmatpush.xpose.msra.mxu0 0.0
        %1332 = vmatpush.xpose.msra.mxu0 0.0
        %1333 = vmatpush.xpose.msra.mxu0 0.0
        %1334 = vmatpush.xpose.msra.mxu0 0.0
        %1335 = vmatpush.xpose.msra.mxu0 0.0
        %1336 = vmatpush.xpose.msra.mxu0 0.0
        %1337 = vmatpush.xpose.msra.mxu0 0.0
        %1338 = vmatpush.xpose.msra.mxu0 0.0
        %1339 = vmatpush.xpose.msra.mxu0 0.0
        %1340 = vmatpush.xpose.msra.mxu0 %v1324
        %1341 = vmatpush.xpose.msra.mxu0 %v1322
        %1342 = vmatmul.f32.gmra.mxu0 %v1318
        %v1343 = vpop.f32.mrf.mxu0
        %v1344 = vadd.f32 0.0, %v1343
        %1345 = vmatmul.f32.gmra.mxu0 %v1320
        %v1346 = vpop.f32.mrf.mxu0
        %v1347 = vadd.f32 0.0, %v1346
        %1348 = vdwg.mxu0
        %v1349 = vsel %vm850, %v1344, -inf
        %1350 = vmax.xlane.f32.xlu0 %v1349
        %v1351 = vpop.xlane.xlu0 %1350
        %v1352 = vsel %vm850, %v1347, -inf
        %1353 = vmax.xlane.f32.xlu0 %v1352
        %v1354 = vpop.xlane.xlu0 %1353
        %v1355 = vsub.f32 %v1344, %v1351
        %v1356 = vsub.f32 %v1347, %v1354
        %v1357 = vmul.f32 %v1355, 1.442695
        %v1358 = vpow.pop %v1357
        %v1359 = vmul.f32 %v1356, 1.442695
        %v1360 = vpow.pop %v1359
        %v1361 = vsel %vm850, %v1358, 0.0
        %1362 = vadd.xlane.f32.xlu0 %v1361
        %v1363 = vpop.xlane.xlu0 %1362
        %v1364 = vsel %vm850, %v1360, 0.0
        %1365 = vadd.xlane.f32.xlu0 %v1364
        %v1366 = vpop.xlane.xlu0 %1365
        %v1367 = vrcp.pop %v1363
        %v1368 = vrcp.pop %v1366
        %v1369 = vmul.f32 %v1358, %v1367
        %v1370 = vmul.f32 %v1360, %v1368
        %1373 = vrot.lane.b32.xlu0 %v810, 96
        %v1374 = vpop.permute.xlu0 %1373
        %1375 = vrot.lane.b32.xlu0 %v812, 96
        %v1376 = vpop.permute.xlu0 %1375
        %v1380 = vsel %vm850, %v1369, 0
        %v1383 = vsel %vm850, %v1370, 0
        %1385 = vmatpush.msra.mxu0 0.0
        %1386 = vmatpush.msra.mxu0 0.0
        %1387 = vmatpush.msra.mxu0 0.0
        %1388 = vmatpush.msra.mxu0 0.0
        %1389 = vmatpush.msra.mxu0 0.0
        %1390 = vmatpush.msra.mxu0 0.0
        %1391 = vmatpush.msra.mxu0 0.0
        %1392 = vmatpush.msra.mxu0 0.0
        %1393 = vmatpush.msra.mxu0 0.0
        %1394 = vmatpush.msra.mxu0 0.0
        %1395 = vmatpush.msra.mxu0 0.0
        %1396 = vmatpush.msra.mxu0 0.0
        %1397 = vmatpush.msra.mxu0 0.0
        %1398 = vmatpush.msra.mxu0 0.0
        %1399 = vmatpush.msra.mxu0 %v1376
        %1400 = vmatpush.msra.mxu0 %v1374
        %1401 = vmatmul.f32.gmra.mxu0 %v1380
        %v1402 = vpop.f32.mrf.mxu0
        %v1403 = vadd.f32 0.0, %v1402
        %1404 = vmatmul.f32.gmra.mxu0 %v1383
        %v1405 = vpop.f32.mrf.mxu0
        %v1406 = vadd.f32 0.0, %v1405
        %1407 = vdwg.mxu0
        %1408 = vrot.lane.b32.xlu0 %v772, 64
        %v1409 = vpop.permute.xlu0 %1408
        %1410 = vrot.lane.b32.xlu0 %v774, 64
        %v1411 = vpop.permute.xlu0 %1410
        %1412 = vrot.lane.b32.xlu0 %v791, 64
        %v1413 = vpop.permute.xlu0 %1412
        %1414 = vrot.lane.b32.xlu0 %v793, 64
        %v1415 = vpop.permute.xlu0 %1414
        %v1416 = vsel %vm814, %v1409, 0
        %v1418 = vsel %vm814, %v1411, 0
        %v1420 = vsel %vm814, %v1413, 0
        %v1422 = vsel %vm814, %v1415, 0
        %1424 = vmatpush.xpose.msra.mxu0 0.0
        %1425 = vmatpush.xpose.msra.mxu0 0.0
        %1426 = vmatpush.xpose.msra.mxu0 0.0
        %1427 = vmatpush.xpose.msra.mxu0 0.0
        %1428 = vmatpush.xpose.msra.mxu0 0.0
        %1429 = vmatpush.xpose.msra.mxu0 0.0
        %1430 = vmatpush.xpose.msra.mxu0 0.0
        %1431 = vmatpush.xpose.msra.mxu0 0.0
        %1432 = vmatpush.xpose.msra.mxu0 0.0
        %1433 = vmatpush.xpose.msra.mxu0 0.0
        %1434 = vmatpush.xpose.msra.mxu0 0.0
        %1435 = vmatpush.xpose.msra.mxu0 0.0
        %1436 = vmatpush.xpose.msra.mxu0 0.0
        %1437 = vmatpush.xpose.msra.mxu0 0.0
        %1438 = vmatpush.xpose.msra.mxu0 %v1422
        %1439 = vmatpush.xpose.msra.mxu0 %v1420
        %1440 = vmatmul.f32.gmra.mxu0 %v1416
        %v1441 = vpop.f32.mrf.mxu0
        %v1442 = vadd.f32 0.0, %v1441
        %1443 = vmatmul.f32.gmra.mxu0 %v1418
        %v1444 = vpop.f32.mrf.mxu0
        %v1445 = vadd.f32 0.0, %v1444
        %1446 = vdwg.mxu0
        %v1447 = vsel %vm850, %v1442, -inf
        %1448 = vmax.xlane.f32.xlu0 %v1447
        %v1449 = vpop.xlane.xlu0 %1448
        %v1450 = vsel %vm850, %v1445, -inf
        %1451 = vmax.xlane.f32.xlu0 %v1450
        %v1452 = vpop.xlane.xlu0 %1451
        %v1453 = vsub.f32 %v1442, %v1449
        %v1454 = vsub.f32 %v1445, %v1452
        %v1455 = vmul.f32 %v1453, 1.442695
        %v1456 = vpow.pop %v1455
        %v1457 = vmul.f32 %v1454, 1.442695
        %v1458 = vpow.pop %v1457
        %v1459 = vsel %vm850, %v1456, 0.0
        %1460 = vadd.xlane.f32.xlu0 %v1459
        %v1461 = vpop.xlane.xlu0 %1460
        %v1462 = vsel %vm850, %v1458, 0.0
        %1463 = vadd.xlane.f32.xlu0 %v1462
        %v1464 = vpop.xlane.xlu0 %1463
        %v1465 = vrcp.pop %v1461
        %v1466 = vrcp.pop %v1464
        %v1467 = vmul.f32 %v1456, %v1465
        %v1468 = vmul.f32 %v1458, %v1466
        %1469 = vrot.lane.b32.xlu0 %v810, 64
        %v1470 = vpop.permute.xlu0 %1469
        %1471 = vrot.lane.b32.xlu0 %v812, 64
        %v1472 = vpop.permute.xlu0 %1471
        %v1476 = vsel %vm850, %v1467, 0
        %v1479 = vsel %vm850, %v1468, 0
        %1481 = vmatpush.msra.mxu0 0.0
        %1482 = vmatpush.msra.mxu0 0.0
        %1483 = vmatpush.msra.mxu0 0.0
        %1484 = vmatpush.msra.mxu0 0.0
        %1485 = vmatpush.msra.mxu0 0.0
        %1486 = vmatpush.msra.mxu0 0.0
        %1487 = vmatpush.msra.mxu0 0.0
        %1488 = vmatpush.msra.mxu0 0.0
        %1489 = vmatpush.msra.mxu0 0.0
        %1490 = vmatpush.msra.mxu0 0.0
        %1491 = vmatpush.msra.mxu0 0.0
        %1492 = vmatpush.msra.mxu0 0.0
        %1493 = vmatpush.msra.mxu0 0.0
        %1494 = vmatpush.msra.mxu0 0.0
        %1495 = vmatpush.msra.mxu0 %v1472
        %1496 = vmatpush.msra.mxu0 %v1470
        %1497 = vmatmul.f32.gmra.mxu0 %v1476
        %v1498 = vpop.f32.mrf.mxu0
        %v1499 = vadd.f32 0.0, %v1498
        %1500 = vmatmul.f32.gmra.mxu0 %v1479
        %v1501 = vpop.f32.mrf.mxu0
        %v1502 = vadd.f32 0.0, %v1501
        %1503 = vdwg.mxu0
        %1504 = vrot.lane.b32.xlu0 %v772, 32
        %v1505 = vpop.permute.xlu0 %1504
        %1506 = vrot.lane.b32.xlu0 %v774, 32
        %v1507 = vpop.permute.xlu0 %1506
        %1508 = vrot.lane.b32.xlu0 %v791, 32
        %v1509 = vpop.permute.xlu0 %1508
        %1510 = vrot.lane.b32.xlu0 %v793, 32
        %v1511 = vpop.permute.xlu0 %1510
        %v1512 = vsel %vm814, %v1505, 0
        %v1514 = vsel %vm814, %v1507, 0
        %v1516 = vsel %vm814, %v1509, 0
        %v1518 = vsel %vm814, %v1511, 0
        %1520 = vmatpush.xpose.msra.mxu0 0.0
        %1521 = vmatpush.xpose.msra.mxu0 0.0
        %1522 = vmatpush.xpose.msra.mxu0 0.0
        %1523 = vmatpush.xpose.msra.mxu0 0.0
        %1524 = vmatpush.xpose.msra.mxu0 0.0
        %1525 = vmatpush.xpose.msra.mxu0 0.0
        %1526 = vmatpush.xpose.msra.mxu0 0.0
        %1527 = vmatpush.xpose.msra.mxu0 0.0
        %1528 = vmatpush.xpose.msra.mxu0 0.0
        %1529 = vmatpush.xpose.msra.mxu0 0.0
        %1530 = vmatpush.xpose.msra.mxu0 0.0
        %1531 = vmatpush.xpose.msra.mxu0 0.0
        %1532 = vmatpush.xpose.msra.mxu0 0.0
        %1533 = vmatpush.xpose.msra.mxu0 0.0
        %1534 = vmatpush.xpose.msra.mxu0 %v1518
        %1535 = vmatpush.xpose.msra.mxu0 %v1516
        %1536 = vmatmul.f32.gmra.mxu0 %v1512
        %v1537 = vpop.f32.mrf.mxu0
        %v1538 = vadd.f32 0.0, %v1537
        %1539 = vmatmul.f32.gmra.mxu0 %v1514
        %v1540 = vpop.f32.mrf.mxu0
        %v1541 = vadd.f32 0.0, %v1540
        %1542 = vdwg.mxu0
        %v1543 = vsel %vm850, %v1538, -inf
        %1544 = vmax.xlane.f32.xlu0 %v1543
        %v1545 = vpop.xlane.xlu0 %1544
        %v1546 = vsel %vm850, %v1541, -inf
        %1547 = vmax.xlane.f32.xlu0 %v1546
        %v1548 = vpop.xlane.xlu0 %1547
        %v1549 = vsub.f32 %v1538, %v1545
        %v1550 = vsub.f32 %v1541, %v1548
        %v1551 = vmul.f32 %v1549, 1.442695
        %v1552 = vpow.pop %v1551
        %v1553 = vmul.f32 %v1550, 1.442695
        %v1554 = vpow.pop %v1553
        %v1555 = vsel %vm850, %v1552, 0.0
        %1556 = vadd.xlane.f32.xlu0 %v1555
        %v1557 = vpop.xlane.xlu0 %1556
        %v1558 = vsel %vm850, %v1554, 0.0
        %1559 = vadd.xlane.f32.xlu0 %v1558
        %v1560 = vpop.xlane.xlu0 %1559
        %v1561 = vrcp.pop %v1557
        %v1562 = vrcp.pop %v1560
        %v1563 = vmul.f32 %v1552, %v1561
        %v1564 = vmul.f32 %v1554, %v1562
        %1565 = vrot.lane.b32.xlu0 %v810, 32
        %v1566 = vpop.permute.xlu0 %1565
        %1567 = vrot.lane.b32.xlu0 %v812, 32
        %v1568 = vpop.permute.xlu0 %1567
        %v1572 = vsel %vm850, %v1563, 0
        %v1575 = vsel %vm850, %v1564, 0
        %1577 = vmatpush.msra.mxu0 0.0
        %1578 = vmatpush.msra.mxu0 0.0
        %1579 = vmatpush.msra.mxu0 0.0
        %1580 = vmatpush.msra.mxu0 0.0
        %1581 = vmatpush.msra.mxu0 0.0
        %1582 = vmatpush.msra.mxu0 0.0
        %1583 = vmatpush.msra.mxu0 0.0
        %1584 = vmatpush.msra.mxu0 0.0
        %1585 = vmatpush.msra.mxu0 0.0
        %1586 = vmatpush.msra.mxu0 0.0
        %1587 = vmatpush.msra.mxu0 0.0
        %1588 = vmatpush.msra.mxu0 0.0
        %1589 = vmatpush.msra.mxu0 0.0
        %1590 = vmatpush.msra.mxu0 0.0
        %1591 = vmatpush.msra.mxu0 %v1568
        %1592 = vmatpush.msra.mxu0 %v1566
        %1593 = vmatmul.f32.gmra.mxu0 %v1572
        %v1594 = vpop.f32.mrf.mxu0
        %v1595 = vadd.f32 0.0, %v1594
        %1596 = vmatmul.f32.gmra.mxu0 %v1575
        %v1597 = vpop.f32.mrf.mxu0
        %v1598 = vadd.f32 0.0, %v1597
        %1599 = vdwg.mxu0
        %1602 = vrot.lane.b32.xlu0 %v1403, 32
        %v1603 = vpop.permute.xlu0 %1602
        %1604 = vrot.lane.b32.xlu0 %v1406, 32
        %v1605 = vpop.permute.xlu0 %1604
        %1610 = vrot.lane.b32.xlu0 %v1499, 64
        %v1611 = vpop.permute.xlu0 %1610
        %1612 = vrot.lane.b32.xlu0 %v1502, 64
        %v1613 = vpop.permute.xlu0 %1612
        %1618 = vrot.lane.b32.xlu0 %v1595, 96
        %v1619 = vpop.permute.xlu0 %1618
        %1620 = vrot.lane.b32.xlu0 %v1598, 96
        %v1621 = vpop.permute.xlu0 %1620
        %v1624 = vsel %vm814, %v1305, %v1603
        %v1625 = vsel %vm814, %v1308, %v1605
        %v1626 = vsel %vm1218, %v1624, %v1611
        %v1627 = vsel %vm1218, %v1625, %v1613
        %v1628 = vsel %vm1221, %v1626, %v1619
        %v1629 = vsel %vm1221, %v1627, %v1621
        %v1630 = vpack.c.bf16 %v1223, %v1222
        %v1631 = vpack.c.bf16 %v1629, %v1628
        %v1632 = vld [vmem:[%s417] sm:$0xf]
        %v1633 = vld [vmem:[%s417 + $0x4] sm:$0xf]
        %v1634 = vld [vmem:[%s417 + $0x8] sm:$0xf]
        %v1635 = vld [vmem:[%s417 + $0xc] sm:$0xf]
        %v1636 = vld [vmem:[%s417 + $0x10] sm:$0xf]
        %v1637 = vld [vmem:[%s417 + $0x14] sm:$0xf]
        %v1638 = vld [vmem:[%s417 + $0x18] sm:$0xf]
        %v1639 = vld [vmem:[%s417 + $0x1c] sm:$0xf]
        %v1640 = vld [vmem:[%s417 + $0x20] sm:$0xf]
        %v1641 = vld [vmem:[%s417 + $0x24] sm:$0xf]
        %v1642 = vld [vmem:[%s417 + $0x28] sm:$0xf]
        %v1643 = vld [vmem:[%s417 + $0x2c] sm:$0xf]
        %v1644 = vld [vmem:[%s417 + $0x30] sm:$0xf]
        %v1645 = vld [vmem:[%s417 + $0x34] sm:$0xf]
        %v1646 = vld [vmem:[%s417 + $0x38] sm:$0xf]
        %v1647 = vld [vmem:[%s417 + $0x3c] sm:$0xf]
        %v1664 = vunpack.c.l.b16 %v1632
        %v1665 = vunpack.c.l.b16 %v1633
        %v1666 = vunpack.c.l.b16 %v1634
        %v1667 = vunpack.c.l.b16 %v1635
        %v1668 = vunpack.c.l.b16 %v1636
        %v1669 = vunpack.c.l.b16 %v1637
        %v1670 = vunpack.c.l.b16 %v1638
        %v1671 = vunpack.c.l.b16 %v1639
        %v1672 = vunpack.c.l.b16 %v1640
        %v1673 = vunpack.c.l.b16 %v1641
        %v1674 = vunpack.c.l.b16 %v1642
        %v1675 = vunpack.c.l.b16 %v1643
        %v1676 = vunpack.c.l.b16 %v1644
        %v1677 = vunpack.c.l.b16 %v1645
        %v1678 = vunpack.c.l.b16 %v1646
        %v1679 = vunpack.c.l.b16 %v1647
        %v1680 = vpack.c.b16 %v1665, %v1664
        %v1681 = vpack.c.b16 %v1667, %v1666
        %v1682 = vpack.c.b16 %v1669, %v1668
        %v1683 = vpack.c.b16 %v1671, %v1670
        %v1684 = vpack.c.b16 %v1673, %v1672
        %v1685 = vpack.c.b16 %v1675, %v1674
        %v1686 = vpack.c.b16 %v1677, %v1676
        %v1687 = vpack.c.b16 %v1679, %v1678
        %1696 = vmatpush.bf16.msra.mxu0 %v1687
        %1697 = vmatpush.bf16.msra.mxu0 %v1686
        %1698 = vmatpush.bf16.msra.mxu0 %v1685
        %1699 = vmatpush.bf16.msra.mxu0 %v1684
        %1700 = vmatpush.bf16.msra.mxu0 %v1683
        %1701 = vmatpush.bf16.msra.mxu0 %v1682
        %1702 = vmatpush.bf16.msra.mxu0 %v1681
        %1703 = vmatpush.bf16.msra.mxu0 %v1680
        %1704 = vmatmul.bf16.gmra.mxu0 %v1630
        %v1705 = vpop.f32.mrf.mxu0
        %v1706 = vadd.f32 0.0, %v1705
        %v1707 = vpop.f32.mrf.mxu0
        %v1708 = vadd.f32 0.0, %v1707
        %1709 = vmatmul.bf16.gmra.mxu0 %v1631
        %v1710 = vpop.f32.mrf.mxu0
        %v1711 = vadd.f32 0.0, %v1710
        %v1712 = vpop.f32.mrf.mxu0
        %v1713 = vadd.f32 0.0, %v1712
        %1714 = vdwg.mxu0
        %v1715 = vadd.f32 %v512, %v1706
        %v1716 = vadd.f32 %v513, %v1708
        %v1717 = vadd.f32 %v514, %v1711
        %v1718 = vadd.f32 %v515, %v1713
        %v1719 = vld [vmem:[%s426] sm:$0x1]
        %v1720 = vmul.f32 %v1715, %v1715
        %v1721 = vmul.f32 %v1716, %v1716
        %v1722 = vmul.f32 %v1717, %v1717
        %v1723 = vmul.f32 %v1718, %v1718
        %1724 = vadd.xlane.f32.xlu0 %v1720
        %v1725 = vpop.xlane.xlu0 %1724
        %1726 = vadd.xlane.f32.xlu0 %v1721
        %v1727 = vpop.xlane.xlu0 %1726
        %1728 = vadd.xlane.f32.xlu0 %v1722
        %v1729 = vpop.xlane.xlu0 %1728
        %1730 = vadd.xlane.f32.xlu0 %v1723
        %v1731 = vpop.xlane.xlu0 %1730
        %v1732 = vmul.f32 %v1725, %v535
        %v1733 = vmul.f32 %v1727, %v535
        %v1734 = vmul.f32 %v1729, %v535
        %v1735 = vmul.f32 %v1731, %v535
        %v1736 = vadd.f32 %v1732, 1e-06
        %v1737 = vadd.f32 %v1733, 1e-06
        %v1738 = vadd.f32 %v1734, 1e-06
        %v1739 = vadd.f32 %v1735, 1e-06
        %v1740 = vrsqrt.pop %v1736
        %v1741 = vmul.f32 %v1740, %v1736
        %v1742 = vmul.f32 %v1741, %v1740
        %v1743 = vmul.f32 0.5, %v1742
        %v1744 = vsub.f32 1.5, %v1743
        %v1745 = vmul.f32 %v1740, %v1744
        %vm1746 = vweird.f32 %v1736
        %vm1747 = vweird.f32 %v1740
        %vm1748 = vmor %vm1746, %vm1747
        %v1749 = vsel %vm1748, %v1740, %v1745
        %v1750 = vrsqrt.pop %v1737
        %v1751 = vmul.f32 %v1750, %v1737
        %v1752 = vmul.f32 %v1751, %v1750
        %v1753 = vmul.f32 0.5, %v1752
        %v1754 = vsub.f32 1.5, %v1753
        %v1755 = vmul.f32 %v1750, %v1754
        %vm1756 = vweird.f32 %v1737
        %vm1757 = vweird.f32 %v1750
        %vm1758 = vmor %vm1756, %vm1757
        %v1759 = vsel %vm1758, %v1750, %v1755
        %v1760 = vrsqrt.pop %v1738
        %v1761 = vmul.f32 %v1760, %v1738
        %v1762 = vmul.f32 %v1761, %v1760
        %v1763 = vmul.f32 0.5, %v1762
        %v1764 = vsub.f32 1.5, %v1763
        %v1765 = vmul.f32 %v1760, %v1764
        %vm1766 = vweird.f32 %v1738
        %vm1767 = vweird.f32 %v1760
        %vm1768 = vmor %vm1766, %vm1767
        %v1769 = vsel %vm1768, %v1760, %v1765
        %v1770 = vrsqrt.pop %v1739
        %v1771 = vmul.f32 %v1770, %v1739
        %v1772 = vmul.f32 %v1771, %v1770
        %v1773 = vmul.f32 0.5, %v1772
        %v1774 = vsub.f32 1.5, %v1773
        %v1775 = vmul.f32 %v1770, %v1774
        %vm1776 = vweird.f32 %v1739
        %vm1777 = vweird.f32 %v1770
        %vm1778 = vmor %vm1776, %vm1777
        %v1779 = vsel %vm1778, %v1770, %v1775
        %v1780 = vmul.f32 %v1715, %v1749
        %v1781 = vmul.f32 %v1716, %v1759
        %v1782 = vmul.f32 %v1717, %v1769
        %v1783 = vmul.f32 %v1718, %v1779
        %v1785 = vperm.slane %v1719, 0
        %v1787 = vmul.f32 %v1780, %v1785
        %v1788 = vmul.f32 %v1781, %v1785
        %v1789 = vmul.f32 %v1782, %v1785
        %v1790 = vmul.f32 %v1783, %v1785
        %v1791 = vpack.c.bf16 %v1788, %v1787
        %v1792 = vpack.c.bf16 %v1790, %v1789
        %v1793 = vld [vmem:[%s436] sm:$0xff]
        %v1794 = vld [vmem:[%s436 + $0x8] sm:$0xff]
        %v1795 = vld [vmem:[%s436 + $0x10] sm:$0xff]
        %v1796 = vld [vmem:[%s436 + $0x18] sm:$0xff]
        %v1797 = vld [vmem:[%s436 + $0x20] sm:$0xff]
        %v1798 = vld [vmem:[%s436 + $0x28] sm:$0xff]
        %v1799 = vld [vmem:[%s436 + $0x30] sm:$0xff]
        %v1800 = vld [vmem:[%s436 + $0x38] sm:$0xff]
        %v1801 = vld [vmem:[%s436 + $0x40] sm:$0xff]
        %v1802 = vld [vmem:[%s436 + $0x48] sm:$0xff]
        %v1803 = vld [vmem:[%s436 + $0x50] sm:$0xff]
        %v1804 = vld [vmem:[%s436 + $0x58] sm:$0xff]
        %v1805 = vld [vmem:[%s436 + $0x60] sm:$0xff]
        %v1806 = vld [vmem:[%s436 + $0x68] sm:$0xff]
        %v1807 = vld [vmem:[%s436 + $0x70] sm:$0xff]
        %v1808 = vld [vmem:[%s436 + $0x78] sm:$0xff]
        %v1809 = vld [vmem:[%s436 + $0x80] sm:$0xff]
        %v1810 = vld [vmem:[%s436 + $0x88] sm:$0xff]
        %v1811 = vld [vmem:[%s436 + $0x90] sm:$0xff]
        %v1812 = vld [vmem:[%s436 + $0x98] sm:$0xff]
        %v1813 = vld [vmem:[%s436 + $0xa0] sm:$0xff]
        %v1814 = vld [vmem:[%s436 + $0xa8] sm:$0xff]
        %v1815 = vld [vmem:[%s436 + $0xb0] sm:$0xff]
        %v1816 = vld [vmem:[%s436 + $0xb8] sm:$0xff]
        %v1817 = vld [vmem:[%s436 + $0xc0] sm:$0xff]
        %v1818 = vld [vmem:[%s436 + $0xc8] sm:$0xff]
        %v1819 = vld [vmem:[%s436 + $0xd0] sm:$0xff]
        %v1820 = vld [vmem:[%s436 + $0xd8] sm:$0xff]
        %v1821 = vld [vmem:[%s436 + $0xe0] sm:$0xff]
        %v1822 = vld [vmem:[%s436 + $0xe8] sm:$0xff]
        %v1823 = vld [vmem:[%s436 + $0xf0] sm:$0xff]
        %v1824 = vld [vmem:[%s436 + $0xf8] sm:$0xff]
        %v1825 = vld [vmem:[%s436 + $0x100] sm:$0xff]
        %v1826 = vld [vmem:[%s436 + $0x108] sm:$0xff]
        %v1827 = vld [vmem:[%s436 + $0x110] sm:$0xff]
        %v1828 = vld [vmem:[%s436 + $0x118] sm:$0xff]
        %v1829 = vld [vmem:[%s436 + $0x120] sm:$0xff]
        %v1830 = vld [vmem:[%s436 + $0x128] sm:$0xff]
        %v1831 = vld [vmem:[%s436 + $0x130] sm:$0xff]
        %v1832 = vld [vmem:[%s436 + $0x138] sm:$0xff]
        %v1833 = vld [vmem:[%s436 + $0x140] sm:$0xff]
        %v1834 = vld [vmem:[%s436 + $0x148] sm:$0xff]
        %v1835 = vld [vmem:[%s436 + $0x150] sm:$0xff]
        %v1836 = vld [vmem:[%s436 + $0x158] sm:$0xff]
        %v1837 = vld [vmem:[%s436 + $0x160] sm:$0xff]
        %v1838 = vld [vmem:[%s436 + $0x168] sm:$0xff]
        %v1839 = vld [vmem:[%s436 + $0x170] sm:$0xff]
        %v1840 = vld [vmem:[%s436 + $0x178] sm:$0xff]
        %v1889 = vunpack.c.l.b16 %v1793
        %v1890 = vunpack.c.h.b16 %v1793
        %v1891 = vunpack.c.l.b16 %v1794
        %v1892 = vunpack.c.h.b16 %v1794
        %v1893 = vunpack.c.l.b16 %v1795
        %v1894 = vunpack.c.h.b16 %v1795
        %v1895 = vunpack.c.l.b16 %v1796
        %v1896 = vunpack.c.h.b16 %v1796
        %v1897 = vunpack.c.l.b16 %v1797
        %v1898 = vunpack.c.h.b16 %v1797
        %v1899 = vunpack.c.l.b16 %v1798
        %v1900 = vunpack.c.h.b16 %v1798
        %v1901 = vunpack.c.l.b16 %v1799
        %v1902 = vunpack.c.h.b16 %v1799
        %v1903 = vunpack.c.l.b16 %v1800
        %v1904 = vunpack.c.h.b16 %v1800
        %v1905 = vunpack.c.l.b16 %v1801
        %v1906 = vunpack.c.h.b16 %v1801
        %v1907 = vunpack.c.l.b16 %v1802
        %v1908 = vunpack.c.h.b16 %v1802
        %v1909 = vunpack.c.l.b16 %v1803
        %v1910 = vunpack.c.h.b16 %v1803
        %v1911 = vunpack.c.l.b16 %v1804
        %v1912 = vunpack.c.h.b16 %v1804
        %v1913 = vunpack.c.l.b16 %v1805
        %v1914 = vunpack.c.h.b16 %v1805
        %v1915 = vunpack.c.l.b16 %v1806
        %v1916 = vunpack.c.h.b16 %v1806
        %v1917 = vunpack.c.l.b16 %v1807
        %v1918 = vunpack.c.h.b16 %v1807
        %v1919 = vunpack.c.l.b16 %v1808
        %v1920 = vunpack.c.h.b16 %v1808
        %v1921 = vunpack.c.l.b16 %v1809
        %v1922 = vunpack.c.h.b16 %v1809
        %v1923 = vunpack.c.l.b16 %v1810
        %v1924 = vunpack.c.h.b16 %v1810
        %v1925 = vunpack.c.l.b16 %v1811
        %v1926 = vunpack.c.h.b16 %v1811
        %v1927 = vunpack.c.l.b16 %v1812
        %v1928 = vunpack.c.h.b16 %v1812
        %v1929 = vunpack.c.l.b16 %v1813
        %v1930 = vunpack.c.h.b16 %v1813
        %v1931 = vunpack.c.l.b16 %v1814
        %v1932 = vunpack.c.h.b16 %v1814
        %v1933 = vunpack.c.l.b16 %v1815
        %v1934 = vunpack.c.h.b16 %v1815
        %v1935 = vunpack.c.l.b16 %v1816
        %v1936 = vunpack.c.h.b16 %v1816
        %v1937 = vunpack.c.l.b16 %v1817
        %v1938 = vunpack.c.h.b16 %v1817
        %v1939 = vunpack.c.l.b16 %v1818
        %v1940 = vunpack.c.h.b16 %v1818
        %v1941 = vunpack.c.l.b16 %v1819
        %v1942 = vunpack.c.h.b16 %v1819
        %v1943 = vunpack.c.l.b16 %v1820
        %v1944 = vunpack.c.h.b16 %v1820
        %v1945 = vunpack.c.l.b16 %v1821
        %v1946 = vunpack.c.h.b16 %v1821
        %v1947 = vunpack.c.l.b16 %v1822
        %v1948 = vunpack.c.h.b16 %v1822
        %v1949 = vunpack.c.l.b16 %v1823
        %v1950 = vunpack.c.h.b16 %v1823
        %v1951 = vunpack.c.l.b16 %v1824
        %v1952 = vunpack.c.h.b16 %v1824
        %v1953 = vunpack.c.l.b16 %v1825
        %v1954 = vunpack.c.h.b16 %v1825
        %v1955 = vunpack.c.l.b16 %v1826
        %v1956 = vunpack.c.h.b16 %v1826
        %v1957 = vunpack.c.l.b16 %v1827
        %v1958 = vunpack.c.h.b16 %v1827
        %v1959 = vunpack.c.l.b16 %v1828
        %v1960 = vunpack.c.h.b16 %v1828
        %v1961 = vunpack.c.l.b16 %v1829
        %v1962 = vunpack.c.h.b16 %v1829
        %v1963 = vunpack.c.l.b16 %v1830
        %v1964 = vunpack.c.h.b16 %v1830
        %v1965 = vunpack.c.l.b16 %v1831
        %v1966 = vunpack.c.h.b16 %v1831
        %v1967 = vunpack.c.l.b16 %v1832
        %v1968 = vunpack.c.h.b16 %v1832
        %v1969 = vunpack.c.l.b16 %v1833
        %v1970 = vunpack.c.h.b16 %v1833
        %v1971 = vunpack.c.l.b16 %v1834
        %v1972 = vunpack.c.h.b16 %v1834
        %v1973 = vunpack.c.l.b16 %v1835
        %v1974 = vunpack.c.h.b16 %v1835
        %v1975 = vunpack.c.l.b16 %v1836
        %v1976 = vunpack.c.h.b16 %v1836
        %v1977 = vunpack.c.l.b16 %v1837
        %v1978 = vunpack.c.h.b16 %v1837
        %v1979 = vunpack.c.l.b16 %v1838
        %v1980 = vunpack.c.h.b16 %v1838
        %v1981 = vunpack.c.l.b16 %v1839
        %v1982 = vunpack.c.h.b16 %v1839
        %v1983 = vunpack.c.l.b16 %v1840
        %v1984 = vunpack.c.h.b16 %v1840
        %v1985 = vpack.c.b16 %v1895, %v1889
        %v1986 = vpack.c.b16 %v1896, %v1890
        %v1987 = vpack.c.b16 %v1897, %v1891
        %v1988 = vpack.c.b16 %v1898, %v1892
        %v1989 = vpack.c.b16 %v1899, %v1893
        %v1990 = vpack.c.b16 %v1900, %v1894
        %v1991 = vpack.c.b16 %v1907, %v1901
        %v1992 = vpack.c.b16 %v1908, %v1902
        %v1993 = vpack.c.b16 %v1909, %v1903
        %v1994 = vpack.c.b16 %v1910, %v1904
        %v1995 = vpack.c.b16 %v1911, %v1905
        %v1996 = vpack.c.b16 %v1912, %v1906
        %v1997 = vpack.c.b16 %v1919, %v1913
        %v1998 = vpack.c.b16 %v1920, %v1914
        %v1999 = vpack.c.b16 %v1921, %v1915
        %v2000 = vpack.c.b16 %v1922, %v1916
        %v2001 = vpack.c.b16 %v1923, %v1917
        %v2002 = vpack.c.b16 %v1924, %v1918
        %v2003 = vpack.c.b16 %v1931, %v1925
        %v2004 = vpack.c.b16 %v1932, %v1926
        %v2005 = vpack.c.b16 %v1933, %v1927
        %v2006 = vpack.c.b16 %v1934, %v1928
        %v2007 = vpack.c.b16 %v1935, %v1929
        %v2008 = vpack.c.b16 %v1936, %v1930
        %v2009 = vpack.c.b16 %v1943, %v1937
        %v2010 = vpack.c.b16 %v1944, %v1938
        %v2011 = vpack.c.b16 %v1945, %v1939
        %v2012 = vpack.c.b16 %v1946, %v1940
        %v2013 = vpack.c.b16 %v1947, %v1941
        %v2014 = vpack.c.b16 %v1948, %v1942
        %v2015 = vpack.c.b16 %v1955, %v1949
        %v2016 = vpack.c.b16 %v1956, %v1950
        %v2017 = vpack.c.b16 %v1957, %v1951
        %v2018 = vpack.c.b16 %v1958, %v1952
        %v2019 = vpack.c.b16 %v1959, %v1953
        %v2020 = vpack.c.b16 %v1960, %v1954
        %v2021 = vpack.c.b16 %v1967, %v1961
        %v2022 = vpack.c.b16 %v1968, %v1962
        %v2023 = vpack.c.b16 %v1969, %v1963
        %v2024 = vpack.c.b16 %v1970, %v1964
        %v2025 = vpack.c.b16 %v1971, %v1965
        %v2026 = vpack.c.b16 %v1972, %v1966
        %v2027 = vpack.c.b16 %v1979, %v1973
        %v2028 = vpack.c.b16 %v1980, %v1974
        %v2029 = vpack.c.b16 %v1981, %v1975
        %v2030 = vpack.c.b16 %v1982, %v1976
        %v2031 = vpack.c.b16 %v1983, %v1977
        %v2032 = vpack.c.b16 %v1984, %v1978
        %2081 = vmatpush.bf16.msra.mxu0 %v2027
        %2082 = vmatpush.bf16.msra.mxu0 %v2021
        %2083 = vmatpush.bf16.msra.mxu0 %v2015
        %2084 = vmatpush.bf16.msra.mxu0 %v2009
        %2085 = vmatpush.bf16.msra.mxu0 %v2003
        %2086 = vmatpush.bf16.msra.mxu0 %v1997
        %2087 = vmatpush.bf16.msra.mxu0 %v1991
        %2088 = vmatpush.bf16.msra.mxu0 %v1985
        %2089 = vmatmul.bf16.gmra.mxu0 %v1791
        %v2090 = vpop.f32.mrf.mxu0
        %v2091 = vadd.f32 0.0, %v2090
        %v2092 = vpop.f32.mrf.mxu0
        %v2093 = vadd.f32 0.0, %v2092
        %2094 = vmatmul.bf16.gmra.mxu0 %v1792
        %v2095 = vpop.f32.mrf.mxu0
        %v2096 = vadd.f32 0.0, %v2095
        %v2097 = vpop.f32.mrf.mxu0
        %v2098 = vadd.f32 0.0, %v2097
        %2099 = vdwg.mxu0
        %2100 = vmatpush.bf16.msra.mxu0 %v2028
        %2101 = vmatpush.bf16.msra.mxu0 %v2022
        %2102 = vmatpush.bf16.msra.mxu0 %v2016
        %2103 = vmatpush.bf16.msra.mxu0 %v2010
        %2104 = vmatpush.bf16.msra.mxu0 %v2004
        %2105 = vmatpush.bf16.msra.mxu0 %v1998
        %2106 = vmatpush.bf16.msra.mxu0 %v1992
        %2107 = vmatpush.bf16.msra.mxu0 %v1986
        %2108 = vmatmul.bf16.gmra.mxu0 %v1791
        %v2109 = vpop.f32.mrf.mxu0
        %v2110 = vadd.f32 0.0, %v2109
        %v2111 = vpop.f32.mrf.mxu0
        %v2112 = vadd.f32 0.0, %v2111
        %2113 = vmatmul.bf16.gmra.mxu0 %v1792
        %v2114 = vpop.f32.mrf.mxu0
        %v2115 = vadd.f32 0.0, %v2114
        %v2116 = vpop.f32.mrf.mxu0
        %v2117 = vadd.f32 0.0, %v2116
        %2118 = vdwg.mxu0
        %2119 = vmatpush.bf16.msra.mxu0 %v2029
        %2120 = vmatpush.bf16.msra.mxu0 %v2023
        %2121 = vmatpush.bf16.msra.mxu0 %v2017
        %2122 = vmatpush.bf16.msra.mxu0 %v2011
        %2123 = vmatpush.bf16.msra.mxu0 %v2005
        %2124 = vmatpush.bf16.msra.mxu0 %v1999
        %2125 = vmatpush.bf16.msra.mxu0 %v1993
        %2126 = vmatpush.bf16.msra.mxu0 %v1987
        %2127 = vmatmul.bf16.gmra.mxu0 %v1791
        %v2128 = vpop.f32.mrf.mxu0
        %v2129 = vadd.f32 0.0, %v2128
        %v2130 = vpop.f32.mrf.mxu0
        %v2131 = vadd.f32 0.0, %v2130
        %2132 = vmatmul.bf16.gmra.mxu0 %v1792
        %v2133 = vpop.f32.mrf.mxu0
        %v2134 = vadd.f32 0.0, %v2133
        %v2135 = vpop.f32.mrf.mxu0
        %v2136 = vadd.f32 0.0, %v2135
        %2137 = vdwg.mxu0
        %2138 = vmatpush.bf16.msra.mxu0 %v2030
        %2139 = vmatpush.bf16.msra.mxu0 %v2024
        %2140 = vmatpush.bf16.msra.mxu0 %v2018
        %2141 = vmatpush.bf16.msra.mxu0 %v2012
        %2142 = vmatpush.bf16.msra.mxu0 %v2006
        %2143 = vmatpush.bf16.msra.mxu0 %v2000
        %2144 = vmatpush.bf16.msra.mxu0 %v1994
        %2145 = vmatpush.bf16.msra.mxu0 %v1988
        %2146 = vmatmul.bf16.gmra.mxu0 %v1791
        %v2147 = vpop.f32.mrf.mxu0
        %v2148 = vadd.f32 0.0, %v2147
        %v2149 = vpop.f32.mrf.mxu0
        %v2150 = vadd.f32 0.0, %v2149
        %2151 = vmatmul.bf16.gmra.mxu0 %v1792
        %v2152 = vpop.f32.mrf.mxu0
        %v2153 = vadd.f32 0.0, %v2152
        %v2154 = vpop.f32.mrf.mxu0
        %v2155 = vadd.f32 0.0, %v2154
        %2156 = vdwg.mxu0
        %2157 = vmatpush.bf16.msra.mxu0 %v2031
        %2158 = vmatpush.bf16.msra.mxu0 %v2025
        %2159 = vmatpush.bf16.msra.mxu0 %v2019
        %2160 = vmatpush.bf16.msra.mxu0 %v2013
        %2161 = vmatpush.bf16.msra.mxu0 %v2007
        %2162 = vmatpush.bf16.msra.mxu0 %v2001
        %2163 = vmatpush.bf16.msra.mxu0 %v1995
        %2164 = vmatpush.bf16.msra.mxu0 %v1989
        %2165 = vmatmul.bf16.gmra.mxu0 %v1791
        %v2166 = vpop.f32.mrf.mxu0
        %v2167 = vadd.f32 0.0, %v2166
        %v2168 = vpop.f32.mrf.mxu0
        %v2169 = vadd.f32 0.0, %v2168
        %2170 = vmatmul.bf16.gmra.mxu0 %v1792
        %v2171 = vpop.f32.mrf.mxu0
        %v2172 = vadd.f32 0.0, %v2171
        %v2173 = vpop.f32.mrf.mxu0
        %v2174 = vadd.f32 0.0, %v2173
        %2175 = vdwg.mxu0
        %2176 = vmatpush.bf16.msra.mxu0 %v2032
        %2177 = vmatpush.bf16.msra.mxu0 %v2026
        %2178 = vmatpush.bf16.msra.mxu0 %v2020
        %2179 = vmatpush.bf16.msra.mxu0 %v2014
        %2180 = vmatpush.bf16.msra.mxu0 %v2008
        %2181 = vmatpush.bf16.msra.mxu0 %v2002
        %2182 = vmatpush.bf16.msra.mxu0 %v1996
        %2183 = vmatpush.bf16.msra.mxu0 %v1990
        %2184 = vmatmul.bf16.gmra.mxu0 %v1791
        %v2185 = vpop.f32.mrf.mxu0
        %v2186 = vadd.f32 0.0, %v2185
        %v2187 = vpop.f32.mrf.mxu0
        %v2188 = vadd.f32 0.0, %v2187
        %2189 = vmatmul.bf16.gmra.mxu0 %v1792
        %v2190 = vpop.f32.mrf.mxu0
        %v2191 = vadd.f32 0.0, %v2190
        %v2192 = vpop.f32.mrf.mxu0
        %v2193 = vadd.f32 0.0, %v2192
        %2194 = vdwg.mxu0
        %v2195 = vxor.u32 %v2091, 2147483648
        %v2196 = vxor.u32 %v2110, 2147483648
        %v2197 = vxor.u32 %v2129, 2147483648
        %v2198 = vxor.u32 %v2093, 2147483648
        %v2199 = vxor.u32 %v2112, 2147483648
        %v2200 = vxor.u32 %v2131, 2147483648
        %v2201 = vxor.u32 %v2096, 2147483648
        %v2202 = vxor.u32 %v2115, 2147483648
        %v2203 = vxor.u32 %v2134, 2147483648
        %v2204 = vxor.u32 %v2098, 2147483648
        %v2205 = vxor.u32 %v2117, 2147483648
        %v2206 = vxor.u32 %v2136, 2147483648
        %v2207 = vmul.f32 %v2195, 1.442695
        %v2208 = vpow.pop %v2207
        %v2209 = vmul.f32 %v2196, 1.442695
        %v2210 = vpow.pop %v2209
        %v2211 = vmul.f32 %v2197, 1.442695
        %v2212 = vpow.pop %v2211
        %v2213 = vmul.f32 %v2198, 1.442695
        %v2214 = vpow.pop %v2213
        %v2215 = vmul.f32 %v2199, 1.442695
        %v2216 = vpow.pop %v2215
        %v2217 = vmul.f32 %v2200, 1.442695
        %v2218 = vpow.pop %v2217
        %v2219 = vmul.f32 %v2201, 1.442695
        %v2220 = vpow.pop %v2219
        %v2221 = vmul.f32 %v2202, 1.442695
        %v2222 = vpow.pop %v2221
        %v2223 = vmul.f32 %v2203, 1.442695
        %v2224 = vpow.pop %v2223
        %v2225 = vmul.f32 %v2204, 1.442695
        %v2226 = vpow.pop %v2225
        %v2227 = vmul.f32 %v2205, 1.442695
        %v2228 = vpow.pop %v2227
        %v2229 = vmul.f32 %v2206, 1.442695
        %v2230 = vpow.pop %v2229
        %v2231 = vadd.f32 %v2208, 1.0
        %v2232 = vadd.f32 %v2210, 1.0
        %v2233 = vadd.f32 %v2212, 1.0
        %v2234 = vadd.f32 %v2214, 1.0
        %v2235 = vadd.f32 %v2216, 1.0
        %v2236 = vadd.f32 %v2218, 1.0
        %v2237 = vadd.f32 %v2220, 1.0
        %v2238 = vadd.f32 %v2222, 1.0
        %v2239 = vadd.f32 %v2224, 1.0
        %v2240 = vadd.f32 %v2226, 1.0
        %v2241 = vadd.f32 %v2228, 1.0
        %v2242 = vadd.f32 %v2230, 1.0
        %v2243 = vrcp.pop %v2231
        %v2244 = vmul.f32 %v2231, %v2243
        %v2245 = vsub.f32 1.0, %v2244
        %v2246 = vmul.f32 %v2243, %v2245
        %v2247 = vadd.f32 %v2243, %v2246
        %vm2248 = vweird.f32 %v2231
        %vm2249 = vweird.f32 %v2243
        %vm2250 = vmor %vm2248, %vm2249
        %v2251 = vsel %vm2250, %v2243, %v2247
        %v2252 = vand.u32 2147483647, %v2231
        %vm2253 = vcmp.eq.f32.partialorder %v2252, 8.507059e+37
        %v2254 = vand.u32 %v2231, 2147483648
        %v2255 = vor.u32 1.1754944e-38, %v2254
        %v2256 = vsel %vm2253, %v2255, %v2251
        %v2257 = vmul.f32 1.0, %v2256
        %v2258 = vrcp.pop %v2232
        %v2259 = vmul.f32 %v2232, %v2258
        %v2260 = vsub.f32 1.0, %v2259
        %v2261 = vmul.f32 %v2258, %v2260
        %v2262 = vadd.f32 %v2258, %v2261
        %vm2263 = vweird.f32 %v2232
        %vm2264 = vweird.f32 %v2258
        %vm2265 = vmor %vm2263, %vm2264
        %v2266 = vsel %vm2265, %v2258, %v2262
        %v2267 = vand.u32 2147483647, %v2232
        %vm2268 = vcmp.eq.f32.partialorder %v2267, 8.507059e+37
        %v2269 = vand.u32 %v2232, 2147483648
        %v2270 = vor.u32 1.1754944e-38, %v2269
        %v2271 = vsel %vm2268, %v2270, %v2266
        %v2272 = vmul.f32 1.0, %v2271
        %v2273 = vrcp.pop %v2233
        %v2274 = vmul.f32 %v2233, %v2273
        %v2275 = vsub.f32 1.0, %v2274
        %v2276 = vmul.f32 %v2273, %v2275
        %v2277 = vadd.f32 %v2273, %v2276
        %vm2278 = vweird.f32 %v2233
        %vm2279 = vweird.f32 %v2273
        %vm2280 = vmor %vm2278, %vm2279
        %v2281 = vsel %vm2280, %v2273, %v2277
        %v2282 = vand.u32 2147483647, %v2233
        %vm2283 = vcmp.eq.f32.partialorder %v2282, 8.507059e+37
        %v2284 = vand.u32 %v2233, 2147483648
        %v2285 = vor.u32 1.1754944e-38, %v2284
        %v2286 = vsel %vm2283, %v2285, %v2281
        %v2287 = vmul.f32 1.0, %v2286
        %v2288 = vrcp.pop %v2234
        %v2289 = vmul.f32 %v2234, %v2288
        %v2290 = vsub.f32 1.0, %v2289
        %v2291 = vmul.f32 %v2288, %v2290
        %v2292 = vadd.f32 %v2288, %v2291
        %vm2293 = vweird.f32 %v2234
        %vm2294 = vweird.f32 %v2288
        %vm2295 = vmor %vm2293, %vm2294
        %v2296 = vsel %vm2295, %v2288, %v2292
        %v2297 = vand.u32 2147483647, %v2234
        %vm2298 = vcmp.eq.f32.partialorder %v2297, 8.507059e+37
        %v2299 = vand.u32 %v2234, 2147483648
        %v2300 = vor.u32 1.1754944e-38, %v2299
        %v2301 = vsel %vm2298, %v2300, %v2296
        %v2302 = vmul.f32 1.0, %v2301
        %v2303 = vrcp.pop %v2235
        %v2304 = vmul.f32 %v2235, %v2303
        %v2305 = vsub.f32 1.0, %v2304
        %v2306 = vmul.f32 %v2303, %v2305
        %v2307 = vadd.f32 %v2303, %v2306
        %vm2308 = vweird.f32 %v2235
        %vm2309 = vweird.f32 %v2303
        %vm2310 = vmor %vm2308, %vm2309
        %v2311 = vsel %vm2310, %v2303, %v2307
        %v2312 = vand.u32 2147483647, %v2235
        %vm2313 = vcmp.eq.f32.partialorder %v2312, 8.507059e+37
        %v2314 = vand.u32 %v2235, 2147483648
        %v2315 = vor.u32 1.1754944e-38, %v2314
        %v2316 = vsel %vm2313, %v2315, %v2311
        %v2317 = vmul.f32 1.0, %v2316
        %v2318 = vrcp.pop %v2236
        %v2319 = vmul.f32 %v2236, %v2318
        %v2320 = vsub.f32 1.0, %v2319
        %v2321 = vmul.f32 %v2318, %v2320
        %v2322 = vadd.f32 %v2318, %v2321
        %vm2323 = vweird.f32 %v2236
        %vm2324 = vweird.f32 %v2318
        %vm2325 = vmor %vm2323, %vm2324
        %v2326 = vsel %vm2325, %v2318, %v2322
        %v2327 = vand.u32 2147483647, %v2236
        %vm2328 = vcmp.eq.f32.partialorder %v2327, 8.507059e+37
        %v2329 = vand.u32 %v2236, 2147483648
        %v2330 = vor.u32 1.1754944e-38, %v2329
        %v2331 = vsel %vm2328, %v2330, %v2326
        %v2332 = vmul.f32 1.0, %v2331
        %v2333 = vrcp.pop %v2237
        %v2334 = vmul.f32 %v2237, %v2333
        %v2335 = vsub.f32 1.0, %v2334
        %v2336 = vmul.f32 %v2333, %v2335
        %v2337 = vadd.f32 %v2333, %v2336
        %vm2338 = vweird.f32 %v2237
        %vm2339 = vweird.f32 %v2333
        %vm2340 = vmor %vm2338, %vm2339
        %v2341 = vsel %vm2340, %v2333, %v2337
        %v2342 = vand.u32 2147483647, %v2237
        %vm2343 = vcmp.eq.f32.partialorder %v2342, 8.507059e+37
        %v2344 = vand.u32 %v2237, 2147483648
        %v2345 = vor.u32 1.1754944e-38, %v2344
        %v2346 = vsel %vm2343, %v2345, %v2341
        %v2347 = vmul.f32 1.0, %v2346
        %v2348 = vrcp.pop %v2238
        %v2349 = vmul.f32 %v2238, %v2348
        %v2350 = vsub.f32 1.0, %v2349
        %v2351 = vmul.f32 %v2348, %v2350
        %v2352 = vadd.f32 %v2348, %v2351
        %vm2353 = vweird.f32 %v2238
        %vm2354 = vweird.f32 %v2348
        %vm2355 = vmor %vm2353, %vm2354
        %v2356 = vsel %vm2355, %v2348, %v2352
        %v2357 = vand.u32 2147483647, %v2238
        %vm2358 = vcmp.eq.f32.partialorder %v2357, 8.507059e+37
        %v2359 = vand.u32 %v2238, 2147483648
        %v2360 = vor.u32 1.1754944e-38, %v2359
        %v2361 = vsel %vm2358, %v2360, %v2356
        %v2362 = vmul.f32 1.0, %v2361
        %v2363 = vrcp.pop %v2239
        %v2364 = vmul.f32 %v2239, %v2363
        %v2365 = vsub.f32 1.0, %v2364
        %v2366 = vmul.f32 %v2363, %v2365
        %v2367 = vadd.f32 %v2363, %v2366
        %vm2368 = vweird.f32 %v2239
        %vm2369 = vweird.f32 %v2363
        %vm2370 = vmor %vm2368, %vm2369
        %v2371 = vsel %vm2370, %v2363, %v2367
        %v2372 = vand.u32 2147483647, %v2239
        %vm2373 = vcmp.eq.f32.partialorder %v2372, 8.507059e+37
        %v2374 = vand.u32 %v2239, 2147483648
        %v2375 = vor.u32 1.1754944e-38, %v2374
        %v2376 = vsel %vm2373, %v2375, %v2371
        %v2377 = vmul.f32 1.0, %v2376
        %v2378 = vrcp.pop %v2240
        %v2379 = vmul.f32 %v2240, %v2378
        %v2380 = vsub.f32 1.0, %v2379
        %v2381 = vmul.f32 %v2378, %v2380
        %v2382 = vadd.f32 %v2378, %v2381
        %vm2383 = vweird.f32 %v2240
        %vm2384 = vweird.f32 %v2378
        %vm2385 = vmor %vm2383, %vm2384
        %v2386 = vsel %vm2385, %v2378, %v2382
        %v2387 = vand.u32 2147483647, %v2240
        %vm2388 = vcmp.eq.f32.partialorder %v2387, 8.507059e+37
        %v2389 = vand.u32 %v2240, 2147483648
        %v2390 = vor.u32 1.1754944e-38, %v2389
        %v2391 = vsel %vm2388, %v2390, %v2386
        %v2392 = vmul.f32 1.0, %v2391
        %v2393 = vrcp.pop %v2241
        %v2394 = vmul.f32 %v2241, %v2393
        %v2395 = vsub.f32 1.0, %v2394
        %v2396 = vmul.f32 %v2393, %v2395
        %v2397 = vadd.f32 %v2393, %v2396
        %vm2398 = vweird.f32 %v2241
        %vm2399 = vweird.f32 %v2393
        %vm2400 = vmor %vm2398, %vm2399
        %v2401 = vsel %vm2400, %v2393, %v2397
        %v2402 = vand.u32 2147483647, %v2241
        %vm2403 = vcmp.eq.f32.partialorder %v2402, 8.507059e+37
        %v2404 = vand.u32 %v2241, 2147483648
        %v2405 = vor.u32 1.1754944e-38, %v2404
        %v2406 = vsel %vm2403, %v2405, %v2401
        %v2407 = vmul.f32 1.0, %v2406
        %v2408 = vrcp.pop %v2242
        %v2409 = vmul.f32 %v2242, %v2408
        %v2410 = vsub.f32 1.0, %v2409
        %v2411 = vmul.f32 %v2408, %v2410
        %v2412 = vadd.f32 %v2408, %v2411
        %vm2413 = vweird.f32 %v2242
        %vm2414 = vweird.f32 %v2408
        %vm2415 = vmor %vm2413, %vm2414
        %v2416 = vsel %vm2415, %v2408, %v2412
        %v2417 = vand.u32 2147483647, %v2242
        %vm2418 = vcmp.eq.f32.partialorder %v2417, 8.507059e+37
        %v2419 = vand.u32 %v2242, 2147483648
        %v2420 = vor.u32 1.1754944e-38, %v2419
        %v2421 = vsel %vm2418, %v2420, %v2416
        %v2422 = vmul.f32 1.0, %v2421
        %v2423 = vmul.f32 %v2091, %v2257
        %v2424 = vmul.f32 %v2110, %v2272
        %v2425 = vmul.f32 %v2129, %v2287
        %v2426 = vmul.f32 %v2093, %v2302
        %v2427 = vmul.f32 %v2112, %v2317
        %v2428 = vmul.f32 %v2131, %v2332
        %v2429 = vmul.f32 %v2096, %v2347
        %v2430 = vmul.f32 %v2115, %v2362
        %v2431 = vmul.f32 %v2134, %v2377
        %v2432 = vmul.f32 %v2098, %v2392
        %v2433 = vmul.f32 %v2117, %v2407
        %v2434 = vmul.f32 %v2136, %v2422
        %v2435 = vmul.f32 %v2423, %v2148
        %v2436 = vmul.f32 %v2424, %v2167
        %v2437 = vmul.f32 %v2425, %v2186
        %v2438 = vmul.f32 %v2426, %v2150
        %v2439 = vmul.f32 %v2427, %v2169
        %v2440 = vmul.f32 %v2428, %v2188
        %v2441 = vmul.f32 %v2429, %v2153
        %v2442 = vmul.f32 %v2430, %v2172
        %v2443 = vmul.f32 %v2431, %v2191
        %v2444 = vmul.f32 %v2432, %v2155
        %v2445 = vmul.f32 %v2433, %v2174
        %v2446 = vmul.f32 %v2434, %v2193
        %v2447 = vpack.c.bf16 %v2438, %v2435
        %v2448 = vpack.c.bf16 %v2439, %v2436
        %v2449 = vpack.c.bf16 %v2440, %v2437
        %v2450 = vpack.c.bf16 %v2444, %v2441
        %v2451 = vpack.c.bf16 %v2445, %v2442
        %v2452 = vpack.c.bf16 %v2446, %v2443
        %v2453 = vld [vmem:[%s446] sm:$0xf]
        %v2454 = vld [vmem:[%s446 + $0x4] sm:$0xf]
        %v2455 = vld [vmem:[%s446 + $0x8] sm:$0xf]
        %v2456 = vld [vmem:[%s446 + $0xc] sm:$0xf]
        %v2457 = vld [vmem:[%s446 + $0x10] sm:$0xf]
        %v2458 = vld [vmem:[%s446 + $0x14] sm:$0xf]
        %v2459 = vld [vmem:[%s446 + $0x18] sm:$0xf]
        %v2460 = vld [vmem:[%s446 + $0x1c] sm:$0xf]
        %v2461 = vld [vmem:[%s446 + $0x20] sm:$0xf]
        %v2462 = vld [vmem:[%s446 + $0x24] sm:$0xf]
        %v2463 = vld [vmem:[%s446 + $0x28] sm:$0xf]
        %v2464 = vld [vmem:[%s446 + $0x2c] sm:$0xf]
        %v2465 = vld [vmem:[%s446 + $0x30] sm:$0xf]
        %v2466 = vld [vmem:[%s446 + $0x34] sm:$0xf]
        %v2467 = vld [vmem:[%s446 + $0x38] sm:$0xf]
        %v2468 = vld [vmem:[%s446 + $0x3c] sm:$0xf]
        %v2469 = vld [vmem:[%s446 + $0x40] sm:$0xf]
        %v2470 = vld [vmem:[%s446 + $0x44] sm:$0xf]
        %v2471 = vld [vmem:[%s446 + $0x48] sm:$0xf]
        %v2472 = vld [vmem:[%s446 + $0x4c] sm:$0xf]
        %v2473 = vld [vmem:[%s446 + $0x50] sm:$0xf]
        %v2474 = vld [vmem:[%s446 + $0x54] sm:$0xf]
        %v2475 = vld [vmem:[%s446 + $0x58] sm:$0xf]
        %v2476 = vld [vmem:[%s446 + $0x5c] sm:$0xf]
        %v2477 = vld [vmem:[%s446 + $0x60] sm:$0xf]
        %v2478 = vld [vmem:[%s446 + $0x64] sm:$0xf]
        %v2479 = vld [vmem:[%s446 + $0x68] sm:$0xf]
        %v2480 = vld [vmem:[%s446 + $0x6c] sm:$0xf]
        %v2481 = vld [vmem:[%s446 + $0x70] sm:$0xf]
        %v2482 = vld [vmem:[%s446 + $0x74] sm:$0xf]
        %v2483 = vld [vmem:[%s446 + $0x78] sm:$0xf]
        %v2484 = vld [vmem:[%s446 + $0x7c] sm:$0xf]
        %v2485 = vld [vmem:[%s446 + $0x80] sm:$0xf]
        %v2486 = vld [vmem:[%s446 + $0x84] sm:$0xf]
        %v2487 = vld [vmem:[%s446 + $0x88] sm:$0xf]
        %v2488 = vld [vmem:[%s446 + $0x8c] sm:$0xf]
        %v2489 = vld [vmem:[%s446 + $0x90] sm:$0xf]
        %v2490 = vld [vmem:[%s446 + $0x94] sm:$0xf]
        %v2491 = vld [vmem:[%s446 + $0x98] sm:$0xf]
        %v2492 = vld [vmem:[%s446 + $0x9c] sm:$0xf]
        %v2493 = vld [vmem:[%s446 + $0xa0] sm:$0xf]
        %v2494 = vld [vmem:[%s446 + $0xa4] sm:$0xf]
        %v2495 = vld [vmem:[%s446 + $0xa8] sm:$0xf]
        %v2496 = vld [vmem:[%s446 + $0xac] sm:$0xf]
        %v2497 = vld [vmem:[%s446 + $0xb0] sm:$0xf]
        %v2498 = vld [vmem:[%s446 + $0xb4] sm:$0xf]
        %v2499 = vld [vmem:[%s446 + $0xb8] sm:$0xf]
        %v2500 = vld [vmem:[%s446 + $0xbc] sm:$0xf]
        %v2549 = vunpack.c.l.b16 %v2453
        %v2550 = vunpack.c.l.b16 %v2454
        %v2551 = vunpack.c.l.b16 %v2455
        %v2552 = vunpack.c.l.b16 %v2456
        %v2553 = vunpack.c.l.b16 %v2457
        %v2554 = vunpack.c.l.b16 %v2458
        %v2555 = vunpack.c.l.b16 %v2459
        %v2556 = vunpack.c.l.b16 %v2460
        %v2557 = vunpack.c.l.b16 %v2461
        %v2558 = vunpack.c.l.b16 %v2462
        %v2559 = vunpack.c.l.b16 %v2463
        %v2560 = vunpack.c.l.b16 %v2464
        %v2561 = vunpack.c.l.b16 %v2465
        %v2562 = vunpack.c.l.b16 %v2466
        %v2563 = vunpack.c.l.b16 %v2467
        %v2564 = vunpack.c.l.b16 %v2468
        %v2565 = vunpack.c.l.b16 %v2469
        %v2566 = vunpack.c.l.b16 %v2470
        %v2567 = vunpack.c.l.b16 %v2471
        %v2568 = vunpack.c.l.b16 %v2472
        %v2569 = vunpack.c.l.b16 %v2473
        %v2570 = vunpack.c.l.b16 %v2474
        %v2571 = vunpack.c.l.b16 %v2475
        %v2572 = vunpack.c.l.b16 %v2476
        %v2573 = vunpack.c.l.b16 %v2477
        %v2574 = vunpack.c.l.b16 %v2478
        %v2575 = vunpack.c.l.b16 %v2479
        %v2576 = vunpack.c.l.b16 %v2480
        %v2577 = vunpack.c.l.b16 %v2481
        %v2578 = vunpack.c.l.b16 %v2482
        %v2579 = vunpack.c.l.b16 %v2483
        %v2580 = vunpack.c.l.b16 %v2484
        %v2581 = vunpack.c.l.b16 %v2485
        %v2582 = vunpack.c.l.b16 %v2486
        %v2583 = vunpack.c.l.b16 %v2487
        %v2584 = vunpack.c.l.b16 %v2488
        %v2585 = vunpack.c.l.b16 %v2489
        %v2586 = vunpack.c.l.b16 %v2490
        %v2587 = vunpack.c.l.b16 %v2491
        %v2588 = vunpack.c.l.b16 %v2492
        %v2589 = vunpack.c.l.b16 %v2493
        %v2590 = vunpack.c.l.b16 %v2494
        %v2591 = vunpack.c.l.b16 %v2495
        %v2592 = vunpack.c.l.b16 %v2496
        %v2593 = vunpack.c.l.b16 %v2497
        %v2594 = vunpack.c.l.b16 %v2498
        %v2595 = vunpack.c.l.b16 %v2499
        %v2596 = vunpack.c.l.b16 %v2500
        %v2597 = vpack.c.b16 %v2550, %v2549
        %v2598 = vpack.c.b16 %v2552, %v2551
        %v2599 = vpack.c.b16 %v2554, %v2553
        %v2600 = vpack.c.b16 %v2556, %v2555
        %v2601 = vpack.c.b16 %v2558, %v2557
        %v2602 = vpack.c.b16 %v2560, %v2559
        %v2603 = vpack.c.b16 %v2562, %v2561
        %v2604 = vpack.c.b16 %v2564, %v2563
        %v2605 = vpack.c.b16 %v2566, %v2565
        %v2606 = vpack.c.b16 %v2568, %v2567
        %v2607 = vpack.c.b16 %v2570, %v2569
        %v2608 = vpack.c.b16 %v2572, %v2571
        %v2609 = vpack.c.b16 %v2574, %v2573
        %v2610 = vpack.c.b16 %v2576, %v2575
        %v2611 = vpack.c.b16 %v2578, %v2577
        %v2612 = vpack.c.b16 %v2580, %v2579
        %v2613 = vpack.c.b16 %v2582, %v2581
        %v2614 = vpack.c.b16 %v2584, %v2583
        %v2615 = vpack.c.b16 %v2586, %v2585
        %v2616 = vpack.c.b16 %v2588, %v2587
        %v2617 = vpack.c.b16 %v2590, %v2589
        %v2618 = vpack.c.b16 %v2592, %v2591
        %v2619 = vpack.c.b16 %v2594, %v2593
        %v2620 = vpack.c.b16 %v2596, %v2595
        %2645 = vmatpush.bf16.msra.mxu0 %v2604
        %2646 = vmatpush.bf16.msra.mxu0 %v2603
        %2647 = vmatpush.bf16.msra.mxu0 %v2602
        %2648 = vmatpush.bf16.msra.mxu0 %v2601
        %2649 = vmatpush.bf16.msra.mxu0 %v2600
        %2650 = vmatpush.bf16.msra.mxu0 %v2599
        %2651 = vmatpush.bf16.msra.mxu0 %v2598
        %2652 = vmatpush.bf16.msra.mxu0 %v2597
        %2653 = vmatmul.bf16.gmra.mxu0 %v2447
        %v2654 = vpop.f32.mrf.mxu0
        %v2655 = vadd.f32 0.0, %v2654
        %v2656 = vpop.f32.mrf.mxu0
        %v2657 = vadd.f32 0.0, %v2656
        %2658 = vmatmul.bf16.gmra.mxu0 %v2450
        %v2659 = vpop.f32.mrf.mxu0
        %v2660 = vadd.f32 0.0, %v2659
        %v2661 = vpop.f32.mrf.mxu0
        %v2662 = vadd.f32 0.0, %v2661
        %2663 = vdwg.mxu0
        %2664 = vmatpush.bf16.msra.mxu0 %v2612
        %2665 = vmatpush.bf16.msra.mxu0 %v2611
        %2666 = vmatpush.bf16.msra.mxu0 %v2610
        %2667 = vmatpush.bf16.msra.mxu0 %v2609
        %2668 = vmatpush.bf16.msra.mxu0 %v2608
        %2669 = vmatpush.bf16.msra.mxu0 %v2607
        %2670 = vmatpush.bf16.msra.mxu0 %v2606
        %2671 = vmatpush.bf16.msra.mxu0 %v2605
        %2672 = vmatmul.bf16.gmra.mxu0 %v2448
        %v2673 = vpop.f32.mrf.mxu0
        %v2674 = vadd.f32 %v2655, %v2673
        %v2675 = vpop.f32.mrf.mxu0
        %v2676 = vadd.f32 %v2657, %v2675
        %2677 = vmatmul.bf16.gmra.mxu0 %v2451
        %v2678 = vpop.f32.mrf.mxu0
        %v2679 = vadd.f32 %v2660, %v2678
        %v2680 = vpop.f32.mrf.mxu0
        %v2681 = vadd.f32 %v2662, %v2680
        %2682 = vdwg.mxu0
        %2683 = vmatpush.bf16.msra.mxu0 %v2620
        %2684 = vmatpush.bf16.msra.mxu0 %v2619
        %2685 = vmatpush.bf16.msra.mxu0 %v2618
        %2686 = vmatpush.bf16.msra.mxu0 %v2617
        %2687 = vmatpush.bf16.msra.mxu0 %v2616
        %2688 = vmatpush.bf16.msra.mxu0 %v2615
        %2689 = vmatpush.bf16.msra.mxu0 %v2614
        %2690 = vmatpush.bf16.msra.mxu0 %v2613
        %2691 = vmatmul.bf16.gmra.mxu0 %v2449
        %v2692 = vpop.f32.mrf.mxu0
        %v2693 = vadd.f32 %v2674, %v2692
        %v2694 = vpop.f32.mrf.mxu0
        %v2695 = vadd.f32 %v2676, %v2694
        %2696 = vmatmul.bf16.gmra.mxu0 %v2452
        %v2697 = vpop.f32.mrf.mxu0
        %v2698 = vadd.f32 %v2679, %v2697
        %v2699 = vpop.f32.mrf.mxu0
        %v2700 = vadd.f32 %v2681, %v2699
        %2701 = vdwg.mxu0
        %v2702 = vadd.f32 %v1715, %v2693
        %v2703 = vadd.f32 %v1716, %v2695
        %v2704 = vadd.f32 %v1717, %v2698
        %v2705 = vadd.f32 %v1718, %v2700
        %2706 = vst [vmem:[#allocation13] sm:$0xff] %v2702
        %2707 = vst [vmem:[#allocation13 + $0x8] sm:$0xff] %v2703
        %2708 = vst [vmem:[#allocation13 + $0x10] sm:$0xff] %v2704
        %2709 = vst [vmem:[#allocation13 + $0x18] sm:$0xff] %v2705
        %p2710 = scmp.eq.s32.totalorder %s30, 1
        // Predicated region
        $region81: #{transformer_forward.2} parent=51 // pred_check
          %p2711 = pneg %p2710
        $region82: #{transformer_forward.2} parent=51 // pred_check_branch
          %2713 = sbr.rel (%p2711) target = $region84
        $region83: #{transformer_forward.2} parent=51 // pred_region
          %v2714 = vld [vmem:[#allocation13] sm:$0xff]
          %v2715 = vld [vmem:[#allocation13 + $0x8] sm:$0xff]
          %v2716 = vld [vmem:[#allocation13 + $0x10] sm:$0xff]
          %v2717 = vld [vmem:[#allocation13 + $0x18] sm:$0xff]
          %v2718 = vld [vmem:[%s7] sm:$0x1]
          %v2719 = vmul.f32 %v2714, %v2714
          %v2720 = vmul.f32 %v2715, %v2715
          %v2721 = vmul.f32 %v2716, %v2716
          %v2722 = vmul.f32 %v2717, %v2717
          %2723 = vadd.xlane.f32.xlu0 %v2719
          %v2724 = vpop.xlane.xlu0 %2723
          %2725 = vadd.xlane.f32.xlu0 %v2720
          %v2726 = vpop.xlane.xlu0 %2725
          %2727 = vadd.xlane.f32.xlu0 %v2721
          %v2728 = vpop.xlane.xlu0 %2727
          %2729 = vadd.xlane.f32.xlu0 %v2722
          %v2730 = vpop.xlane.xlu0 %2729
          %v2731 = vmul.f32 %v2724, %v535
          %v2732 = vmul.f32 %v2726, %v535
          %v2733 = vmul.f32 %v2728, %v535
          %v2734 = vmul.f32 %v2730, %v535
          %v2735 = vadd.f32 %v2731, 1e-06
          %v2736 = vadd.f32 %v2732, 1e-06
          %v2737 = vadd.f32 %v2733, 1e-06
          %v2738 = vadd.f32 %v2734, 1e-06
          %v2739 = vrsqrt.pop %v2735
          %v2740 = vmul.f32 %v2739, %v2735
          %v2741 = vmul.f32 %v2740, %v2739
          %v2742 = vmul.f32 0.5, %v2741
          %v2743 = vsub.f32 1.5, %v2742
          %v2744 = vmul.f32 %v2739, %v2743
          %vm2745 = vweird.f32 %v2735
          %vm2746 = vweird.f32 %v2739
          %vm2747 = vmor %vm2745, %vm2746
          %v2748 = vsel %vm2747, %v2739, %v2744
          %v2749 = vrsqrt.pop %v2736
          %v2750 = vmul.f32 %v2749, %v2736
          %v2751 = vmul.f32 %v2750, %v2749
          %v2752 = vmul.f32 0.5, %v2751
          %v2753 = vsub.f32 1.5, %v2752
          %v2754 = vmul.f32 %v2749, %v2753
          %vm2755 = vweird.f32 %v2736
          %vm2756 = vweird.f32 %v2749
          %vm2757 = vmor %vm2755, %vm2756
          %v2758 = vsel %vm2757, %v2749, %v2754
          %v2759 = vrsqrt.pop %v2737
          %v2760 = vmul.f32 %v2759, %v2737
          %v2761 = vmul.f32 %v2760, %v2759
          %v2762 = vmul.f32 0.5, %v2761
          %v2763 = vsub.f32 1.5, %v2762
          %v2764 = vmul.f32 %v2759, %v2763
          %vm2765 = vweird.f32 %v2737
          %vm2766 = vweird.f32 %v2759
          %vm2767 = vmor %vm2765, %vm2766
          %v2768 = vsel %vm2767, %v2759, %v2764
          %v2769 = vrsqrt.pop %v2738
          %v2770 = vmul.f32 %v2769, %v2738
          %v2771 = vmul.f32 %v2770, %v2769
          %v2772 = vmul.f32 0.5, %v2771
          %v2773 = vsub.f32 1.5, %v2772
          %v2774 = vmul.f32 %v2769, %v2773
          %vm2775 = vweird.f32 %v2738
          %vm2776 = vweird.f32 %v2769
          %vm2777 = vmor %vm2775, %vm2776
          %v2778 = vsel %vm2777, %v2769, %v2774
          %v2779 = vmul.f32 %v2714, %v2748
          %v2780 = vmul.f32 %v2715, %v2758
          %v2781 = vmul.f32 %v2716, %v2768
          %v2782 = vmul.f32 %v2717, %v2778
          %v2784 = vperm.slane %v2718, 0
          %v2786 = vmul.f32 %v2779, %v2784
          %v2787 = vmul.f32 %v2780, %v2784
          %v2788 = vmul.f32 %v2781, %v2784
          %v2789 = vmul.f32 %v2782, %v2784
          %2790 = vst [vmem:[#allocation13] sm:$0xff] %v2786
          %2791 = vst [vmem:[#allocation13 + $0x8] sm:$0xff] %v2787
          %2792 = vst [vmem:[#allocation13 + $0x10] sm:$0xff] %v2788
          %2793 = vst [vmem:[#allocation13 + $0x18] sm:$0xff] %v2789
        $region84: #{transformer_forward.2} parent=51 // pred_fallthru
          _
        // Predicated region
        $region85: #{transformer_forward.2} parent=51 // pred_check
          %p2794 = pneg %p241
        $region86: #{transformer_forward.2} parent=51 // pred_check_branch
          %2796 = sbr.rel (%p2794) target = $region88
        $region87: #{transformer_forward.2} parent=51 // pred_region
          %2798 = vsyncadd [#allocation4], 0
          %s2799 = sshll.u32 [#allocation13], 4
          %s2800 = int_to_ptr.vmem [resolvable:$true] %s2799
          %s2801 = sshll.u32 %s8, 4
          %s2802 = int_to_ptr.hbm [resolvable:$true] %s2801
          %2807 = dma.vmem_to_hbm [thread:$0]  %s2800, 512, %s2802, [#allocation4], 128, 128, 8
        $region88: #{transformer_forward.2} parent=51 // pred_fallthru
          _
        // Predicated region
        $region89: #{transformer_forward.2} parent=51 // pred_check
          %p2808 = pneg %p241
        $region90: #{transformer_forward.2} parent=51 // pred_check_branch
          %2810 = sbr.rel (%p2808) target = $region92
        $region91: #{transformer_forward.2} parent=51 // pred_region
          %2812 = dma.done [#allocation4], 512
        $region92: #{transformer_forward.2} parent=51 // pred_fallthru
          _
      $region52: #{transformer_forward.2} parent=5 // pred_fallthru
        _
      %p2813 = scmp.le.s32.totalorder 2, %s25
      // Predicated region
      $region93: #{transformer_forward.2} parent=5 // pred_check
        %p2814 = pneg %p2813
      $region94: #{transformer_forward.2} parent=5 // pred_check_branch
        %2816 = sbr.rel (%p2814) target = $region96
      $region95: #{transformer_forward.2} parent=5 // pred_region
        %s2817 = ssub.s32 %s25, 2
      $region96: #{transformer_forward.2} parent=5 // pred_fallthru
        _
    $region6: #{transformer_forward.2} parent=1 // loop_footer
      %s29 = sadd.s32 1, %s25
    $region7: #{transformer_forward.2} parent=1 // loop_footer_branch
      %24 = sbr.rel target = $region3
    $region8: #{transformer_forward.2} parent=1 // loop_exit
      _
    %2818 = vsyncpa [#allocation3], 1
    %s2819 = scalar_lea.sflag [#allocation3], 1
    %2820 = vsyncpa %s2819, 1
    %2821 = vsyncpa [#allocation6], 1
    %s2822 = scalar_lea.sflag [#allocation6], 1
    %2823 = vsyncpa %s2822, 1
    %2824 = vsyncpa [#allocation9], 1
    %s2825 = scalar_lea.sflag [#allocation9], 1
    %2826 = vsyncpa %s2825, 1
    %2827 = vsyncpa [#allocation12], 1
    %s2828 = scalar_lea.sflag [#allocation12], 1
    %2829 = vsyncpa %s2828, 1
    %2830 = vsyncpa [#allocation4], 1
    %s2831 = scalar_lea.sflag [#allocation4], 1
    %2832 = vsyncpa %s2831, 1

</llo_original>
